<compile_context>
chip_gen: v7x
topology: tpu7x:2x2x1
jax: 0.10.0
libtpu: 0.0.40
codegen_flags: <defaults>
</compile_context>

<pallas_src>
import jax
import jax.numpy as jnp
from jax.experimental import pallas as pl
from jax.experimental.pallas import tpu as pltpu


# -----------------------------------------------------------------------------
# Pallas kernel: one (spatial tile, batch) grid step.
# -----------------------------------------------------------------------------
def _fuse_block_kernel(xl_ref, sig_ref, w1_ref, b1_ref, kh_ref, awt_ref, out_ref):
    # xl_ref  : (1, Cin, TILE_P)   TILE_P = TILE_H * W       (compute dtype)
    # sig_ref : (1, Cout, h*w)     h_sigmoid(fuse2(x_h)), precomputed in wrapper
    # w1_ref  : (Cout, Cin)        fuse1 conv1x1 with BN folded (compute dtype)
    # b1_ref  : (Cout, 1)          folded BN bias (f32)
    # kh_ref  : (h*w, TILE_H*w)    row (H) upsample slice for this tile = Ah_t^T ⊗ I_w
    # awt_ref : (w, W)             column (W) upsample matrix Aw^T
    # out_ref : (1, Cout, TILE_P)
    w_lo, big_w = awt_ref.shape
    tile_h = kh_ref.shape[1] // w_lo

    # fuse1: 1x1 conv + folded BN on x_l.  bf16/f32 operands, f32 accumulation.
    inp = jnp.dot(w1_ref[...], xl_ref[0],
                  preferred_element_type=jnp.float32) + b1_ref[...]

    # Row (H) direction of the separable bilinear upsample, still at low W:
    # (Cout, h*w) @ (h*w, TILE_H*w) -> (Cout, TILE_H*w); channel-major, no reshapes.
    t = jnp.dot(sig_ref[0], kh_ref[...], preferred_element_type=jnp.float32)
    t = t.astype(awt_ref.dtype)

    # Column (W) direction, one output row at a time (static unroll).  This avoids
    # the old block-diagonal (TILE_H*w, TILE_H*W) matmul whose FLOPs and VMEM
    # footprint scaled quadratically with TILE_H, and fuses the `inp *` epilogue
    # with the store of each row slab.
    awt = awt_ref[...]
    for r in range(tile_h):
        up_r = jnp.dot(t[:, r * w_lo:(r + 1) * w_lo], awt,
                       preferred_element_type=jnp.float32)          # (Cout, W)
        out_ref[0, :, r * big_w:(r + 1) * big_w] = (
            inp[:, r * big_w:(r + 1) * big_w] * up_r).astype(out_ref.dtype)


# -----------------------------------------------------------------------------
# Helpers: interpolation weights, BN folding, chip-aware VMEM budget, tile choice.
# -----------------------------------------------------------------------------
def _interp_weights_1d(out_size: int, in_size: int) -> jnp.ndarray:
    """(out_size, in_size) linear-interp matrix matching PyTorch
    F.interpolate(mode='bilinear', align_corners=False) along one axis."""
    scale = in_size / out_size
    dst = jnp.arange(out_size, dtype=jnp.float32)
    src = (dst + 0.5) * scale - 0.5
    src = jnp.maximum(src, 0.0)                      # PyTorch clamps negatives to 0
    i0 = jnp.floor(src).astype(jnp.int32)
    i0 = jnp.minimum(i0, in_size - 1)
    i1 = jnp.minimum(i0 + 1, in_size - 1)
    frac = src - i0.astype(jnp.float32)
    oh0 = jax.nn.one_hot(i0, in_size, dtype=jnp.float32)
    oh1 = jax.nn.one_hot(i1, in_size, dtype=jnp.float32)
    return (1.0 - frac)[:, None] * oh0 + frac[:, None] * oh1


def _fold_conv_bn(conv_w, gamma, beta, mean, var, eps=1e-5):
    """conv_w: (Cout, Cin, 1, 1) -> weight (Cout, Cin), bias (Cout, 1), both f32."""
    scale = gamma / jnp.sqrt(var + eps)              # (Cout,)
    w = conv_w[:, :, 0, 0] * scale[:, None]          # (Cout, Cin)
    b = (beta - mean * scale)[:, None]               # (Cout, 1)
    return w.astype(jnp.float32), b.astype(jnp.float32)


def _vmem_limits():
    """(vmem_limit_bytes for CompilerParams, per-step tile budget), chip-aware.
    v7x has 64 MiB VMEM per TensorCore, v5e/v6e have 128 MiB."""
    cap = 64 << 20                                   # conservative fallback (v7x)
    try:
        info = pltpu.get_tpu_info()
        cap = int(getattr(info, "vmem_capacity_bytes", cap))
    except Exception:
        pass
    limit = max(16 << 20, min((cap * 3) // 4, 64 << 20))   # 48 MiB on v7x, 64 MiB on v5e/v6e
    budget = min(limit // 2, 24 << 20)                      # per-step working-set budget
    return limit, budget


def _choose_tile_h(H, W, h, w, cin, cout, in_isize, out_isize, budget_bytes,
                   max_unroll=64):
    """Largest TILE_H dividing H whose per-step working set (counting Pallas'
    double-buffering of EVERY input/output block plus f32 intermediates) fits
    the budget, with lane-aligned flattened widths and a bounded unroll."""
    cands = [t for t in range(1, H + 1)
             if H % t == 0 and (t == H or ((t * W) % 128 == 0 and (t * w) % 128 == 0))]

    def step_bytes(t):
        tp = t * W
        return (2 * in_isize * cin * tp                 # x_l block      (x2 buffers)
                + 2 * out_isize * cout * tp             # out block      (x2 buffers)
                + 2 * in_isize * (h * w) * (t * w)      # kh tile slice  (x2 buffers)
                + 2 * in_isize * cout * (h * w)         # sig block      (x2 buffers)
                + 2 * in_isize * (cout * cin + w * W)   # w1, awt        (x2 buffers)
                + 2 * 4 * cout                          # b1             (x2 buffers)
                + 4 * cout * tp + 4 * cout * (t * w))   # f32 intermediates (inp, t)

    fitting = [t for t in cands if step_bytes(t) <= budget_bytes]
    small = [t for t in fitting if t <= max_unroll]
    if small:
        return max(small)
    if fitting:
        return min(fitting)
    return min(cands)


# -----------------------------------------------------------------------------
# Wrapper
# -----------------------------------------------------------------------------
def fuse_block_multi(x_l, x_h, params, *, tile_h=None, compute_dtype=None):
    """x_l: (B, Cin, H, W), x_h: (B, Cin, h, w) (NCHW).  Returns (B, Cout, H, W).

    compute_dtype: dtype used for the MXU operands (x_l, folded w1, sig_act and
    the interpolation matrices).  Defaults to x_l.dtype; pass jnp.bfloat16 for
    the fast MXU path (accumulation and biases remain f32)."""
    B, Cin, H, W = x_l.shape
    Bh, Cin2, h, w = x_h.shape
    assert B == Bh and Cin == Cin2

    out_dtype = x_l.dtype
    compute_dtype = jnp.dtype(x_l.dtype if compute_dtype is None else compute_dtype)

    # Fold conv1x1 + BN for both branches (f32).
    w1, b1 = _fold_conv_bn(params["w1"], params["g1"], params["be1"],
                           params["m1"], params["v1"])
    w2, b2 = _fold_conv_bn(params["w2"], params["g2"], params["be2"],
                           params["m2"], params["v2"])
    Cout = w1.shape[0]

    # fuse2 branch + h_sigmoid hoisted out of the per-tile loop: it only touches
    # the tiny x_h, so compute it once per batch as a small f32 XLA op (the "+3"
    # and "/6" stay in f32 regardless of compute_dtype).
    xh_f = x_h.reshape(B, Cin, h * w).astype(jnp.float32)
    s = jnp.einsum("oc,bcp->bop", w2, xh_f) + b2[None]
    sig = jnp.clip(s + 3.0, 0.0, 6.0) * (1.0 / 6.0)          # (B, Cout, h*w) in [0, 1]

    # 1-D bilinear weights (half-pixel centers, align_corners=False), f32.
    ah = _interp_weights_1d(H, h)                            # (H, h)
    aw = _interp_weights_1d(W, w)                            # (W, w)
    # Row (H) upsample as a right-multiplication in flat channel-major layout.
    kh = jnp.kron(ah.T, jnp.eye(w, dtype=jnp.float32))       # (h*w, H*w)
    awt = aw.T                                               # (w, W)

    # Free (metadata-only) reshape of the big tensor; stays NCHW-native.
    xl_f = x_l.reshape(B, Cin, H * W)

    # Channel padding to a sublane multiple (no-op for real TopFormer widths).
    pad_co = (-Cout) % 8
    if pad_co:
        w1 = jnp.pad(w1, ((0, pad_co), (0, 0)))
        b1 = jnp.pad(b1, ((0, pad_co), (0, 0)))
        sig = jnp.pad(sig, ((0, 0), (0, pad_co), (0, 0)))
    pad_ci = (-Cin) % 8
    if pad_ci:
        w1 = jnp.pad(w1, ((0, 0), (0, pad_ci)))
        xl_f = jnp.pad(xl_f, ((0, 0), (0, pad_ci), (0, 0)))
    Cout_p = Cout + pad_co
    Cin_p = Cin + pad_ci

    # bf16 (or f32) operand path; biases and accumulation stay f32.
    xl_f = xl_f.astype(compute_dtype)
    sig = sig.astype(compute_dtype)
    w1 = w1.astype(compute_dtype)
    kh = kh.astype(compute_dtype)
    awt = awt.astype(compute_dtype)
    b1 = b1.astype(jnp.float32)

    in_isize = compute_dtype.itemsize
    out_isize = jnp.dtype(out_dtype).itemsize
    vmem_limit, budget = _vmem_limits()
    if tile_h is None:
        tile_h = _choose_tile_h(H, W, h, w, Cin_p, Cout_p, in_isize, out_isize, budget)
    assert H % tile_h == 0, (H, tile_h)
    assert tile_h == H or ((tile_h * W) % 128 == 0 and (tile_h * w) % 128 == 0), \
        "tile_h must give lane-aligned flattened widths (or cover full H)"
    n_t = H // tile_h
    tile_p = tile_h * W

    flops = 2 * B * Cout_p * (Cin_p * H * W      # fuse1 conv
                              + h * w * H * w    # row (H) upsample
                              + H * w * W)       # column (W) upsample
    bytes_accessed = (in_isize * (B * Cin_p * H * W            # x_l
                                  + n_t * B * Cout_p * h * w   # sig (re-fetched per tile)
                                  + h * w * H * w              # kh (once per tile slice)
                                  + w * W + Cout_p * Cin_p)
                      + 4 * Cout_p
                      + out_isize * B * Cout_p * H * W)        # output

    out_flat = pl.pallas_call(
        _fuse_block_kernel,
        out_shape=jax.ShapeDtypeStruct((B, Cout_p, H * W), out_dtype),
        grid_spec=pltpu.PrefetchScalarGridSpec(
            num_scalar_prefetch=0,
            # Spatial tile OUTER, batch INNER: kh's block index is constant across
            # the inner batch sweep, so each kh slice is DMA'd once per tile.
            grid=(n_t, B),
            in_specs=[
                pl.BlockSpec((1, Cin_p, tile_p), lambda t, b: (b, 0, t)),
                pl.BlockSpec((1, Cout_p, h * w), lambda t, b: (b, 0, 0)),
                pl.BlockSpec((Cout_p, Cin_p), lambda t, b: (0, 0)),
                pl.BlockSpec((Cout_p, 1), lambda t, b: (0, 0)),
                pl.BlockSpec((h * w, tile_h * w), lambda t, b: (0, t)),
                pl.BlockSpec((w, W), lambda t, b: (0, 0)),
            ],
            out_specs=pl.BlockSpec((1, Cout_p, tile_p), lambda t, b: (b, 0, t)),
        ),
        compiler_params=pltpu.CompilerParams(
            dimension_semantics=("parallel", "parallel"),
            vmem_limit_bytes=int(vmem_limit),
        ),
        cost_estimate=pl.CostEstimate(
            flops=int(flops), transcendentals=0, bytes_accessed=int(bytes_accessed)),
    )(xl_f, sig, w1, b1, kh, awt)

    out = out_flat.reshape(B, Cout_p, H, W)
    if pad_co:
        out = out[:, :Cout]
    return out


# -----------------------------------------------------------------------------
# Pure-JAX reference (independent math path) for correctness checking.
# -----------------------------------------------------------------------------
def _reference(x_l, x_h, params, eps=1e-5):
    def conv_bn(x, wc, g, b, m, v):
        y = jnp.einsum("bchw,oc->bohw", x, wc[:, :, 0, 0])
        scale = g / jnp.sqrt(v + eps)
        return ((y - m[None, :, None, None]) * scale[None, :, None, None]
                + b[None, :, None, None])

    _, _, H, W = x_l.shape
    _, _, h, w = x_h.shape
    inp = conv_bn(x_l, params["w1"], params["g1"], params["be1"],
                  params["m1"], params["v1"])
    s = conv_bn(x_h, params["w2"], params["g2"], params["be2"],
                params["m2"], params["v2"])
    s = jnp.clip(s + 3.0, 0.0, 6.0) / 6.0
    ah = _interp_weights_1d(H, h)
    aw = _interp_weights_1d(W, w)
    up = jnp.einsum("Hh,bchw,Ww->bcHW", ah, s, aw)
    return inp * up


if __name__ == "__main__":
    key = jax.random.PRNGKey(0)
    ks = jax.random.split(key, 12)

    B, Cin, Cout = 2, 8, 16
    H, W = 32, 32          # x_l spatial (high resolution)
    h, w = 16, 16          # x_h spatial (low resolution)

    x_l = jax.random.normal(ks[0], (B, Cin, H, W), dtype=jnp.float32)
    x_h = jax.random.normal(ks[1], (B, Cin, h, w), dtype=jnp.float32)

    params = {
        # fuse1: Conv2d(Cin, Cout, 1, bias=False) + BatchNorm2d(Cout)
        "w1": 0.5 * jax.random.normal(ks[2], (Cout, Cin, 1, 1), jnp.float32),
        "g1": 1.0 + 0.1 * jax.random.normal(ks[3], (Cout,), jnp.float32),
        "be1": 0.1 * jax.random.normal(ks[4], (Cout,), jnp.float32),
        "m1": 0.1 * jax.random.normal(ks[5], (Cout,), jnp.float32),
        "v1": jnp.abs(jax.random.normal(ks[6], (Cout,), jnp.float32)) + 0.5,
        # fuse2
        "w2": 0.5 * jax.random.normal(ks[7], (Cout, Cin, 1, 1), jnp.float32),
        "g2": 1.0 + 0.1 * jax.random.normal(ks[8], (Cout,), jnp.float32),
        "be2": 0.1 * jax.random.normal(ks[9], (Cout,), jnp.float32),
        "m2": 0.1 * jax.random.normal(ks[10], (Cout,), jnp.float32),
        "v2": jnp.abs(jax.random.normal(ks[11], (Cout,), jnp.float32)) + 0.5,
    }

    ref = jax.block_until_ready(_reference(x_l, x_h, params))

    # f32 path, auto-chosen spatial tile (grid = (1, B) at this shape).
    out = jax.block_until_ready(fuse_block_multi(x_l, x_h, params))
    assert out.shape == (B, Cout, H, W), out.shape
    assert jnp.allclose(out, ref, atol=1e-3, rtol=1e-3), "mismatch (f32, auto tile)"

    # f32 path, explicit multi-tile spatial grid (grid = (H // 8, B)).
    out_tiled = jax.block_until_ready(fuse_block_multi(x_l, x_h, params, tile_h=8))
    assert jnp.allclose(out_tiled, ref, atol=1e-3, rtol=1e-3), "mismatch (f32, tiled)"

    # bf16 operand path (f32 accumulation / biases) — loose tolerance is expected
    # from bf16 rounding of activations, weights and interpolation fractions.
    out_bf16 = jax.block_until_ready(
        fuse_block_multi(x_l, x_h, params, compute_dtype=jnp.bfloat16))
    assert out_bf16.dtype == x_l.dtype
    assert jnp.allclose(out_bf16, ref, atol=1e-1, rtol=1e-1), "mismatch (bf16 path)"

    print("KERNEL_OK")
</pallas_src>

<mosaic_0001>
module attributes {stable_mosaic.version = 11 : i64} {
  func.func @_fuse_block_kernel(%arg0: i32, %arg1: i32, %arg2: memref<1x8x1024xf32, #tpu.memory_space<vmem>>, %arg3: memref<1x16x256xf32, #tpu.memory_space<vmem>>, %arg4: memref<16x8xf32, #tpu.memory_space<vmem>>, %arg5: memref<16x1xf32, #tpu.memory_space<vmem>>, %arg6: memref<256x512xf32, #tpu.memory_space<vmem>>, %arg7: memref<16x32xf32, #tpu.memory_space<vmem>>, %arg8: memref<1x16x1024xf32, #tpu.memory_space<vmem>>) attributes {dimension_semantics = [#tpu.dimension_semantics<parallel>, #tpu.dimension_semantics<parallel>], iteration_bounds = array<i64: 1, 2>, scalar_prefetch = 0 : i64, scratch_operands = 0 : i64, tpu.core_type = #tpu.core_type<tc>, window_params = [{transform_indices = @transform_0, window_bounds = array<i64: 1, 8, 1024>}, {transform_indices = @transform_1, window_bounds = array<i64: 1, 16, 256>}, {pipeline_mode = #tpu.pipeline_mode<synchronous>, transform_indices = @transform_2, window_bounds = array<i64: 16, 8>}, {pipeline_mode = #tpu.pipeline_mode<synchronous>, transform_indices = @transform_3, window_bounds = array<i64: 16, 1>}, {transform_indices = @transform_4, window_bounds = array<i64: 256, 512>}, {pipeline_mode = #tpu.pipeline_mode<synchronous>, transform_indices = @transform_5, window_bounds = array<i64: 16, 32>}, {transform_indices = @transform_6, window_bounds = array<i64: 1, 16, 1024>}]} {
    %c0 = arith.constant 0 : index
    %c0_0 = arith.constant 0 : index
    %0 = vector.load %arg4[%c0, %c0_0] : memref<16x8xf32, #tpu.memory_space<vmem>>, vector<16x8xf32>
    %c0_1 = arith.constant 0 : index
    %c0_2 = arith.constant 0 : index
    %c0_3 = arith.constant 0 : index
    %1 = vector.load %arg2[%c0_1, %c0_2, %c0_3] : memref<1x8x1024xf32, #tpu.memory_space<vmem>>, vector<1x8x1024xf32>
    %2 = vector.shape_cast %1 : vector<1x8x1024xf32> to vector<8x1024xf32>
    %cst = arith.constant dense<0.000000e+00> : vector<16x1024xf32>
    %3 = tpu.matmul %0, %2, %cst {dimension_numbers = #tpu.dot_dimension_numbers<[1], [0], [0], [1], [0, 0, 1, 1], [], []>} : vector<16x8xf32>, vector<8x1024xf32>, vector<16x1024xf32> -> vector<16x1024xf32>
    %c0_4 = arith.constant 0 : index
    %c0_5 = arith.constant 0 : index
    %4 = vector.load %arg5[%c0_4, %c0_5] : memref<16x1xf32, #tpu.memory_space<vmem>>, vector<16x1xf32>
    %5 = vector.broadcast %4 : vector<16x1xf32> to vector<16x1024xf32>
    %6 = arith.addf %3, %5 : vector<16x1024xf32>
    %c0_6 = arith.constant 0 : index
    %c0_7 = arith.constant 0 : index
    %c0_8 = arith.constant 0 : index
    %7 = vector.load %arg3[%c0_6, %c0_7, %c0_8] : memref<1x16x256xf32, #tpu.memory_space<vmem>>, vector<1x16x256xf32>
    %8 = vector.shape_cast %7 : vector<1x16x256xf32> to vector<16x256xf32>
    %c0_9 = arith.constant 0 : index
    %c0_10 = arith.constant 0 : index
    %9 = vector.load %arg6[%c0_9, %c0_10] : memref<256x512xf32, #tpu.memory_space<vmem>>, vector<256x512xf32>
    %cst_11 = arith.constant dense<0.000000e+00> : vector<16x512xf32>
    %10 = tpu.matmul %8, %9, %cst_11 {dimension_numbers = #tpu.dot_dimension_numbers<[1], [0], [0], [1], [0, 0, 1, 1], [], []>} : vector<16x256xf32>, vector<256x512xf32>, vector<16x512xf32> -> vector<16x512xf32>
    %c0_12 = arith.constant 0 : index
    %c0_13 = arith.constant 0 : index
    %11 = vector.load %arg7[%c0_12, %c0_13] : memref<16x32xf32, #tpu.memory_space<vmem>>, vector<16x32xf32>
    %12 = vector.extract_strided_slice %10 {offsets = [0, 0], sizes = [16, 16], strides = [1, 1]} : vector<16x512xf32> to vector<16x16xf32>
    %cst_14 = arith.constant dense<0.000000e+00> : vector<16x32xf32>
    %13 = tpu.matmul %12, %11, %cst_14 {dimension_numbers = #tpu.dot_dimension_numbers<[1], [0], [0], [1], [0, 0, 1, 1], [], []>} : vector<16x16xf32>, vector<16x32xf32>, vector<16x32xf32> -> vector<16x32xf32>
    %14 = vector.extract_strided_slice %6 {offsets = [0, 0], sizes = [16, 32], strides = [1, 1]} : vector<16x1024xf32> to vector<16x32xf32>
    %15 = arith.mulf %14, %13 : vector<16x32xf32>
    %c0_15 = arith.constant 0 : index
    %c0_16 = arith.constant 0 : index
    %c0_17 = arith.constant 0 : index
    %16 = vector.load %arg8[%c0_15, %c0_16, %c0_17] : memref<1x16x1024xf32, #tpu.memory_space<vmem>>, vector<1x16x32xf32>
    %17 = vector.shape_cast %16 : vector<1x16x32xf32> to vector<16x32xf32>
    %18 = vector.shape_cast %15 : vector<16x32xf32> to vector<1x16x32xf32>
    tpu.vector_store %arg8[%c0_15, %c0_16, %c0_17], %18 {strides = array<i32>} : memref<1x16x1024xf32, #tpu.memory_space<vmem>>, vector<1x16x32xf32>,
    %19 = vector.extract_strided_slice %10 {offsets = [0, 16], sizes = [16, 16], strides = [1, 1]} : vector<16x512xf32> to vector<16x16xf32>
    %cst_18 = arith.constant dense<0.000000e+00> : vector<16x32xf32>
    %20 = tpu.matmul %19, %11, %cst_18 {dimension_numbers = #tpu.dot_dimension_numbers<[1], [0], [0], [1], [0, 0, 1, 1], [], []>} : vector<16x16xf32>, vector<16x32xf32>, vector<16x32xf32> -> vector<16x32xf32>
    %21 = vector.extract_strided_slice %6 {offsets = [0, 32], sizes = [16, 32], strides = [1, 1]} : vector<16x1024xf32> to vector<16x32xf32>
    %22 = arith.mulf %21, %20 : vector<16x32xf32>
    %c0_19 = arith.constant 0 : index
    %c0_20 = arith.constant 0 : index
    %c32 = arith.constant 32 : index
    %23 = vector.load %arg8[%c0_19, %c0_20, %c32] : memref<1x16x1024xf32, #tpu.memory_space<vmem>>, vector<1x16x32xf32>
    %24 = vector.shape_cast %23 : vector<1x16x32xf32> to vector<16x32xf32>
    %25 = vector.shape_cast %22 : vector<16x32xf32> to vector<1x16x32xf32>
    tpu.vector_store %arg8[%c0_19, %c0_20, %c32], %25 {strides = array<i32>} : memref<1x16x1024xf32, #tpu.memory_space<vmem>>, vector<1x16x32xf32>,
    %26 = vector.extract_strided_slice %10 {offsets = [0, 32], sizes = [16, 16], strides = [1, 1]} : vector<16x512xf32> to vector<16x16xf32>
    %cst_21 = arith.constant dense<0.000000e+00> : vector<16x32xf32>
    %27 = tpu.matmul %26, %11, %cst_21 {dimension_numbers = #tpu.dot_dimension_numbers<[1], [0], [0], [1], [0, 0, 1, 1], [], []>} : vector<16x16xf32>, vector<16x32xf32>, vector<16x32xf32> -> vector<16x32xf32>
    %28 = vector.extract_strided_slice %6 {offsets = [0, 64], sizes = [16, 32], strides = [1, 1]} : vector<16x1024xf32> to vector<16x32xf32>
    %29 = arith.mulf %28, %27 : vector<16x32xf32>
    %c0_22 = arith.constant 0 : index
    %c0_23 = arith.constant 0 : index
    %c64 = arith.constant 64 : index
    %30 = vector.load %arg8[%c0_22, %c0_23, %c64] : memref<1x16x1024xf32, #tpu.memory_space<vmem>>, vector<1x16x32xf32>
    %31 = vector.shape_cast %30 : vector<1x16x32xf32> to vector<16x32xf32>
    %32 = vector.shape_cast %29 : vector<16x32xf32> to vector<1x16x32xf32>
    tpu.vector_store %arg8[%c0_22, %c0_23, %c64], %32 {strides = array<i32>} : memref<1x16x1024xf32, #tpu.memory_space<vmem>>, vector<1x16x32xf32>,
    %33 = vector.extract_strided_slice %10 {offsets = [0, 48], sizes = [16, 16], strides = [1, 1]} : vector<16x512xf32> to vector<16x16xf32>
    %cst_24 = arith.constant dense<0.000000e+00> : vector<16x32xf32>
    %34 = tpu.matmul %33, %11, %cst_24 {dimension_numbers = #tpu.dot_dimension_numbers<[1], [0], [0], [1], [0, 0, 1, 1], [], []>} : vector<16x16xf32>, vector<16x32xf32>, vector<16x32xf32> -> vector<16x32xf32>
    %35 = vector.extract_strided_slice %6 {offsets = [0, 96], sizes = [16, 32], strides = [1, 1]} : vector<16x1024xf32> to vector<16x32xf32>
    %36 = arith.mulf %35, %34 : vector<16x32xf32>
    %c0_25 = arith.constant 0 : index
    %c0_26 = arith.constant 0 : index
    %c96 = arith.constant 96 : index
    %37 = vector.load %arg8[%c0_25, %c0_26, %c96] : memref<1x16x1024xf32, #tpu.memory_space<vmem>>, vector<1x16x32xf32>
    %38 = vector.shape_cast %37 : vector<1x16x32xf32> to vector<16x32xf32>
    %39 = vector.shape_cast %36 : vector<16x32xf32> to vector<1x16x32xf32>
    tpu.vector_store %arg8[%c0_25, %c0_26, %c96], %39 {strides = array<i32>} : memref<1x16x1024xf32, #tpu.memory_space<vmem>>, vector<1x16x32xf32>,
    %40 = vector.extract_strided_slice %10 {offsets = [0, 64], sizes = [16, 16], strides = [1, 1]} : vector<16x512xf32> to vector<16x16xf32>
    %cst_27 = arith.constant dense<0.000000e+00> : vector<16x32xf32>
    %41 = tpu.matmul %40, %11, %cst_27 {dimension_numbers = #tpu.dot_dimension_numbers<[1], [0], [0], [1], [0, 0, 1, 1], [], []>} : vector<16x16xf32>, vector<16x32xf32>, vector<16x32xf32> -> vector<16x32xf32>
    %42 = vector.extract_strided_slice %6 {offsets = [0, 128], sizes = [16, 32], strides = [1, 1]} : vector<16x1024xf32> to vector<16x32xf32>
    %43 = arith.mulf %42, %41 : vector<16x32xf32>
    %c0_28 = arith.constant 0 : index
    %c0_29 = arith.constant 0 : index
    %c128 = arith.constant 128 : index
    %44 = vector.load %arg8[%c0_28, %c0_29, %c128] : memref<1x16x1024xf32, #tpu.memory_space<vmem>>, vector<1x16x32xf32>
    %45 = vector.shape_cast %44 : vector<1x16x32xf32> to vector<16x32xf32>
    %46 = vector.shape_cast %43 : vector<16x32xf32> to vector<1x16x32xf32>
    tpu.vector_store %arg8[%c0_28, %c0_29, %c128], %46 {strides = array<i32>} : memref<1x16x1024xf32, #tpu.memory_space<vmem>>, vector<1x16x32xf32>,
    %47 = vector.extract_strided_slice %10 {offsets = [0, 80], sizes = [16, 16], strides = [1, 1]} : vector<16x512xf32> to vector<16x16xf32>
    %cst_30 = arith.constant dense<0.000000e+00> : vector<16x32xf32>
    %48 = tpu.matmul %47, %11, %cst_30 {dimension_numbers = #tpu.dot_dimension_numbers<[1], [0], [0], [1], [0, 0, 1, 1], [], []>} : vector<16x16xf32>, vector<16x32xf32>, vector<16x32xf32> -> vector<16x32xf32>
    %49 = vector.extract_strided_slice %6 {offsets = [0, 160], sizes = [16, 32], strides = [1, 1]} : vector<16x1024xf32> to vector<16x32xf32>
    %50 = arith.mulf %49, %48 : vector<16x32xf32>
    %c0_31 = arith.constant 0 : index
    %c0_32 = arith.constant 0 : index
    %c160 = arith.constant 160 : index
    %51 = vector.load %arg8[%c0_31, %c0_32, %c160] : memref<1x16x1024xf32, #tpu.memory_space<vmem>>, vector<1x16x32xf32>
    %52 = vector.shape_cast %51 : vector<1x16x32xf32> to vector<16x32xf32>
    %53 = vector.shape_cast %50 : vector<16x32xf32> to vector<1x16x32xf32>
    tpu.vector_store %arg8[%c0_31, %c0_32, %c160], %53 {strides = array<i32>} : memref<1x16x1024xf32, #tpu.memory_space<vmem>>, vector<1x16x32xf32>,
    %54 = vector.extract_strided_slice %10 {offsets = [0, 96], sizes = [16, 16], strides = [1, 1]} : vector<16x512xf32> to vector<16x16xf32>
    %cst_33 = arith.constant dense<0.000000e+00> : vector<16x32xf32>
    %55 = tpu.matmul %54, %11, %cst_33 {dimension_numbers = #tpu.dot_dimension_numbers<[1], [0], [0], [1], [0, 0, 1, 1], [], []>} : vector<16x16xf32>, vector<16x32xf32>, vector<16x32xf32> -> vector<16x32xf32>
    %56 = vector.extract_strided_slice %6 {offsets = [0, 192], sizes = [16, 32], strides = [1, 1]} : vector<16x1024xf32> to vector<16x32xf32>
    %57 = arith.mulf %56, %55 : vector<16x32xf32>
    %c0_34 = arith.constant 0 : index
    %c0_35 = arith.constant 0 : index
    %c192 = arith.constant 192 : index
    %58 = vector.load %arg8[%c0_34, %c0_35, %c192] : memref<1x16x1024xf32, #tpu.memory_space<vmem>>, vector<1x16x32xf32>
    %59 = vector.shape_cast %58 : vector<1x16x32xf32> to vector<16x32xf32>
    %60 = vector.shape_cast %57 : vector<16x32xf32> to vector<1x16x32xf32>
    tpu.vector_store %arg8[%c0_34, %c0_35, %c192], %60 {strides = array<i32>} : memref<1x16x1024xf32, #tpu.memory_space<vmem>>, vector<1x16x32xf32>,
    %61 = vector.extract_strided_slice %10 {offsets = [0, 112], sizes = [16, 16], strides = [1, 1]} : vector<16x512xf32> to vector<16x16xf32>
    %cst_36 = arith.constant dense<0.000000e+00> : vector<16x32xf32>
    %62 = tpu.matmul %61, %11, %cst_36 {dimension_numbers = #tpu.dot_dimension_numbers<[1], [0], [0], [1], [0, 0, 1, 1], [], []>} : vector<16x16xf32>, vector<16x32xf32>, vector<16x32xf32> -> vector<16x32xf32>
    %63 = vector.extract_strided_slice %6 {offsets = [0, 224], sizes = [16, 32], strides = [1, 1]} : vector<16x1024xf32> to vector<16x32xf32>
    %64 = arith.mulf %63, %62 : vector<16x32xf32>
    %c0_37 = arith.constant 0 : index
    %c0_38 = arith.constant 0 : index
    %c224 = arith.constant 224 : index
    %65 = vector.load %arg8[%c0_37, %c0_38, %c224] : memref<1x16x1024xf32, #tpu.memory_space<vmem>>, vector<1x16x32xf32>
    %66 = vector.shape_cast %65 : vector<1x16x32xf32> to vector<16x32xf32>
    %67 = vector.shape_cast %64 : vector<16x32xf32> to vector<1x16x32xf32>
    tpu.vector_store %arg8[%c0_37, %c0_38, %c224], %67 {strides = array<i32>} : memref<1x16x1024xf32, #tpu.memory_space<vmem>>, vector<1x16x32xf32>,
    %68 = vector.extract_strided_slice %10 {offsets = [0, 128], sizes = [16, 16], strides = [1, 1]} : vector<16x512xf32> to vector<16x16xf32>
    %cst_39 = arith.constant dense<0.000000e+00> : vector<16x32xf32>
    %69 = tpu.matmul %68, %11, %cst_39 {dimension_numbers = #tpu.dot_dimension_numbers<[1], [0], [0], [1], [0, 0, 1, 1], [], []>} : vector<16x16xf32>, vector<16x32xf32>, vector<16x32xf32> -> vector<16x32xf32>
    %70 = vector.extract_strided_slice %6 {offsets = [0, 256], sizes = [16, 32], strides = [1, 1]} : vector<16x1024xf32> to vector<16x32xf32>
    %71 = arith.mulf %70, %69 : vector<16x32xf32>
    %c0_40 = arith.constant 0 : index
    %c0_41 = arith.constant 0 : index
    %c256 = arith.constant 256 : index
    %72 = vector.load %arg8[%c0_40, %c0_41, %c256] : memref<1x16x1024xf32, #tpu.memory_space<vmem>>, vector<1x16x32xf32>
    %73 = vector.shape_cast %72 : vector<1x16x32xf32> to vector<16x32xf32>
    %74 = vector.shape_cast %71 : vector<16x32xf32> to vector<1x16x32xf32>
    tpu.vector_store %arg8[%c0_40, %c0_41, %c256], %74 {strides = array<i32>} : memref<1x16x1024xf32, #tpu.memory_space<vmem>>, vector<1x16x32xf32>,
    %75 = vector.extract_strided_slice %10 {offsets = [0, 144], sizes = [16, 16], strides = [1, 1]} : vector<16x512xf32> to vector<16x16xf32>
    %cst_42 = arith.constant dense<0.000000e+00> : vector<16x32xf32>
    %76 = tpu.matmul %75, %11, %cst_42 {dimension_numbers = #tpu.dot_dimension_numbers<[1], [0], [0], [1], [0, 0, 1, 1], [], []>} : vector<16x16xf32>, vector<16x32xf32>, vector<16x32xf32> -> vector<16x32xf32>
    %77 = vector.extract_strided_slice %6 {offsets = [0, 288], sizes = [16, 32], strides = [1, 1]} : vector<16x1024xf32> to vector<16x32xf32>
    %78 = arith.mulf %77, %76 : vector<16x32xf32>
    %c0_43 = arith.constant 0 : index
    %c0_44 = arith.constant 0 : index
    %c288 = arith.constant 288 : index
    %79 = vector.load %arg8[%c0_43, %c0_44, %c288] : memref<1x16x1024xf32, #tpu.memory_space<vmem>>, vector<1x16x32xf32>
    %80 = vector.shape_cast %79 : vector<1x16x32xf32> to vector<16x32xf32>
    %81 = vector.shape_cast %78 : vector<16x32xf32> to vector<1x16x32xf32>
    tpu.vector_store %arg8[%c0_43, %c0_44, %c288], %81 {strides = array<i32>} : memref<1x16x1024xf32, #tpu.memory_space<vmem>>, vector<1x16x32xf32>,
    %82 = vector.extract_strided_slice %10 {offsets = [0, 160], sizes = [16, 16], strides = [1, 1]} : vector<16x512xf32> to vector<16x16xf32>
    %cst_45 = arith.constant dense<0.000000e+00> : vector<16x32xf32>
    %83 = tpu.matmul %82, %11, %cst_45 {dimension_numbers = #tpu.dot_dimension_numbers<[1], [0], [0], [1], [0, 0, 1, 1], [], []>} : vector<16x16xf32>, vector<16x32xf32>, vector<16x32xf32> -> vector<16x32xf32>
    %84 = vector.extract_strided_slice %6 {offsets = [0, 320], sizes = [16, 32], strides = [1, 1]} : vector<16x1024xf32> to vector<16x32xf32>
    %85 = arith.mulf %84, %83 : vector<16x32xf32>
    %c0_46 = arith.constant 0 : index
    %c0_47 = arith.constant 0 : index
    %c320 = arith.constant 320 : index
    %86 = vector.load %arg8[%c0_46, %c0_47, %c320] : memref<1x16x1024xf32, #tpu.memory_space<vmem>>, vector<1x16x32xf32>
    %87 = vector.shape_cast %86 : vector<1x16x32xf32> to vector<16x32xf32>
    %88 = vector.shape_cast %85 : vector<16x32xf32> to vector<1x16x32xf32>
    tpu.vector_store %arg8[%c0_46, %c0_47, %c320], %88 {strides = array<i32>} : memref<1x16x1024xf32, #tpu.memory_space<vmem>>, vector<1x16x32xf32>,
    %89 = vector.extract_strided_slice %10 {offsets = [0, 176], sizes = [16, 16], strides = [1, 1]} : vector<16x512xf32> to vector<16x16xf32>
    %cst_48 = arith.constant dense<0.000000e+00> : vector<16x32xf32>
    %90 = tpu.matmul %89, %11, %cst_48 {dimension_numbers = #tpu.dot_dimension_numbers<[1], [0], [0], [1], [0, 0, 1, 1], [], []>} : vector<16x16xf32>, vector<16x32xf32>, vector<16x32xf32> -> vector<16x32xf32>
    %91 = vector.extract_strided_slice %6 {offsets = [0, 352], sizes = [16, 32], strides = [1, 1]} : vector<16x1024xf32> to vector<16x32xf32>
    %92 = arith.mulf %91, %90 : vector<16x32xf32>
    %c0_49 = arith.constant 0 : index
    %c0_50 = arith.constant 0 : index
    %c352 = arith.constant 352 : index
    %93 = vector.load %arg8[%c0_49, %c0_50, %c352] : memref<1x16x1024xf32, #tpu.memory_space<vmem>>, vector<1x16x32xf32>
    %94 = vector.shape_cast %93 : vector<1x16x32xf32> to vector<16x32xf32>
    %95 = vector.shape_cast %92 : vector<16x32xf32> to vector<1x16x32xf32>
    tpu.vector_store %arg8[%c0_49, %c0_50, %c352], %95 {strides = array<i32>} : memref<1x16x1024xf32, #tpu.memory_space<vmem>>, vector<1x16x32xf32>,
    %96 = vector.extract_strided_slice %10 {offsets = [0, 192], sizes = [16, 16], strides = [1, 1]} : vector<16x512xf32> to vector<16x16xf32>
    %cst_51 = arith.constant dense<0.000000e+00> : vector<16x32xf32>
    %97 = tpu.matmul %96, %11, %cst_51 {dimension_numbers = #tpu.dot_dimension_numbers<[1], [0], [0], [1], [0, 0, 1, 1], [], []>} : vector<16x16xf32>, vector<16x32xf32>, vector<16x32xf32> -> vector<16x32xf32>
    %98 = vector.extract_strided_slice %6 {offsets = [0, 384], sizes = [16, 32], strides = [1, 1]} : vector<16x1024xf32> to vector<16x32xf32>
    %99 = arith.mulf %98, %97 : vector<16x32xf32>
    %c0_52 = arith.constant 0 : index
    %c0_53 = arith.constant 0 : index
    %c384 = arith.constant 384 : index
    %100 = vector.load %arg8[%c0_52, %c0_53, %c384] : memref<1x16x1024xf32, #tpu.memory_space<vmem>>, vector<1x16x32xf32>
    %101 = vector.shape_cast %100 : vector<1x16x32xf32> to vector<16x32xf32>
    %102 = vector.shape_cast %99 : vector<16x32xf32> to vector<1x16x32xf32>
    tpu.vector_store %arg8[%c0_52, %c0_53, %c384], %102 {strides = array<i32>} : memref<1x16x1024xf32, #tpu.memory_space<vmem>>, vector<1x16x32xf32>,
    %103 = vector.extract_strided_slice %10 {offsets = [0, 208], sizes = [16, 16], strides = [1, 1]} : vector<16x512xf32> to vector<16x16xf32>
    %cst_54 = arith.constant dense<0.000000e+00> : vector<16x32xf32>
    %104 = tpu.matmul %103, %11, %cst_54 {dimension_numbers = #tpu.dot_dimension_numbers<[1], [0], [0], [1], [0, 0, 1, 1], [], []>} : vector<16x16xf32>, vector<16x32xf32>, vector<16x32xf32> -> vector<16x32xf32>
    %105 = vector.extract_strided_slice %6 {offsets = [0, 416], sizes = [16, 32], strides = [1, 1]} : vector<16x1024xf32> to vector<16x32xf32>
    %106 = arith.mulf %105, %104 : vector<16x32xf32>
    %c0_55 = arith.constant 0 : index
    %c0_56 = arith.constant 0 : index
    %c416 = arith.constant 416 : index
    %107 = vector.load %arg8[%c0_55, %c0_56, %c416] : memref<1x16x1024xf32, #tpu.memory_space<vmem>>, vector<1x16x32xf32>
    %108 = vector.shape_cast %107 : vector<1x16x32xf32> to vector<16x32xf32>
    %109 = vector.shape_cast %106 : vector<16x32xf32> to vector<1x16x32xf32>
    tpu.vector_store %arg8[%c0_55, %c0_56, %c416], %109 {strides = array<i32>} : memref<1x16x1024xf32, #tpu.memory_space<vmem>>, vector<1x16x32xf32>,
    %110 = vector.extract_strided_slice %10 {offsets = [0, 224], sizes = [16, 16], strides = [1, 1]} : vector<16x512xf32> to vector<16x16xf32>
    %cst_57 = arith.constant dense<0.000000e+00> : vector<16x32xf32>
    %111 = tpu.matmul %110, %11, %cst_57 {dimension_numbers = #tpu.dot_dimension_numbers<[1], [0], [0], [1], [0, 0, 1, 1], [], []>} : vector<16x16xf32>, vector<16x32xf32>, vector<16x32xf32> -> vector<16x32xf32>
    %112 = vector.extract_strided_slice %6 {offsets = [0, 448], sizes = [16, 32], strides = [1, 1]} : vector<16x1024xf32> to vector<16x32xf32>
    %113 = arith.mulf %112, %111 : vector<16x32xf32>
    %c0_58 = arith.constant 0 : index
    %c0_59 = arith.constant 0 : index
    %c448 = arith.constant 448 : index
    %114 = vector.load %arg8[%c0_58, %c0_59, %c448] : memref<1x16x1024xf32, #tpu.memory_space<vmem>>, vector<1x16x32xf32>
    %115 = vector.shape_cast %114 : vector<1x16x32xf32> to vector<16x32xf32>
    %116 = vector.shape_cast %113 : vector<16x32xf32> to vector<1x16x32xf32>
    tpu.vector_store %arg8[%c0_58, %c0_59, %c448], %116 {strides = array<i32>} : memref<1x16x1024xf32, #tpu.memory_space<vmem>>, vector<1x16x32xf32>,
    %117 = vector.extract_strided_slice %10 {offsets = [0, 240], sizes = [16, 16], strides = [1, 1]} : vector<16x512xf32> to vector<16x16xf32>
    %cst_60 = arith.constant dense<0.000000e+00> : vector<16x32xf32>
    %118 = tpu.matmul %117, %11, %cst_60 {dimension_numbers = #tpu.dot_dimension_numbers<[1], [0], [0], [1], [0, 0, 1, 1], [], []>} : vector<16x16xf32>, vector<16x32xf32>, vector<16x32xf32> -> vector<16x32xf32>
    %119 = vector.extract_strided_slice %6 {offsets = [0, 480], sizes = [16, 32], strides = [1, 1]} : vector<16x1024xf32> to vector<16x32xf32>
    %120 = arith.mulf %119, %118 : vector<16x32xf32>
    %c0_61 = arith.constant 0 : index
    %c0_62 = arith.constant 0 : index
    %c480 = arith.constant 480 : index
    %121 = vector.load %arg8[%c0_61, %c0_62, %c480] : memref<1x16x1024xf32, #tpu.memory_space<vmem>>, vector<1x16x32xf32>
    %122 = vector.shape_cast %121 : vector<1x16x32xf32> to vector<16x32xf32>
    %123 = vector.shape_cast %120 : vector<16x32xf32> to vector<1x16x32xf32>
    tpu.vector_store %arg8[%c0_61, %c0_62, %c480], %123 {strides = array<i32>} : memref<1x16x1024xf32, #tpu.memory_space<vmem>>, vector<1x16x32xf32>,
    %124 = vector.extract_strided_slice %10 {offsets = [0, 256], sizes = [16, 16], strides = [1, 1]} : vector<16x512xf32> to vector<16x16xf32>
    %cst_63 = arith.constant dense<0.000000e+00> : vector<16x32xf32>
    %125 = tpu.matmul %124, %11, %cst_63 {dimension_numbers = #tpu.dot_dimension_numbers<[1], [0], [0], [1], [0, 0, 1, 1], [], []>} : vector<16x16xf32>, vector<16x32xf32>, vector<16x32xf32> -> vector<16x32xf32>
    %126 = vector.extract_strided_slice %6 {offsets = [0, 512], sizes = [16, 32], strides = [1, 1]} : vector<16x1024xf32> to vector<16x32xf32>
    %127 = arith.mulf %126, %125 : vector<16x32xf32>
    %c0_64 = arith.constant 0 : index
    %c0_65 = arith.constant 0 : index
    %c512 = arith.constant 512 : index
    %128 = vector.load %arg8[%c0_64, %c0_65, %c512] : memref<1x16x1024xf32, #tpu.memory_space<vmem>>, vector<1x16x32xf32>
    %129 = vector.shape_cast %128 : vector<1x16x32xf32> to vector<16x32xf32>
    %130 = vector.shape_cast %127 : vector<16x32xf32> to vector<1x16x32xf32>
    tpu.vector_store %arg8[%c0_64, %c0_65, %c512], %130 {strides = array<i32>} : memref<1x16x1024xf32, #tpu.memory_space<vmem>>, vector<1x16x32xf32>,
    %131 = vector.extract_strided_slice %10 {offsets = [0, 272], sizes = [16, 16], strides = [1, 1]} : vector<16x512xf32> to vector<16x16xf32>
    %cst_66 = arith.constant dense<0.000000e+00> : vector<16x32xf32>
    %132 = tpu.matmul %131, %11, %cst_66 {dimension_numbers = #tpu.dot_dimension_numbers<[1], [0], [0], [1], [0, 0, 1, 1], [], []>} : vector<16x16xf32>, vector<16x32xf32>, vector<16x32xf32> -> vector<16x32xf32>
    %133 = vector.extract_strided_slice %6 {offsets = [0, 544], sizes = [16, 32], strides = [1, 1]} : vector<16x1024xf32> to vector<16x32xf32>
    %134 = arith.mulf %133, %132 : vector<16x32xf32>
    %c0_67 = arith.constant 0 : index
    %c0_68 = arith.constant 0 : index
    %c544 = arith.constant 544 : index
    %135 = vector.load %arg8[%c0_67, %c0_68, %c544] : memref<1x16x1024xf32, #tpu.memory_space<vmem>>, vector<1x16x32xf32>
    %136 = vector.shape_cast %135 : vector<1x16x32xf32> to vector<16x32xf32>
    %137 = vector.shape_cast %134 : vector<16x32xf32> to vector<1x16x32xf32>
    tpu.vector_store %arg8[%c0_67, %c0_68, %c544], %137 {strides = array<i32>} : memref<1x16x1024xf32, #tpu.memory_space<vmem>>, vector<1x16x32xf32>,
    %138 = vector.extract_strided_slice %10 {offsets = [0, 288], sizes = [16, 16], strides = [1, 1]} : vector<16x512xf32> to vector<16x16xf32>
    %cst_69 = arith.constant dense<0.000000e+00> : vector<16x32xf32>
    %139 = tpu.matmul %138, %11, %cst_69 {dimension_numbers = #tpu.dot_dimension_numbers<[1], [0], [0], [1], [0, 0, 1, 1], [], []>} : vector<16x16xf32>, vector<16x32xf32>, vector<16x32xf32> -> vector<16x32xf32>
    %140 = vector.extract_strided_slice %6 {offsets = [0, 576], sizes = [16, 32], strides = [1, 1]} : vector<16x1024xf32> to vector<16x32xf32>
    %141 = arith.mulf %140, %139 : vector<16x32xf32>
    %c0_70 = arith.constant 0 : index
    %c0_71 = arith.constant 0 : index
    %c576 = arith.constant 576 : index
    %142 = vector.load %arg8[%c0_70, %c0_71, %c576] : memref<1x16x1024xf32, #tpu.memory_space<vmem>>, vector<1x16x32xf32>
    %143 = vector.shape_cast %142 : vector<1x16x32xf32> to vector<16x32xf32>
    %144 = vector.shape_cast %141 : vector<16x32xf32> to vector<1x16x32xf32>
    tpu.vector_store %arg8[%c0_70, %c0_71, %c576], %144 {strides = array<i32>} : memref<1x16x1024xf32, #tpu.memory_space<vmem>>, vector<1x16x32xf32>,
    %145 = vector.extract_strided_slice %10 {offsets = [0, 304], sizes = [16, 16], strides = [1, 1]} : vector<16x512xf32> to vector<16x16xf32>
    %cst_72 = arith.constant dense<0.000000e+00> : vector<16x32xf32>
    %146 = tpu.matmul %145, %11, %cst_72 {dimension_numbers = #tpu.dot_dimension_numbers<[1], [0], [0], [1], [0, 0, 1, 1], [], []>} : vector<16x16xf32>, vector<16x32xf32>, vector<16x32xf32> -> vector<16x32xf32>
    %147 = vector.extract_strided_slice %6 {offsets = [0, 608], sizes = [16, 32], strides = [1, 1]} : vector<16x1024xf32> to vector<16x32xf32>
    %148 = arith.mulf %147, %146 : vector<16x32xf32>
    %c0_73 = arith.constant 0 : index
    %c0_74 = arith.constant 0 : index
    %c608 = arith.constant 608 : index
    %149 = vector.load %arg8[%c0_73, %c0_74, %c608] : memref<1x16x1024xf32, #tpu.memory_space<vmem>>, vector<1x16x32xf32>
    %150 = vector.shape_cast %149 : vector<1x16x32xf32> to vector<16x32xf32>
    %151 = vector.shape_cast %148 : vector<16x32xf32> to vector<1x16x32xf32>
    tpu.vector_store %arg8[%c0_73, %c0_74, %c608], %151 {strides = array<i32>} : memref<1x16x1024xf32, #tpu.memory_space<vmem>>, vector<1x16x32xf32>,
    %152 = vector.extract_strided_slice %10 {offsets = [0, 320], sizes = [16, 16], strides = [1, 1]} : vector<16x512xf32> to vector<16x16xf32>
    %cst_75 = arith.constant dense<0.000000e+00> : vector<16x32xf32>
    %153 = tpu.matmul %152, %11, %cst_75 {dimension_numbers = #tpu.dot_dimension_numbers<[1], [0], [0], [1], [0, 0, 1, 1], [], []>} : vector<16x16xf32>, vector<16x32xf32>, vector<16x32xf32> -> vector<16x32xf32>
    %154 = vector.extract_strided_slice %6 {offsets = [0, 640], sizes = [16, 32], strides = [1, 1]} : vector<16x1024xf32> to vector<16x32xf32>
    %155 = arith.mulf %154, %153 : vector<16x32xf32>
    %c0_76 = arith.constant 0 : index
    %c0_77 = arith.constant 0 : index
    %c640 = arith.constant 640 : index
    %156 = vector.load %arg8[%c0_76, %c0_77, %c640] : memref<1x16x1024xf32, #tpu.memory_space<vmem>>, vector<1x16x32xf32>
    %157 = vector.shape_cast %156 : vector<1x16x32xf32> to vector<16x32xf32>
    %158 = vector.shape_cast %155 : vector<16x32xf32> to vector<1x16x32xf32>
    tpu.vector_store %arg8[%c0_76, %c0_77, %c640], %158 {strides = array<i32>} : memref<1x16x1024xf32, #tpu.memory_space<vmem>>, vector<1x16x32xf32>,
    %159 = vector.extract_strided_slice %10 {offsets = [0, 336], sizes = [16, 16], strides = [1, 1]} : vector<16x512xf32> to vector<16x16xf32>
    %cst_78 = arith.constant dense<0.000000e+00> : vector<16x32xf32>
    %160 = tpu.matmul %159, %11, %cst_78 {dimension_numbers = #tpu.dot_dimension_numbers<[1], [0], [0], [1], [0, 0, 1, 1], [], []>} : vector<16x16xf32>, vector<16x32xf32>, vector<16x32xf32> -> vector<16x32xf32>
    %161 = vector.extract_strided_slice %6 {offsets = [0, 672], sizes = [16, 32], strides = [1, 1]} : vector<16x1024xf32> to vector<16x32xf32>
    %162 = arith.mulf %161, %160 : vector<16x32xf32>
    %c0_79 = arith.constant 0 : index
    %c0_80 = arith.constant 0 : index
    %c672 = arith.constant 672 : index
    %163 = vector.load %arg8[%c0_79, %c0_80, %c672] : memref<1x16x1024xf32, #tpu.memory_space<vmem>>, vector<1x16x32xf32>
    %164 = vector.shape_cast %163 : vector<1x16x32xf32> to vector<16x32xf32>
    %165 = vector.shape_cast %162 : vector<16x32xf32> to vector<1x16x32xf32>
    tpu.vector_store %arg8[%c0_79, %c0_80, %c672], %165 {strides = array<i32>} : memref<1x16x1024xf32, #tpu.memory_space<vmem>>, vector<1x16x32xf32>,
    %166 = vector.extract_strided_slice %10 {offsets = [0, 352], sizes = [16, 16], strides = [1, 1]} : vector<16x512xf32> to vector<16x16xf32>
    %cst_81 = arith.constant dense<0.000000e+00> : vector<16x32xf32>
    %167 = tpu.matmul %166, %11, %cst_81 {dimension_numbers = #tpu.dot_dimension_numbers<[1], [0], [0], [1], [0, 0, 1, 1], [], []>} : vector<16x16xf32>, vector<16x32xf32>, vector<16x32xf32> -> vector<16x32xf32>
    %168 = vector.extract_strided_slice %6 {offsets = [0, 704], sizes = [16, 32], strides = [1, 1]} : vector<16x1024xf32> to vector<16x32xf32>
    %169 = arith.mulf %168, %167 : vector<16x32xf32>
    %c0_82 = arith.constant 0 : index
    %c0_83 = arith.constant 0 : index
    %c704 = arith.constant 704 : index
    %170 = vector.load %arg8[%c0_82, %c0_83, %c704] : memref<1x16x1024xf32, #tpu.memory_space<vmem>>, vector<1x16x32xf32>
    %171 = vector.shape_cast %170 : vector<1x16x32xf32> to vector<16x32xf32>
    %172 = vector.shape_cast %169 : vector<16x32xf32> to vector<1x16x32xf32>
    tpu.vector_store %arg8[%c0_82, %c0_83, %c704], %172 {strides = array<i32>} : memref<1x16x1024xf32, #tpu.memory_space<vmem>>, vector<1x16x32xf32>,
    %173 = vector.extract_strided_slice %10 {offsets = [0, 368], sizes = [16, 16], strides = [1, 1]} : vector<16x512xf32> to vector<16x16xf32>
    %cst_84 = arith.constant dense<0.000000e+00> : vector<16x32xf32>
    %174 = tpu.matmul %173, %11, %cst_84 {dimension_numbers = #tpu.dot_dimension_numbers<[1], [0], [0], [1], [0, 0, 1, 1], [], []>} : vector<16x16xf32>, vector<16x32xf32>, vector<16x32xf32> -> vector<16x32xf32>
    %175 = vector.extract_strided_slice %6 {offsets = [0, 736], sizes = [16, 32], strides = [1, 1]} : vector<16x1024xf32> to vector<16x32xf32>
    %176 = arith.mulf %175, %174 : vector<16x32xf32>
    %c0_85 = arith.constant 0 : index
    %c0_86 = arith.constant 0 : index
    %c736 = arith.constant 736 : index
    %177 = vector.load %arg8[%c0_85, %c0_86, %c736] : memref<1x16x1024xf32, #tpu.memory_space<vmem>>, vector<1x16x32xf32>
    %178 = vector.shape_cast %177 : vector<1x16x32xf32> to vector<16x32xf32>
    %179 = vector.shape_cast %176 : vector<16x32xf32> to vector<1x16x32xf32>
    tpu.vector_store %arg8[%c0_85, %c0_86, %c736], %179 {strides = array<i32>} : memref<1x16x1024xf32, #tpu.memory_space<vmem>>, vector<1x16x32xf32>,
    %180 = vector.extract_strided_slice %10 {offsets = [0, 384], sizes = [16, 16], strides = [1, 1]} : vector<16x512xf32> to vector<16x16xf32>
    %cst_87 = arith.constant dense<0.000000e+00> : vector<16x32xf32>
    %181 = tpu.matmul %180, %11, %cst_87 {dimension_numbers = #tpu.dot_dimension_numbers<[1], [0], [0], [1], [0, 0, 1, 1], [], []>} : vector<16x16xf32>, vector<16x32xf32>, vector<16x32xf32> -> vector<16x32xf32>
    %182 = vector.extract_strided_slice %6 {offsets = [0, 768], sizes = [16, 32], strides = [1, 1]} : vector<16x1024xf32> to vector<16x32xf32>
    %183 = arith.mulf %182, %181 : vector<16x32xf32>
    %c0_88 = arith.constant 0 : index
    %c0_89 = arith.constant 0 : index
    %c768 = arith.constant 768 : index
    %184 = vector.load %arg8[%c0_88, %c0_89, %c768] : memref<1x16x1024xf32, #tpu.memory_space<vmem>>, vector<1x16x32xf32>
    %185 = vector.shape_cast %184 : vector<1x16x32xf32> to vector<16x32xf32>
    %186 = vector.shape_cast %183 : vector<16x32xf32> to vector<1x16x32xf32>
    tpu.vector_store %arg8[%c0_88, %c0_89, %c768], %186 {strides = array<i32>} : memref<1x16x1024xf32, #tpu.memory_space<vmem>>, vector<1x16x32xf32>,
    %187 = vector.extract_strided_slice %10 {offsets = [0, 400], sizes = [16, 16], strides = [1, 1]} : vector<16x512xf32> to vector<16x16xf32>
    %cst_90 = arith.constant dense<0.000000e+00> : vector<16x32xf32>
    %188 = tpu.matmul %187, %11, %cst_90 {dimension_numbers = #tpu.dot_dimension_numbers<[1], [0], [0], [1], [0, 0, 1, 1], [], []>} : vector<16x16xf32>, vector<16x32xf32>, vector<16x32xf32> -> vector<16x32xf32>
    %189 = vector.extract_strided_slice %6 {offsets = [0, 800], sizes = [16, 32], strides = [1, 1]} : vector<16x1024xf32> to vector<16x32xf32>
    %190 = arith.mulf %189, %188 : vector<16x32xf32>
    %c0_91 = arith.constant 0 : index
    %c0_92 = arith.constant 0 : index
    %c800 = arith.constant 800 : index
    %191 = vector.load %arg8[%c0_91, %c0_92, %c800] : memref<1x16x1024xf32, #tpu.memory_space<vmem>>, vector<1x16x32xf32>
    %192 = vector.shape_cast %191 : vector<1x16x32xf32> to vector<16x32xf32>
    %193 = vector.shape_cast %190 : vector<16x32xf32> to vector<1x16x32xf32>
    tpu.vector_store %arg8[%c0_91, %c0_92, %c800], %193 {strides = array<i32>} : memref<1x16x1024xf32, #tpu.memory_space<vmem>>, vector<1x16x32xf32>,
    %194 = vector.extract_strided_slice %10 {offsets = [0, 416], sizes = [16, 16], strides = [1, 1]} : vector<16x512xf32> to vector<16x16xf32>
    %cst_93 = arith.constant dense<0.000000e+00> : vector<16x32xf32>
    %195 = tpu.matmul %194, %11, %cst_93 {dimension_numbers = #tpu.dot_dimension_numbers<[1], [0], [0], [1], [0, 0, 1, 1], [], []>} : vector<16x16xf32>, vector<16x32xf32>, vector<16x32xf32> -> vector<16x32xf32>
    %196 = vector.extract_strided_slice %6 {offsets = [0, 832], sizes = [16, 32], strides = [1, 1]} : vector<16x1024xf32> to vector<16x32xf32>
    %197 = arith.mulf %196, %195 : vector<16x32xf32>
    %c0_94 = arith.constant 0 : index
    %c0_95 = arith.constant 0 : index
    %c832 = arith.constant 832 : index
    %198 = vector.load %arg8[%c0_94, %c0_95, %c832] : memref<1x16x1024xf32, #tpu.memory_space<vmem>>, vector<1x16x32xf32>
    %199 = vector.shape_cast %198 : vector<1x16x32xf32> to vector<16x32xf32>
    %200 = vector.shape_cast %197 : vector<16x32xf32> to vector<1x16x32xf32>
    tpu.vector_store %arg8[%c0_94, %c0_95, %c832], %200 {strides = array<i32>} : memref<1x16x1024xf32, #tpu.memory_space<vmem>>, vector<1x16x32xf32>,
    %201 = vector.extract_strided_slice %10 {offsets = [0, 432], sizes = [16, 16], strides = [1, 1]} : vector<16x512xf32> to vector<16x16xf32>
    %cst_96 = arith.constant dense<0.000000e+00> : vector<16x32xf32>
    %202 = tpu.matmul %201, %11, %cst_96 {dimension_numbers = #tpu.dot_dimension_numbers<[1], [0], [0], [1], [0, 0, 1, 1], [], []>} : vector<16x16xf32>, vector<16x32xf32>, vector<16x32xf32> -> vector<16x32xf32>
    %203 = vector.extract_strided_slice %6 {offsets = [0, 864], sizes = [16, 32], strides = [1, 1]} : vector<16x1024xf32> to vector<16x32xf32>
    %204 = arith.mulf %203, %202 : vector<16x32xf32>
    %c0_97 = arith.constant 0 : index
    %c0_98 = arith.constant 0 : index
    %c864 = arith.constant 864 : index
    %205 = vector.load %arg8[%c0_97, %c0_98, %c864] : memref<1x16x1024xf32, #tpu.memory_space<vmem>>, vector<1x16x32xf32>
    %206 = vector.shape_cast %205 : vector<1x16x32xf32> to vector<16x32xf32>
    %207 = vector.shape_cast %204 : vector<16x32xf32> to vector<1x16x32xf32>
    tpu.vector_store %arg8[%c0_97, %c0_98, %c864], %207 {strides = array<i32>} : memref<1x16x1024xf32, #tpu.memory_space<vmem>>, vector<1x16x32xf32>,
    %208 = vector.extract_strided_slice %10 {offsets = [0, 448], sizes = [16, 16], strides = [1, 1]} : vector<16x512xf32> to vector<16x16xf32>
    %cst_99 = arith.constant dense<0.000000e+00> : vector<16x32xf32>
    %209 = tpu.matmul %208, %11, %cst_99 {dimension_numbers = #tpu.dot_dimension_numbers<[1], [0], [0], [1], [0, 0, 1, 1], [], []>} : vector<16x16xf32>, vector<16x32xf32>, vector<16x32xf32> -> vector<16x32xf32>
    %210 = vector.extract_strided_slice %6 {offsets = [0, 896], sizes = [16, 32], strides = [1, 1]} : vector<16x1024xf32> to vector<16x32xf32>
    %211 = arith.mulf %210, %209 : vector<16x32xf32>
    %c0_100 = arith.constant 0 : index
    %c0_101 = arith.constant 0 : index
    %c896 = arith.constant 896 : index
    %212 = vector.load %arg8[%c0_100, %c0_101, %c896] : memref<1x16x1024xf32, #tpu.memory_space<vmem>>, vector<1x16x32xf32>
    %213 = vector.shape_cast %212 : vector<1x16x32xf32> to vector<16x32xf32>
    %214 = vector.shape_cast %211 : vector<16x32xf32> to vector<1x16x32xf32>
    tpu.vector_store %arg8[%c0_100, %c0_101, %c896], %214 {strides = array<i32>} : memref<1x16x1024xf32, #tpu.memory_space<vmem>>, vector<1x16x32xf32>,
    %215 = vector.extract_strided_slice %10 {offsets = [0, 464], sizes = [16, 16], strides = [1, 1]} : vector<16x512xf32> to vector<16x16xf32>
    %cst_102 = arith.constant dense<0.000000e+00> : vector<16x32xf32>
    %216 = tpu.matmul %215, %11, %cst_102 {dimension_numbers = #tpu.dot_dimension_numbers<[1], [0], [0], [1], [0, 0, 1, 1], [], []>} : vector<16x16xf32>, vector<16x32xf32>, vector<16x32xf32> -> vector<16x32xf32>
    %217 = vector.extract_strided_slice %6 {offsets = [0, 928], sizes = [16, 32], strides = [1, 1]} : vector<16x1024xf32> to vector<16x32xf32>
    %218 = arith.mulf %217, %216 : vector<16x32xf32>
    %c0_103 = arith.constant 0 : index
    %c0_104 = arith.constant 0 : index
    %c928 = arith.constant 928 : index
    %219 = vector.load %arg8[%c0_103, %c0_104, %c928] : memref<1x16x1024xf32, #tpu.memory_space<vmem>>, vector<1x16x32xf32>
    %220 = vector.shape_cast %219 : vector<1x16x32xf32> to vector<16x32xf32>
    %221 = vector.shape_cast %218 : vector<16x32xf32> to vector<1x16x32xf32>
    tpu.vector_store %arg8[%c0_103, %c0_104, %c928], %221 {strides = array<i32>} : memref<1x16x1024xf32, #tpu.memory_space<vmem>>, vector<1x16x32xf32>,
    %222 = vector.extract_strided_slice %10 {offsets = [0, 480], sizes = [16, 16], strides = [1, 1]} : vector<16x512xf32> to vector<16x16xf32>
    %cst_105 = arith.constant dense<0.000000e+00> : vector<16x32xf32>
    %223 = tpu.matmul %222, %11, %cst_105 {dimension_numbers = #tpu.dot_dimension_numbers<[1], [0], [0], [1], [0, 0, 1, 1], [], []>} : vector<16x16xf32>, vector<16x32xf32>, vector<16x32xf32> -> vector<16x32xf32>
    %224 = vector.extract_strided_slice %6 {offsets = [0, 960], sizes = [16, 32], strides = [1, 1]} : vector<16x1024xf32> to vector<16x32xf32>
    %225 = arith.mulf %224, %223 : vector<16x32xf32>
    %c0_106 = arith.constant 0 : index
    %c0_107 = arith.constant 0 : index
    %c960 = arith.constant 960 : index
    %226 = vector.load %arg8[%c0_106, %c0_107, %c960] : memref<1x16x1024xf32, #tpu.memory_space<vmem>>, vector<1x16x32xf32>
    %227 = vector.shape_cast %226 : vector<1x16x32xf32> to vector<16x32xf32>
    %228 = vector.shape_cast %225 : vector<16x32xf32> to vector<1x16x32xf32>
    tpu.vector_store %arg8[%c0_106, %c0_107, %c960], %228 {strides = array<i32>} : memref<1x16x1024xf32, #tpu.memory_space<vmem>>, vector<1x16x32xf32>,
    %229 = vector.extract_strided_slice %10 {offsets = [0, 496], sizes = [16, 16], strides = [1, 1]} : vector<16x512xf32> to vector<16x16xf32>
    %cst_108 = arith.constant dense<0.000000e+00> : vector<16x32xf32>
    %230 = tpu.matmul %229, %11, %cst_108 {dimension_numbers = #tpu.dot_dimension_numbers<[1], [0], [0], [1], [0, 0, 1, 1], [], []>} : vector<16x16xf32>, vector<16x32xf32>, vector<16x32xf32> -> vector<16x32xf32>
    %231 = vector.extract_strided_slice %6 {offsets = [0, 992], sizes = [16, 32], strides = [1, 1]} : vector<16x1024xf32> to vector<16x32xf32>
    %232 = arith.mulf %231, %230 : vector<16x32xf32>
    %c0_109 = arith.constant 0 : index
    %c0_110 = arith.constant 0 : index
    %c992 = arith.constant 992 : index
    %233 = vector.load %arg8[%c0_109, %c0_110, %c992] : memref<1x16x1024xf32, #tpu.memory_space<vmem>>, vector<1x16x32xf32>
    %234 = vector.shape_cast %233 : vector<1x16x32xf32> to vector<16x32xf32>
    %235 = vector.shape_cast %232 : vector<16x32xf32> to vector<1x16x32xf32>
    tpu.vector_store %arg8[%c0_109, %c0_110, %c992], %235 {strides = array<i32>} : memref<1x16x1024xf32, #tpu.memory_space<vmem>>, vector<1x16x32xf32>,
    return
  }
  func.func @transform_0(%arg0: i32, %arg1: i32) -> (i32, i32, i32) {
    %c0_i32 = arith.constant 0 : i32
    %c0_i32_0 = arith.constant 0 : i32
    return %arg1, %c0_i32, %arg0 : i32, i32, i32
  }
  func.func @transform_1(%arg0: i32, %arg1: i32) -> (i32, i32, i32) {
    %c0_i32 = arith.constant 0 : i32
    %c0_i32_0 = arith.constant 0 : i32
    %c0_i32_1 = arith.constant 0 : i32
    return %arg1, %c0_i32, %c0_i32_0 : i32, i32, i32
  }
  func.func @transform_2(%arg0: i32, %arg1: i32) -> (i32, i32) {
    %c0_i32 = arith.constant 0 : i32
    %c0_i32_0 = arith.constant 0 : i32
    %c0_i32_1 = arith.constant 0 : i32
    return %c0_i32, %c0_i32_0 : i32, i32
  }
  func.func @transform_3(%arg0: i32, %arg1: i32) -> (i32, i32) {
    %c0_i32 = arith.constant 0 : i32
    %c0_i32_0 = arith.constant 0 : i32
    %c0_i32_1 = arith.constant 0 : i32
    return %c0_i32, %c0_i32_0 : i32, i32
  }
  func.func @transform_4(%arg0: i32, %arg1: i32) -> (i32, i32) {
    %c0_i32 = arith.constant 0 : i32
    %c0_i32_0 = arith.constant 0 : i32
    return %c0_i32, %arg0 : i32, i32
  }
  func.func @transform_5(%arg0: i32, %arg1: i32) -> (i32, i32) {
    %c0_i32 = arith.constant 0 : i32
    %c0_i32_0 = arith.constant 0 : i32
    %c0_i32_1 = arith.constant 0 : i32
    return %c0_i32, %c0_i32_0 : i32, i32
  }
  func.func @transform_6(%arg0: i32, %arg1: i32) -> (i32, i32, i32) {
    %c0_i32 = arith.constant 0 : i32
    %c0_i32_0 = arith.constant 0 : i32
    return %arg1, %c0_i32, %arg0 : i32, i32, i32
  }
}

</mosaic_0001>

<llo_original>
// kernel: tpu_custom_call.1
$region0: #{tpu_custom_call.1}
  #allocation0 [shape = 'u32[]', space=smem, size = 0x4, offset = 0x4, fixed_abs, tag = 'smem constant byte address 0x4 - core index']
  #allocation1 [shape = 'u32[144,128]{1,0:T(1,128)}', space=vmem, size = 0x12000, scoped, tag = 'internal scratch']
  %s0 = inlined_call_operand.hbm [shape: f32[2,8,1024], index: 0, kind: input, shape index: {}]
  %s1 = inlined_call_operand.hbm [shape: f32[2,16,256], index: 1, kind: input, shape index: {}]
  %s2 = inlined_call_operand.vmem [shape: f32[16,8], index: 2, kind: input, shape index: {}]
  %s3 = inlined_call_operand.vmem [shape: f32[16,1], index: 3, kind: input, shape index: {}]
  %s4 = inlined_call_operand.hbm [shape: f32[256,512], index: 4, kind: input, shape index: {}]
  %s5 = inlined_call_operand.vmem [shape: f32[16,32], index: 5, kind: input, shape index: {}]
  %s6 = inlined_call_operand.hbm [shape: f32[2,16,1024], index: 6, kind: output, shape index: {}]
  %s7 = sld [smem:[#allocation0]]
  $region69: #{tpu_custom_call.1} parent=0
    _
  %s9 = ssub.s32 1, %s7
  %s10 = scalar_select 0, %s9, %s7
  $region1: #{tpu_custom_call.1} parent=0
    #allocation2 [shape = 'u8[65536]{0}', space=vmem, size = 0x10000, scoped, tag = 'input window, operand 0']
    #allocation3 [shape = 's32[2]{0}', space=sflag, size = 0x8, scoped, tag = 'scoped memory for tpu_custom_call.1']
    #allocation4 [shape = 's32[2]{0}', space=sflag, size = 0x8, scoped, tag = 'scoped memory for tpu_custom_call.1']
    #allocation5 [shape = 'u8[32768]{0}', space=vmem, size = 0x8000, scoped, tag = 'input window, operand 1']
    #allocation6 [shape = 's32[2]{0}', space=sflag, size = 0x8, scoped, tag = 'scoped memory for tpu_custom_call.1']
    #allocation7 [shape = 'u8[524288]{0}', space=vmem, size = 0x80000, scoped, tag = 'input window, operand 4, single buffered']
    #allocation8 [shape = 'u8[131072]{0}', space=vmem, size = 0x20000, scoped, tag = 'output window, operand 0']
    %11 = vsyncpa [#allocation3], 0
    %s12 = scalar_lea.sflag [#allocation3], 1
    %13 = vsyncpa %s12, 0
    %14 = vsyncpa [#allocation6], 0
    %s15 = scalar_lea.sflag [#allocation6], 1
    %16 = vsyncpa %s15, 0
    %17 = vsyncpa [#allocation4], 0
    %s18 = scalar_lea.sflag [#allocation4], 1
    %19 = vsyncpa %s18, 0
    loop: start=0, step=1, limit=4
    $region2: #{tpu_custom_call.1} parent=1 // loop_pre_header
      _
    $region3: #{tpu_custom_call.1} parent=1 // loop_header
      %s21 = sphi 0, %s25
      %p22 = scmp.ge.s32.totalorder %s21, 4
      %s28 = sphi 0, %s40
      %s29 = sphi 0, %s36
      %s30 = sphi 0, %s28
      %s31 = sphi 0, %s29
      %s32 = sphi 0, %s30
      %s33 = sphi 0, %s31
      %s45 = sphi 0, %s47
      %s48 = sphi 0, %s45
      %s49 = sphi 0, %s48
      %s65 = sphi 0, %s49
      %s71 = sphi 0, %s73
      %s74 = sphi 0, %s71
      %s75 = sphi 0, %s74
      %s91 = sphi 0, %s75
      %s95 = sphi 0, %s95
      %s97 = sphi 0, %s95
      %s98 = sphi 0, %s97
      %s112 = sphi 0, %s98
      %s116 = sphi 0, %s116
      %s118 = sphi 0, %s116
      %s119 = sphi 0, %s118
      %s133 = sphi 0, %s119
      %s139 = sphi 0, %s141
      %s142 = sphi 0, %s139
      %s143 = sphi 0, %s142
      %s159 = sphi 0, %s143
      %s163 = sphi 0, %s163
      %s165 = sphi 0, %s163
      %s166 = sphi 0, %s165
      %s180 = sphi 0, %s166
      %s188 = sphi 0, %s190
      %s191 = sphi 0, %s188
      %s192 = sphi 0, %s191
      %s208 = sphi 0, %s192
    $region4: #{tpu_custom_call.1} parent=1 // loop_header_branch
      %24 = sbr.rel (%p22) target = $region8
    $region5: #{tpu_custom_call.1} parent=1 // loop_body
      %s26 = ssub.s32 %s21, 1
      %s27 = ssub.s32 %s21, 2
      %s34 = sadd.s32 1, %s29
      %p35 = scmp.ge.s32.totalorder %s34, 2
      %s36 = scalar_select %p35, 0, %s34
      %s37 = sadd.s32 1, %s28
      %s38 = scalar_select %p35, %s37, %s28
      %p39 = scmp.ge.s32.totalorder %s38, 1
      %s40 = scalar_select %p39, 0, %s38
      %s41 = ssub.s32 %s29, %s36
      %s42 = ssub.s32 %s28, %s40
      %s43 = sor.u32 %s41, %s42
      %p44 = scmp.eq.s32.totalorder %s43, 0
      %s46 = sadd.s32 %s45, 1
      %s47 = scalar_select %p44, %s45, %s46
      %p50 = pneg %p44
      %p51 = scmp.eq.s32.totalorder %s21, 1
      %p52 = por %p50, %p51
      %p53 = scmp.ne.s32.totalorder %s45, %s48
      %p54 = scmp.eq.s32.totalorder %s21, 0
      %p55 = por %p53, %p54
      %p56 = scmp.ne.s32.totalorder %s45, %s48
      %p57 = scmp.eq.s32.totalorder %s26, 1
      %p58 = por %p56, %p57
      %p59 = scmp.ne.s32.totalorder %s48, %s49
      %p60 = scmp.eq.s32.totalorder %s26, 0
      %p61 = por %p59, %p60
      %p62 = scmp.ne.s32.totalorder %s48, %s49
      %p63 = scmp.eq.s32.totalorder %s27, 1
      %p64 = por %p62, %p63
      %p66 = scmp.ne.s32.totalorder %s49, %s65
      %p67 = scmp.eq.s32.totalorder %s27, 0
      %p68 = por %p66, %p67
      %s69 = ssub.s32 %s29, %s36
      %p70 = scmp.eq.s32.totalorder %s69, 0
      %s72 = sadd.s32 %s71, 1
      %s73 = scalar_select %p70, %s71, %s72
      %p76 = pneg %p70
      %p77 = scmp.eq.s32.totalorder %s21, 1
      %p78 = por %p76, %p77
      %p79 = scmp.ne.s32.totalorder %s71, %s74
      %p80 = scmp.eq.s32.totalorder %s21, 0
      %p81 = por %p79, %p80
      %p82 = scmp.ne.s32.totalorder %s71, %s74
      %p83 = scmp.eq.s32.totalorder %s26, 1
      %p84 = por %p82, %p83
      %p85 = scmp.ne.s32.totalorder %s74, %s75
      %p86 = scmp.eq.s32.totalorder %s26, 0
      %p87 = por %p85, %p86
      %p88 = scmp.ne.s32.totalorder %s74, %s75
      %p89 = scmp.eq.s32.totalorder %s27, 1
      %p90 = por %p88, %p89
      %p92 = scmp.ne.s32.totalorder %s75, %s91
      %p93 = scmp.eq.s32.totalorder %s27, 0
      %p94 = por %p92, %p93
      %s96 = sadd.s32 %s95, 1
      %p99 = scmp.eq.s32.totalorder %s21, 1
      %p100 = scmp.ne.s32.totalorder %s95, %s97
      %p101 = scmp.eq.s32.totalorder %s21, 0
      %p102 = por %p100, %p101
      %p103 = scmp.ne.s32.totalorder %s95, %s97
      %p104 = scmp.eq.s32.totalorder %s26, 1
      %p105 = por %p103, %p104
      %p106 = scmp.ne.s32.totalorder %s97, %s98
      %p107 = scmp.eq.s32.totalorder %s26, 0
      %p108 = por %p106, %p107
      %p109 = scmp.ne.s32.totalorder %s97, %s98
      %p110 = scmp.eq.s32.totalorder %s27, 1
      %p111 = por %p109, %p110
      %p113 = scmp.ne.s32.totalorder %s98, %s112
      %p114 = scmp.eq.s32.totalorder %s27, 0
      %p115 = por %p113, %p114
      %s117 = sadd.s32 %s116, 1
      %p120 = scmp.eq.s32.totalorder %s21, 1
      %p121 = scmp.ne.s32.totalorder %s116, %s118
      %p122 = scmp.eq.s32.totalorder %s21, 0
      %p123 = por %p121, %p122
      %p124 = scmp.ne.s32.totalorder %s116, %s118
      %p125 = scmp.eq.s32.totalorder %s26, 1
      %p126 = por %p124, %p125
      %p127 = scmp.ne.s32.totalorder %s118, %s119
      %p128 = scmp.eq.s32.totalorder %s26, 0
      %p129 = por %p127, %p128
      %p130 = scmp.ne.s32.totalorder %s118, %s119
      %p131 = scmp.eq.s32.totalorder %s27, 1
      %p132 = por %p130, %p131
      %p134 = scmp.ne.s32.totalorder %s119, %s133
      %p135 = scmp.eq.s32.totalorder %s27, 0
      %p136 = por %p134, %p135
      %s137 = ssub.s32 %s28, %s40
      %p138 = scmp.eq.s32.totalorder %s137, 0
      %s140 = sadd.s32 %s139, 1
      %s141 = scalar_select %p138, %s139, %s140
      %p144 = pneg %p138
      %p145 = scmp.eq.s32.totalorder %s21, 1
      %p146 = por %p144, %p145
      %p147 = scmp.ne.s32.totalorder %s139, %s142
      %p148 = scmp.eq.s32.totalorder %s21, 0
      %p149 = por %p147, %p148
      %p150 = scmp.ne.s32.totalorder %s139, %s142
      %p151 = scmp.eq.s32.totalorder %s26, 1
      %p152 = por %p150, %p151
      %p153 = scmp.ne.s32.totalorder %s142, %s143
      %p154 = scmp.eq.s32.totalorder %s26, 0
      %p155 = por %p153, %p154
      %p156 = scmp.ne.s32.totalorder %s142, %s143
      %p157 = scmp.eq.s32.totalorder %s27, 1
      %p158 = por %p156, %p157
      %p160 = scmp.ne.s32.totalorder %s143, %s159
      %p161 = scmp.eq.s32.totalorder %s27, 0
      %p162 = por %p160, %p161
      %s164 = sadd.s32 %s163, 1
      %p167 = scmp.eq.s32.totalorder %s21, 1
      %p168 = scmp.ne.s32.totalorder %s163, %s165
      %p169 = scmp.eq.s32.totalorder %s21, 0
      %p170 = por %p168, %p169
      %p171 = scmp.ne.s32.totalorder %s163, %s165
      %p172 = scmp.eq.s32.totalorder %s26, 1
      %p173 = por %p171, %p172
      %p174 = scmp.ne.s32.totalorder %s165, %s166
      %p175 = scmp.eq.s32.totalorder %s26, 0
      %p176 = por %p174, %p175
      %p177 = scmp.ne.s32.totalorder %s165, %s166
      %p178 = scmp.eq.s32.totalorder %s27, 1
      %p179 = por %p177, %p178
      %p181 = scmp.ne.s32.totalorder %s166, %s180
      %p182 = scmp.eq.s32.totalorder %s27, 0
      %p183 = por %p181, %p182
      %s184 = ssub.s32 %s29, %s36
      %s185 = ssub.s32 %s28, %s40
      %s186 = sor.u32 %s184, %s185
      %p187 = scmp.eq.s32.totalorder %s186, 0
      %s189 = sadd.s32 %s188, 1
      %s190 = scalar_select %p187, %s188, %s189
      %p193 = pneg %p187
      %p194 = scmp.eq.s32.totalorder %s21, 1
      %p195 = por %p193, %p194
      %p196 = scmp.ne.s32.totalorder %s188, %s191
      %p197 = scmp.eq.s32.totalorder %s21, 0
      %p198 = por %p196, %p197
      %p199 = scmp.ne.s32.totalorder %s188, %s191
      %p200 = scmp.eq.s32.totalorder %s26, 1
      %p201 = por %p199, %p200
      %p202 = scmp.ne.s32.totalorder %s191, %s192
      %p203 = scmp.eq.s32.totalorder %s26, 0
      %p204 = por %p202, %p203
      %p205 = scmp.ne.s32.totalorder %s191, %s192
      %p206 = scmp.eq.s32.totalorder %s27, 1
      %p207 = por %p205, %p206
      %p209 = scmp.ne.s32.totalorder %s192, %s208
      %p210 = scmp.eq.s32.totalorder %s27, 0
      %p211 = por %p209, %p210
      %p212 = scmp.le.s32.totalorder 1, %s21
      %p213 = scmp.lt.s32.totalorder %s21, 3
      %p214 = pnand %p212, %p213
      %p215 = pneg %p214
      // Predicated region
      $region9: #{tpu_custom_call.1} parent=5 // pred_check
        _
      $region10: #{tpu_custom_call.1} parent=5 // pred_check_branch
        %217 = sbr.rel (%p214) target = $region12
      $region11: #{tpu_custom_call.1} parent=5 // pred_region
        %s218 = ssub.s32 %s21, 1
        // Predicated region
        $region13: #{tpu_custom_call.1} parent=11 // pred_check
          %p219 = pneg %p108
        $region14: #{tpu_custom_call.1} parent=11 // pred_check_branch
          %221 = sbr.rel (%p219) target = $region16
        $region15: #{tpu_custom_call.1} parent=11 // pred_region
          _
        $region16: #{tpu_custom_call.1} parent=11 // pred_fallthru
          _
        // Predicated region
        $region17: #{tpu_custom_call.1} parent=11 // pred_check
          %p222 = pneg %p129
        $region18: #{tpu_custom_call.1} parent=11 // pred_check_branch
          %224 = sbr.rel (%p222) target = $region20
        $region19: #{tpu_custom_call.1} parent=11 // pred_region
          _
        $region20: #{tpu_custom_call.1} parent=11 // pred_fallthru
          _
        // Predicated region
        $region21: #{tpu_custom_call.1} parent=11 // pred_check
          %p225 = pneg %p155
        $region22: #{tpu_custom_call.1} parent=11 // pred_check_branch
          %227 = sbr.rel (%p225) target = $region24
        $region23: #{tpu_custom_call.1} parent=11 // pred_region
          %s228 = smul.u32 4, %s30
          %s230 = ssub.s32 16384, 16384
          %231 = vsyncadd [#allocation6], %s230
          %s232 = smul.addr %s228, 128
          %s233 = scalar_lea.hbm %s4, %s232
          %s234 = sshll.u32 [#allocation7], 4
          %s235 = int_to_ptr.vmem [resolvable:$true] %s234
          %240 = dma.hbm_to_vmem [thread:$0]  %s233, 16384, %s235, [#allocation6], 512, 512, 32
        $region24: #{tpu_custom_call.1} parent=11 // pred_fallthru
          _
        // Predicated region
        $region25: #{tpu_custom_call.1} parent=11 // pred_check
          %p241 = pneg %p176
        $region26: #{tpu_custom_call.1} parent=11 // pred_check_branch
          %243 = sbr.rel (%p241) target = $region28
        $region27: #{tpu_custom_call.1} parent=11 // pred_region
          _
        $region28: #{tpu_custom_call.1} parent=11 // pred_fallthru
          _
      $region12: #{tpu_custom_call.1} parent=5 // pred_fallthru
        _
      %p244 = scmp.lt.s32.totalorder %s21, 2
      // Predicated region
      $region29: #{tpu_custom_call.1} parent=5 // pred_check
        %p245 = pneg %p244
      $region30: #{tpu_custom_call.1} parent=5 // pred_check_branch
        %247 = sbr.rel (%p245) target = $region32
      $region31: #{tpu_custom_call.1} parent=5 // pred_region
        // Predicated region
        $region33: #{tpu_custom_call.1} parent=31 // pred_check
          %p248 = pneg %p55
        $region34: #{tpu_custom_call.1} parent=31 // pred_check_branch
          %250 = sbr.rel (%p248) target = $region36
        $region35: #{tpu_custom_call.1} parent=31 // pred_region
          %s251 = sand.u32 %s45, 1
          %s252 = scalar_lea.sflag [#allocation3], %s251
          %s253 = sand.u32 %s45, 1
          %s254 = smul.addr %s253, 64
          %s255 = scalar_lea.vmem [#allocation2], %s254
          %s256 = smul.u32 8, %s28
          %s258 = ssub.s32 1024, 1024
          %259 = vsyncadd %s252, %s258
          %s260 = smul.addr %s29, 8
          %s261 = sadd.s32 %s256, %s260
          %s262 = smul.addr %s261, 128
          %s263 = scalar_lea.hbm %s0, %s262
          %s265 = sshll.u32 %s255, 4
          %s266 = int_to_ptr.vmem [resolvable:$true] %s265
          %268 = dma.hbm_to_vmem [thread:$0]  %s263, 1024, %s266, %s252
        $region36: #{tpu_custom_call.1} parent=31 // pred_fallthru
          _
        // Predicated region
        $region37: #{tpu_custom_call.1} parent=31 // pred_check
          %p269 = pneg %p81
        $region38: #{tpu_custom_call.1} parent=31 // pred_check_branch
          %271 = sbr.rel (%p269) target = $region40
        $region39: #{tpu_custom_call.1} parent=31 // pred_region
          %s272 = sand.u32 %s21, 1
          %s273 = scalar_lea.sflag [#allocation6], %s272
          %s274 = sand.u32 %s71, 1
          %s275 = smul.addr %s274, 32
          %s276 = scalar_lea.vmem [#allocation5], %s275
          %s278 = ssub.s32 512, 512
          %279 = vsyncadd %s273, %s278
          %s280 = smul.addr %s29, 4
          %s281 = smul.addr %s280, 128
          %s282 = scalar_lea.hbm %s1, %s281
          %s283 = sshll.u32 %s276, 4
          %s284 = int_to_ptr.vmem [resolvable:$true] %s283
          %289 = dma.hbm_to_vmem [thread:$0]  %s282, 512, %s284, %s273, 256, 256, 16
        $region40: #{tpu_custom_call.1} parent=31 // pred_fallthru
          _
      $region32: #{tpu_custom_call.1} parent=5 // pred_fallthru
        _
      %p290 = scmp.le.s32.totalorder 1, %s21
      %p291 = scmp.lt.s32.totalorder %s21, 3
      %p292 = pnand %p290, %p291
      %p293 = pneg %p292
      // Predicated region
      $region41: #{tpu_custom_call.1} parent=5 // pred_check
        _
      $region42: #{tpu_custom_call.1} parent=5 // pred_check_branch
        %295 = sbr.rel (%p292) target = $region44
      $region43: #{tpu_custom_call.1} parent=5 // pred_region
        %s296 = ssub.s32 %s21, 1
        %s297 = sand.u32 %s48, 1
        %s298 = scalar_lea.sflag [#allocation3], %s297
        %s299 = sand.u32 %s48, 1
        %s300 = smul.addr %s299, 64
        %s301 = scalar_lea.vmem [#allocation2], %s300
        // Predicated region
        $region45: #{tpu_custom_call.1} parent=43 // pred_check
          %p302 = pneg %p61
        $region46: #{tpu_custom_call.1} parent=43 // pred_check_branch
          %304 = sbr.rel (%p302) target = $region48
        $region47: #{tpu_custom_call.1} parent=43 // pred_region
          %305 = dma.done %s298, 1024
        $region48: #{tpu_custom_call.1} parent=43 // pred_fallthru
          _
        %s306 = sand.u32 %s26, 1
        %s307 = scalar_lea.sflag [#allocation6], %s306
        %s308 = sand.u32 %s74, 1
        %s309 = smul.addr %s308, 32
        %s310 = scalar_lea.vmem [#allocation5], %s309
        // Predicated region
        $region49: #{tpu_custom_call.1} parent=43 // pred_check
          %p311 = pneg %p87
        $region50: #{tpu_custom_call.1} parent=43 // pred_check_branch
          %313 = sbr.rel (%p311) target = $region52
        $region51: #{tpu_custom_call.1} parent=43 // pred_region
          %314 = dma.done %s307, 512
        $region52: #{tpu_custom_call.1} parent=43 // pred_fallthru
          _
        // Predicated region
        $region53: #{tpu_custom_call.1} parent=43 // pred_check
          %p315 = pneg %p155
        $region54: #{tpu_custom_call.1} parent=43 // pred_check_branch
          %317 = sbr.rel (%p315) target = $region56
        $region55: #{tpu_custom_call.1} parent=43 // pred_region
          %318 = dma.done [#allocation6], 16384
        $region56: #{tpu_custom_call.1} parent=43 // pred_fallthru
          _
        %s319 = sand.u32 %s48, 1
        %s320 = scalar_lea.sflag [#allocation3], %s319
        %s321 = sand.u32 %s48, 1
        %s322 = smul.addr %s321, 64
        %s323 = scalar_lea.vmem [#allocation2], %s322
        %p324 = pneg %p61
        %p325 = pneg %p58
        %s326 = sand.u32 %s26, 1
        %s327 = scalar_lea.sflag [#allocation6], %s326
        %s328 = sand.u32 %s74, 1
        %s329 = smul.addr %s328, 32
        %s330 = scalar_lea.vmem [#allocation5], %s329
        %p331 = pneg %p87
        %p332 = pneg %p84
        %p333 = pneg %p108
        %p334 = pneg %p105
        %p335 = pneg %p129
        %p336 = pneg %p126
        %p337 = pneg %p155
        %p338 = pneg %p152
        %p339 = pneg %p176
        %p340 = pneg %p173
        %p341 = pneg %p204
        %p342 = pneg %p201
        %s343 = sand.u32 %s191, 1
        %s344 = scalar_lea.sflag [#allocation4], %s343
        %s345 = sand.u32 %s191, 1
        %s346 = smul.addr %s345, 128
        %s347 = scalar_lea.vmem [#allocation8], %s346
        %s348 = smul.u32 8, %s30
        %s349 = smul.u32 4, %s30
        %s350 = smul.u32 8, %s30
        %v351 = vld [vmem:[%s2] sm:$0xff]
        %v352 = vld [vmem:[%s2 + $0x8] sm:$0xff]
        %v353 = vld [vmem:[%s301] sm:$0xff]
        %v354 = vld [vmem:[%s301 + $0x8] sm:$0xff]
        %v355 = vld [vmem:[%s301 + $0x10] sm:$0xff]
        %v356 = vld [vmem:[%s301 + $0x18] sm:$0xff]
        %v357 = vld [vmem:[%s301 + $0x20] sm:$0xff]
        %v358 = vld [vmem:[%s301 + $0x28] sm:$0xff]
        %v359 = vld [vmem:[%s301 + $0x30] sm:$0xff]
        %v360 = vld [vmem:[%s301 + $0x38] sm:$0xff]
        %v361 = vld [vmem:[%s3] sm:$0xff]
        %v362 = vld [vmem:[%s3 + $0x8] sm:$0xff]
        %364 = vset.pattern.permute.xlu0 0
        %365 = vperm.xlu0 %364, %v361
        %v366 = vpop.permute.xlu0 %365
        %369 = vset.pattern.permute.xlu0 0
        %370 = vperm.xlu0 %369, %v362
        %v371 = vpop.permute.xlu0 %370
        %vm373 = vcmask 64512
        %v375 = vsel %vm373, %v351, 0
        %v378 = vsel %vm373, %v352, 0
        %380 = vmatprep.subr.mxu0 %v354
        %381 = vmatpush1.msra.mxu0 %v353
        %382 = vmatprep.subr.mxu0 0.0
        %383 = vmatpush1.msra.mxu0 0.0
        %384 = vmatprep.subr.mxu0 0.0
        %385 = vmatpush1.msra.mxu0 0.0
        %386 = vmatprep.subr.mxu0 0.0
        %387 = vmatpush1.msra.mxu0 0.0
        %388 = vmatprep.subr.mxu0 0.0
        %389 = vmatpush1.msra.mxu0 0.0
        %390 = vmatprep.subr.mxu0 0.0
        %391 = vmatpush1.msra.mxu0 0.0
        %392 = vmatprep.subr.mxu0 0.0
        %393 = vmatpush1.msra.mxu0 0.0
        %394 = vmatprep.subr.mxu0 0.0
        %395 = vmatpush1.msra.mxu0 0.0
        %396 = vmatprep.subr.mxu0 0.0
        %397 = vmatpush1.msra.mxu0 0.0
        %398 = vmatprep.subr.mxu0 0.0
        %399 = vmatpush1.msra.mxu0 0.0
        %400 = vmatprep.subr.mxu0 0.0
        %401 = vmatpush1.msra.mxu0 0.0
        %402 = vmatprep.subr.mxu0 0.0
        %403 = vmatpush1.msra.mxu0 0.0
        %404 = vmatprep.subr.mxu0 0.0
        %405 = vmatpush1.msra.mxu0 0.0
        %406 = vmatprep.subr.mxu0 0.0
        %407 = vmatpush1.msra.mxu0 0.0
        %408 = vmatprep.subr.mxu0 0.0
        %409 = vmatpush1.msra.mxu0 0.0
        %410 = vmatprep.subr.mxu0 0.0
        %411 = vmatpush1.msra.mxu0 0.0
        %412 = vmatprep.subr.mxu0 0.0
        %413 = vmatpush1.msra.mxu0 0.0
        %414 = vmatprep.subr.mxu0 0.0
        %415 = vmatpush1.msra.mxu0 0.0
        %416 = vmatprep.subr.mxu0 0.0
        %417 = vmatpush1.msra.mxu0 0.0
        %418 = vmatprep.subr.mxu0 0.0
        %419 = vmatpush1.msra.mxu0 0.0
        %420 = vmatprep.subr.mxu0 0.0
        %421 = vmatpush1.msra.mxu0 0.0
        %422 = vmatprep.subr.mxu0 0.0
        %423 = vmatpush1.msra.mxu0 0.0
        %424 = vmatprep.subr.mxu0 0.0
        %425 = vmatpush1.msra.mxu0 0.0
        %426 = vmatprep.subr.mxu0 0.0
        %427 = vmatpush1.msra.mxu0 0.0
        %428 = vmatprep.subr.mxu0 0.0
        %429 = vmatpush1.msra.mxu0 0.0
        %430 = vmatprep.subr.mxu0 0.0
        %431 = vmatpush1.msra.mxu0 0.0
        %432 = vmatprep.subr.mxu0 0.0
        %433 = vmatpush1.msra.mxu0 0.0
        %434 = vmatprep.subr.mxu0 0.0
        %435 = vmatpush1.msra.mxu0 0.0
        %436 = vmatprep.subr.mxu0 0.0
        %437 = vmatpush1.msra.mxu0 0.0
        %438 = vmatprep.subr.mxu0 0.0
        %439 = vmatpush1.msra.mxu0 0.0
        %440 = vmatprep.subr.mxu0 0.0
        %441 = vmatpush1.msra.mxu0 0.0
        %442 = vmatprep.subr.mxu0 0.0
        %443 = vmatpush1.msra.mxu0 0.0
        %444 = vmatprep.mubr.f32.mxu0 0.0
        %445 = vmatmul.mubr.f32.gmra.mrb[0].mxu0 %v375
        %v446 = vpop.f32.mrb[0].mxu0
        %v447 = vadd.f32 %v366, %v446
        %v448 = vpop.f32.mrb[0].mxu0
        %v449 = vadd.f32 %v366, %v448
        %450 = vmatprep.mubr.f32.mxu0 0.0
        %451 = vmatmul.mubr.f32.gmra.mrb[0].mxu0 %v378
        %v452 = vpop.f32.mrb[0].mxu0
        %v453 = vadd.f32 %v371, %v452
        %v454 = vpop.f32.mrb[0].mxu0
        %v455 = vadd.f32 %v371, %v454
        %456 = vdwg.mxu0
        %457 = vmatprep.subr.mxu0 %v356
        %458 = vmatpush1.msra.mxu0 %v355
        %459 = vmatprep.subr.mxu0 0.0
        %460 = vmatpush1.msra.mxu0 0.0
        %461 = vmatprep.subr.mxu0 0.0
        %462 = vmatpush1.msra.mxu0 0.0
        %463 = vmatprep.subr.mxu0 0.0
        %464 = vmatpush1.msra.mxu0 0.0
        %465 = vmatprep.subr.mxu0 0.0
        %466 = vmatpush1.msra.mxu0 0.0
        %467 = vmatprep.subr.mxu0 0.0
        %468 = vmatpush1.msra.mxu0 0.0
        %469 = vmatprep.subr.mxu0 0.0
        %470 = vmatpush1.msra.mxu0 0.0
        %471 = vmatprep.subr.mxu0 0.0
        %472 = vmatpush1.msra.mxu0 0.0
        %473 = vmatprep.subr.mxu0 0.0
        %474 = vmatpush1.msra.mxu0 0.0
        %475 = vmatprep.subr.mxu0 0.0
        %476 = vmatpush1.msra.mxu0 0.0
        %477 = vmatprep.subr.mxu0 0.0
        %478 = vmatpush1.msra.mxu0 0.0
        %479 = vmatprep.subr.mxu0 0.0
        %480 = vmatpush1.msra.mxu0 0.0
        %481 = vmatprep.subr.mxu0 0.0
        %482 = vmatpush1.msra.mxu0 0.0
        %483 = vmatprep.subr.mxu0 0.0
        %484 = vmatpush1.msra.mxu0 0.0
        %485 = vmatprep.subr.mxu0 0.0
        %486 = vmatpush1.msra.mxu0 0.0
        %487 = vmatprep.subr.mxu0 0.0
        %488 = vmatpush1.msra.mxu0 0.0
        %489 = vmatprep.subr.mxu0 0.0
        %490 = vmatpush1.msra.mxu0 0.0
        %491 = vmatprep.subr.mxu0 0.0
        %492 = vmatpush1.msra.mxu0 0.0
        %493 = vmatprep.subr.mxu0 0.0
        %494 = vmatpush1.msra.mxu0 0.0
        %495 = vmatprep.subr.mxu0 0.0
        %496 = vmatpush1.msra.mxu0 0.0
        %497 = vmatprep.subr.mxu0 0.0
        %498 = vmatpush1.msra.mxu0 0.0
        %499 = vmatprep.subr.mxu0 0.0
        %500 = vmatpush1.msra.mxu0 0.0
        %501 = vmatprep.subr.mxu0 0.0
        %502 = vmatpush1.msra.mxu0 0.0
        %503 = vmatprep.subr.mxu0 0.0
        %504 = vmatpush1.msra.mxu0 0.0
        %505 = vmatprep.subr.mxu0 0.0
        %506 = vmatpush1.msra.mxu0 0.0
        %507 = vmatprep.subr.mxu0 0.0
        %508 = vmatpush1.msra.mxu0 0.0
        %509 = vmatprep.subr.mxu0 0.0
        %510 = vmatpush1.msra.mxu0 0.0
        %511 = vmatprep.subr.mxu0 0.0
        %512 = vmatpush1.msra.mxu0 0.0
        %513 = vmatprep.subr.mxu0 0.0
        %514 = vmatpush1.msra.mxu0 0.0
        %515 = vmatprep.subr.mxu0 0.0
        %516 = vmatpush1.msra.mxu0 0.0
        %517 = vmatprep.subr.mxu0 0.0
        %518 = vmatpush1.msra.mxu0 0.0
        %519 = vmatprep.subr.mxu0 0.0
        %520 = vmatpush1.msra.mxu0 0.0
        %521 = vmatprep.mubr.f32.mxu0 0.0
        %522 = vmatmul.mubr.f32.gmra.mrb[0].mxu0 %v375
        %v523 = vpop.f32.mrb[0].mxu0
        %v524 = vadd.f32 %v366, %v523
        %v525 = vpop.f32.mrb[0].mxu0
        %v526 = vadd.f32 %v366, %v525
        %527 = vmatprep.mubr.f32.mxu0 0.0
        %528 = vmatmul.mubr.f32.gmra.mrb[0].mxu0 %v378
        %v529 = vpop.f32.mrb[0].mxu0
        %v530 = vadd.f32 %v371, %v529
        %v531 = vpop.f32.mrb[0].mxu0
        %v532 = vadd.f32 %v371, %v531
        %533 = vdwg.mxu0
        %534 = vmatprep.subr.mxu0 %v358
        %535 = vmatpush1.msra.mxu0 %v357
        %536 = vmatprep.subr.mxu0 0.0
        %537 = vmatpush1.msra.mxu0 0.0
        %538 = vmatprep.subr.mxu0 0.0
        %539 = vmatpush1.msra.mxu0 0.0
        %540 = vmatprep.subr.mxu0 0.0
        %541 = vmatpush1.msra.mxu0 0.0
        %542 = vmatprep.subr.mxu0 0.0
        %543 = vmatpush1.msra.mxu0 0.0
        %544 = vmatprep.subr.mxu0 0.0
        %545 = vmatpush1.msra.mxu0 0.0
        %546 = vmatprep.subr.mxu0 0.0
        %547 = vmatpush1.msra.mxu0 0.0
        %548 = vmatprep.subr.mxu0 0.0
        %549 = vmatpush1.msra.mxu0 0.0
        %550 = vmatprep.subr.mxu0 0.0
        %551 = vmatpush1.msra.mxu0 0.0
        %552 = vmatprep.subr.mxu0 0.0
        %553 = vmatpush1.msra.mxu0 0.0
        %554 = vmatprep.subr.mxu0 0.0
        %555 = vmatpush1.msra.mxu0 0.0
        %556 = vmatprep.subr.mxu0 0.0
        %557 = vmatpush1.msra.mxu0 0.0
        %558 = vmatprep.subr.mxu0 0.0
        %559 = vmatpush1.msra.mxu0 0.0
        %560 = vmatprep.subr.mxu0 0.0
        %561 = vmatpush1.msra.mxu0 0.0
        %562 = vmatprep.subr.mxu0 0.0
        %563 = vmatpush1.msra.mxu0 0.0
        %564 = vmatprep.subr.mxu0 0.0
        %565 = vmatpush1.msra.mxu0 0.0
        %566 = vmatprep.subr.mxu0 0.0
        %567 = vmatpush1.msra.mxu0 0.0
        %568 = vmatprep.subr.mxu0 0.0
        %569 = vmatpush1.msra.mxu0 0.0
        %570 = vmatprep.subr.mxu0 0.0
        %571 = vmatpush1.msra.mxu0 0.0
        %572 = vmatprep.subr.mxu0 0.0
        %573 = vmatpush1.msra.mxu0 0.0
        %574 = vmatprep.subr.mxu0 0.0
        %575 = vmatpush1.msra.mxu0 0.0
        %576 = vmatprep.subr.mxu0 0.0
        %577 = vmatpush1.msra.mxu0 0.0
        %578 = vmatprep.subr.mxu0 0.0
        %579 = vmatpush1.msra.mxu0 0.0
        %580 = vmatprep.subr.mxu0 0.0
        %581 = vmatpush1.msra.mxu0 0.0
        %582 = vmatprep.subr.mxu0 0.0
        %583 = vmatpush1.msra.mxu0 0.0
        %584 = vmatprep.subr.mxu0 0.0
        %585 = vmatpush1.msra.mxu0 0.0
        %586 = vmatprep.subr.mxu0 0.0
        %587 = vmatpush1.msra.mxu0 0.0
        %588 = vmatprep.subr.mxu0 0.0
        %589 = vmatpush1.msra.mxu0 0.0
        %590 = vmatprep.subr.mxu0 0.0
        %591 = vmatpush1.msra.mxu0 0.0
        %592 = vmatprep.subr.mxu0 0.0
        %593 = vmatpush1.msra.mxu0 0.0
        %594 = vmatprep.subr.mxu0 0.0
        %595 = vmatpush1.msra.mxu0 0.0
        %596 = vmatprep.subr.mxu0 0.0
        %597 = vmatpush1.msra.mxu0 0.0
        %598 = vmatprep.mubr.f32.mxu0 0.0
        %599 = vmatmul.mubr.f32.gmra.mrb[0].mxu0 %v375
        %v600 = vpop.f32.mrb[0].mxu0
        %v601 = vadd.f32 %v366, %v600
        %v602 = vpop.f32.mrb[0].mxu0
        %v603 = vadd.f32 %v366, %v602
        %604 = vmatprep.mubr.f32.mxu0 0.0
        %605 = vmatmul.mubr.f32.gmra.mrb[0].mxu0 %v378
        %v606 = vpop.f32.mrb[0].mxu0
        %v607 = vadd.f32 %v371, %v606
        %v608 = vpop.f32.mrb[0].mxu0
        %v609 = vadd.f32 %v371, %v608
        %610 = vdwg.mxu0
        %611 = vmatprep.subr.mxu0 %v360
        %612 = vmatpush1.msra.mxu0 %v359
        %613 = vmatprep.subr.mxu0 0.0
        %614 = vmatpush1.msra.mxu0 0.0
        %615 = vmatprep.subr.mxu0 0.0
        %616 = vmatpush1.msra.mxu0 0.0
        %617 = vmatprep.subr.mxu0 0.0
        %618 = vmatpush1.msra.mxu0 0.0
        %619 = vmatprep.subr.mxu0 0.0
        %620 = vmatpush1.msra.mxu0 0.0
        %621 = vmatprep.subr.mxu0 0.0
        %622 = vmatpush1.msra.mxu0 0.0
        %623 = vmatprep.subr.mxu0 0.0
        %624 = vmatpush1.msra.mxu0 0.0
        %625 = vmatprep.subr.mxu0 0.0
        %626 = vmatpush1.msra.mxu0 0.0
        %627 = vmatprep.subr.mxu0 0.0
        %628 = vmatpush1.msra.mxu0 0.0
        %629 = vmatprep.subr.mxu0 0.0
        %630 = vmatpush1.msra.mxu0 0.0
        %631 = vmatprep.subr.mxu0 0.0
        %632 = vmatpush1.msra.mxu0 0.0
        %633 = vmatprep.subr.mxu0 0.0
        %634 = vmatpush1.msra.mxu0 0.0
        %635 = vmatprep.subr.mxu0 0.0
        %636 = vmatpush1.msra.mxu0 0.0
        %637 = vmatprep.subr.mxu0 0.0
        %638 = vmatpush1.msra.mxu0 0.0
        %639 = vmatprep.subr.mxu0 0.0
        %640 = vmatpush1.msra.mxu0 0.0
        %641 = vmatprep.subr.mxu0 0.0
        %642 = vmatpush1.msra.mxu0 0.0
        %643 = vmatprep.subr.mxu0 0.0
        %644 = vmatpush1.msra.mxu0 0.0
        %645 = vmatprep.subr.mxu0 0.0
        %646 = vmatpush1.msra.mxu0 0.0
        %647 = vmatprep.subr.mxu0 0.0
        %648 = vmatpush1.msra.mxu0 0.0
        %649 = vmatprep.subr.mxu0 0.0
        %650 = vmatpush1.msra.mxu0 0.0
        %651 = vmatprep.subr.mxu0 0.0
        %652 = vmatpush1.msra.mxu0 0.0
        %653 = vmatprep.subr.mxu0 0.0
        %654 = vmatpush1.msra.mxu0 0.0
        %655 = vmatprep.subr.mxu0 0.0
        %656 = vmatpush1.msra.mxu0 0.0
        %657 = vmatprep.subr.mxu0 0.0
        %658 = vmatpush1.msra.mxu0 0.0
        %659 = vmatprep.subr.mxu0 0.0
        %660 = vmatpush1.msra.mxu0 0.0
        %661 = vmatprep.subr.mxu0 0.0
        %662 = vmatpush1.msra.mxu0 0.0
        %663 = vmatprep.subr.mxu0 0.0
        %664 = vmatpush1.msra.mxu0 0.0
        %665 = vmatprep.subr.mxu0 0.0
        %666 = vmatpush1.msra.mxu0 0.0
        %667 = vmatprep.subr.mxu0 0.0
        %668 = vmatpush1.msra.mxu0 0.0
        %669 = vmatprep.subr.mxu0 0.0
        %670 = vmatpush1.msra.mxu0 0.0
        %671 = vmatprep.subr.mxu0 0.0
        %672 = vmatpush1.msra.mxu0 0.0
        %673 = vmatprep.subr.mxu0 0.0
        %674 = vmatpush1.msra.mxu0 0.0
        %675 = vmatprep.mubr.f32.mxu0 0.0
        %676 = vmatmul.mubr.f32.gmra.mrb[0].mxu0 %v375
        %v677 = vpop.f32.mrb[0].mxu0
        %v678 = vadd.f32 %v366, %v677
        %v679 = vpop.f32.mrb[0].mxu0
        %v680 = vadd.f32 %v366, %v679
        %681 = vmatprep.mubr.f32.mxu0 0.0
        %682 = vmatmul.mubr.f32.gmra.mrb[0].mxu0 %v378
        %v683 = vpop.f32.mrb[0].mxu0
        %v684 = vadd.f32 %v371, %v683
        %v685 = vpop.f32.mrb[0].mxu0
        %v686 = vadd.f32 %v371, %v685
        %687 = vdwg.mxu0
        %v688 = vld [vmem:[%s310] sm:$0xff]
        %v689 = vld [vmem:[%s310 + $0x8] sm:$0xff]
        %v690 = vld [vmem:[%s310 + $0x10] sm:$0xff]
        %v691 = vld [vmem:[%s310 + $0x18] sm:$0xff]
        %v692 = vld [vmem:[#allocation7] sm:$0xff]
        %v693 = vld [vmem:[#allocation7 + $0x8] sm:$0xff]
        %v694 = vld [vmem:[#allocation7 + $0x10] sm:$0xff]
        %v695 = vld [vmem:[#allocation7 + $0x18] sm:$0xff]
        %v696 = vld [vmem:[#allocation7 + $0x20] sm:$0xff]
        %v697 = vld [vmem:[#allocation7 + $0x28] sm:$0xff]
        %v698 = vld [vmem:[#allocation7 + $0x30] sm:$0xff]
        %v699 = vld [vmem:[#allocation7 + $0x38] sm:$0xff]
        %v700 = vld [vmem:[#allocation7 + $0x40] sm:$0xff]
        %v701 = vld [vmem:[#allocation7 + $0x48] sm:$0xff]
        %v702 = vld [vmem:[#allocation7 + $0x50] sm:$0xff]
        %v703 = vld [vmem:[#allocation7 + $0x58] sm:$0xff]
        %v704 = vld [vmem:[#allocation7 + $0x60] sm:$0xff]
        %v705 = vld [vmem:[#allocation7 + $0x68] sm:$0xff]
        %v706 = vld [vmem:[#allocation7 + $0x70] sm:$0xff]
        %v707 = vld [vmem:[#allocation7 + $0x78] sm:$0xff]
        %v708 = vld [vmem:[#allocation7 + $0x80] sm:$0xff]
        %v709 = vld [vmem:[#allocation7 + $0x88] sm:$0xff]
        %v710 = vld [vmem:[#allocation7 + $0x90] sm:$0xff]
        %v711 = vld [vmem:[#allocation7 + $0x98] sm:$0xff]
        %v712 = vld [vmem:[#allocation7 + $0xa0] sm:$0xff]
        %v713 = vld [vmem:[#allocation7 + $0xa8] sm:$0xff]
        %v714 = vld [vmem:[#allocation7 + $0xb0] sm:$0xff]
        %v715 = vld [vmem:[#allocation7 + $0xb8] sm:$0xff]
        %v716 = vld [vmem:[#allocation7 + $0xc0] sm:$0xff]
        %v717 = vld [vmem:[#allocation7 + $0xc8] sm:$0xff]
        %v718 = vld [vmem:[#allocation7 + $0xd0] sm:$0xff]
        %v719 = vld [vmem:[#allocation7 + $0xd8] sm:$0xff]
        %v720 = vld [vmem:[#allocation7 + $0xe0] sm:$0xff]
        %v721 = vld [vmem:[#allocation7 + $0xe8] sm:$0xff]
        %v722 = vld [vmem:[#allocation7 + $0xf0] sm:$0xff]
        %v723 = vld [vmem:[#allocation7 + $0xf8] sm:$0xff]
        %v724 = vld [vmem:[#allocation7 + $0x100] sm:$0xff]
        %v725 = vld [vmem:[#allocation7 + $0x108] sm:$0xff]
        %v726 = vld [vmem:[#allocation7 + $0x110] sm:$0xff]
        %v727 = vld [vmem:[#allocation7 + $0x118] sm:$0xff]
        %v728 = vld [vmem:[#allocation7 + $0x120] sm:$0xff]
        %v729 = vld [vmem:[#allocation7 + $0x128] sm:$0xff]
        %v730 = vld [vmem:[#allocation7 + $0x130] sm:$0xff]
        %v731 = vld [vmem:[#allocation7 + $0x138] sm:$0xff]
        %v732 = vld [vmem:[#allocation7 + $0x140] sm:$0xff]
        %v733 = vld [vmem:[#allocation7 + $0x148] sm:$0xff]
        %v734 = vld [vmem:[#allocation7 + $0x150] sm:$0xff]
        %v735 = vld [vmem:[#allocation7 + $0x158] sm:$0xff]
        %v736 = vld [vmem:[#allocation7 + $0x160] sm:$0xff]
        %v737 = vld [vmem:[#allocation7 + $0x168] sm:$0xff]
        %v738 = vld [vmem:[#allocation7 + $0x170] sm:$0xff]
        %v739 = vld [vmem:[#allocation7 + $0x178] sm:$0xff]
        %v740 = vld [vmem:[#allocation7 + $0x180] sm:$0xff]
        %v741 = vld [vmem:[#allocation7 + $0x188] sm:$0xff]
        %v742 = vld [vmem:[#allocation7 + $0x190] sm:$0xff]
        %v743 = vld [vmem:[#allocation7 + $0x198] sm:$0xff]
        %v744 = vld [vmem:[#allocation7 + $0x1a0] sm:$0xff]
        %v745 = vld [vmem:[#allocation7 + $0x1a8] sm:$0xff]
        %v746 = vld [vmem:[#allocation7 + $0x1b0] sm:$0xff]
        %v747 = vld [vmem:[#allocation7 + $0x1b8] sm:$0xff]
        %v748 = vld [vmem:[#allocation7 + $0x1c0] sm:$0xff]
        %v749 = vld [vmem:[#allocation7 + $0x1c8] sm:$0xff]
        %v750 = vld [vmem:[#allocation7 + $0x1d0] sm:$0xff]
        %v751 = vld [vmem:[#allocation7 + $0x1d8] sm:$0xff]
        %v752 = vld [vmem:[#allocation7 + $0x1e0] sm:$0xff]
        %v753 = vld [vmem:[#allocation7 + $0x1e8] sm:$0xff]
        %v754 = vld [vmem:[#allocation7 + $0x1f0] sm:$0xff]
        %v755 = vld [vmem:[#allocation7 + $0x1f8] sm:$0xff]
        %v756 = vld [vmem:[#allocation7 + $0x200] sm:$0xff]
        %v757 = vld [vmem:[#allocation7 + $0x208] sm:$0xff]
        %v758 = vld [vmem:[#allocation7 + $0x210] sm:$0xff]
        %v759 = vld [vmem:[#allocation7 + $0x218] sm:$0xff]
        %v760 = vld [vmem:[#allocation7 + $0x220] sm:$0xff]
        %v761 = vld [vmem:[#allocation7 + $0x228] sm:$0xff]
        %v762 = vld [vmem:[#allocation7 + $0x230] sm:$0xff]
        %v763 = vld [vmem:[#allocation7 + $0x238] sm:$0xff]
        %v764 = vld [vmem:[#allocation7 + $0x240] sm:$0xff]
        %v765 = vld [vmem:[#allocation7 + $0x248] sm:$0xff]
        %v766 = vld [vmem:[#allocation7 + $0x250] sm:$0xff]
        %v767 = vld [vmem:[#allocation7 + $0x258] sm:$0xff]
        %v768 = vld [vmem:[#allocation7 + $0x260] sm:$0xff]
        %v769 = vld [vmem:[#allocation7 + $0x268] sm:$0xff]
        %v770 = vld [vmem:[#allocation7 + $0x270] sm:$0xff]
        %v771 = vld [vmem:[#allocation7 + $0x278] sm:$0xff]
        %v772 = vld [vmem:[#allocation7 + $0x280] sm:$0xff]
        %v773 = vld [vmem:[#allocation7 + $0x288] sm:$0xff]
        %v774 = vld [vmem:[#allocation7 + $0x290] sm:$0xff]
        %v775 = vld [vmem:[#allocation7 + $0x298] sm:$0xff]
        %v776 = vld [vmem:[#allocation7 + $0x2a0] sm:$0xff]
        %v777 = vld [vmem:[#allocation7 + $0x2a8] sm:$0xff]
        %v778 = vld [vmem:[#allocation7 + $0x2b0] sm:$0xff]
        %v779 = vld [vmem:[#allocation7 + $0x2b8] sm:$0xff]
        %v780 = vld [vmem:[#allocation7 + $0x2c0] sm:$0xff]
        %v781 = vld [vmem:[#allocation7 + $0x2c8] sm:$0xff]
        %v782 = vld [vmem:[#allocation7 + $0x2d0] sm:$0xff]
        %v783 = vld [vmem:[#allocation7 + $0x2d8] sm:$0xff]
        %v784 = vld [vmem:[#allocation7 + $0x2e0] sm:$0xff]
        %v785 = vld [vmem:[#allocation7 + $0x2e8] sm:$0xff]
        %v786 = vld [vmem:[#allocation7 + $0x2f0] sm:$0xff]
        %v787 = vld [vmem:[#allocation7 + $0x2f8] sm:$0xff]
        %v788 = vld [vmem:[#allocation7 + $0x300] sm:$0xff]
        %v789 = vld [vmem:[#allocation7 + $0x308] sm:$0xff]
        %v790 = vld [vmem:[#allocation7 + $0x310] sm:$0xff]
        %v791 = vld [vmem:[#allocation7 + $0x318] sm:$0xff]
        %v792 = vld [vmem:[#allocation7 + $0x320] sm:$0xff]
        %v793 = vld [vmem:[#allocation7 + $0x328] sm:$0xff]
        %v794 = vld [vmem:[#allocation7 + $0x330] sm:$0xff]
        %v795 = vld [vmem:[#allocation7 + $0x338] sm:$0xff]
        %v796 = vld [vmem:[#allocation7 + $0x340] sm:$0xff]
        %v797 = vld [vmem:[#allocation7 + $0x348] sm:$0xff]
        %v798 = vld [vmem:[#allocation7 + $0x350] sm:$0xff]
        %v799 = vld [vmem:[#allocation7 + $0x358] sm:$0xff]
        %v800 = vld [vmem:[#allocation7 + $0x360] sm:$0xff]
        %v801 = vld [vmem:[#allocation7 + $0x368] sm:$0xff]
        %v802 = vld [vmem:[#allocation7 + $0x370] sm:$0xff]
        %v803 = vld [vmem:[#allocation7 + $0x378] sm:$0xff]
        %v804 = vld [vmem:[#allocation7 + $0x380] sm:$0xff]
        %v805 = vld [vmem:[#allocation7 + $0x388] sm:$0xff]
        %v806 = vld [vmem:[#allocation7 + $0x390] sm:$0xff]
        %v807 = vld [vmem:[#allocation7 + $0x398] sm:$0xff]
        %v808 = vld [vmem:[#allocation7 + $0x3a0] sm:$0xff]
        %v809 = vld [vmem:[#allocation7 + $0x3a8] sm:$0xff]
        %v810 = vld [vmem:[#allocation7 + $0x3b0] sm:$0xff]
        %v811 = vld [vmem:[#allocation7 + $0x3b8] sm:$0xff]
        %v812 = vld [vmem:[#allocation7 + $0x3c0] sm:$0xff]
        %v813 = vld [vmem:[#allocation7 + $0x3c8] sm:$0xff]
        %v814 = vld [vmem:[#allocation7 + $0x3d0] sm:$0xff]
        %v815 = vld [vmem:[#allocation7 + $0x3d8] sm:$0xff]
        %v816 = vld [vmem:[#allocation7 + $0x3e0] sm:$0xff]
        %v817 = vld [vmem:[#allocation7 + $0x3e8] sm:$0xff]
        %v818 = vld [vmem:[#allocation7 + $0x3f0] sm:$0xff]
        %v819 = vld [vmem:[#allocation7 + $0x3f8] sm:$0xff]
        %820 = vmatprep.subr.mxu0 %v693
        %821 = vmatpush1.msra.mxu0 %v692
        %822 = vmatprep.subr.mxu0 %v697
        %823 = vmatpush1.msra.mxu0 %v696
        %824 = vmatprep.subr.mxu0 %v701
        %825 = vmatpush1.msra.mxu0 %v700
        %826 = vmatprep.subr.mxu0 %v705
        %827 = vmatpush1.msra.mxu0 %v704
        %828 = vmatprep.subr.mxu0 %v709
        %829 = vmatpush1.msra.mxu0 %v708
        %830 = vmatprep.subr.mxu0 %v713
        %831 = vmatpush1.msra.mxu0 %v712
        %832 = vmatprep.subr.mxu0 %v717
        %833 = vmatpush1.msra.mxu0 %v716
        %834 = vmatprep.subr.mxu0 %v721
        %835 = vmatpush1.msra.mxu0 %v720
        %836 = vmatprep.subr.mxu0 %v725
        %837 = vmatpush1.msra.mxu0 %v724
        %838 = vmatprep.subr.mxu0 %v729
        %839 = vmatpush1.msra.mxu0 %v728
        %840 = vmatprep.subr.mxu0 %v733
        %841 = vmatpush1.msra.mxu0 %v732
        %842 = vmatprep.subr.mxu0 %v737
        %843 = vmatpush1.msra.mxu0 %v736
        %844 = vmatprep.subr.mxu0 %v741
        %845 = vmatpush1.msra.mxu0 %v740
        %846 = vmatprep.subr.mxu0 %v745
        %847 = vmatpush1.msra.mxu0 %v744
        %848 = vmatprep.subr.mxu0 %v749
        %849 = vmatpush1.msra.mxu0 %v748
        %850 = vmatprep.subr.mxu0 %v753
        %851 = vmatpush1.msra.mxu0 %v752
        %852 = vmatprep.subr.mxu0 %v757
        %853 = vmatpush1.msra.mxu0 %v756
        %854 = vmatprep.subr.mxu0 %v761
        %855 = vmatpush1.msra.mxu0 %v760
        %856 = vmatprep.subr.mxu0 %v765
        %857 = vmatpush1.msra.mxu0 %v764
        %858 = vmatprep.subr.mxu0 %v769
        %859 = vmatpush1.msra.mxu0 %v768
        %860 = vmatprep.subr.mxu0 %v773
        %861 = vmatpush1.msra.mxu0 %v772
        %862 = vmatprep.subr.mxu0 %v777
        %863 = vmatpush1.msra.mxu0 %v776
        %864 = vmatprep.subr.mxu0 %v781
        %865 = vmatpush1.msra.mxu0 %v780
        %866 = vmatprep.subr.mxu0 %v785
        %867 = vmatpush1.msra.mxu0 %v784
        %868 = vmatprep.subr.mxu0 %v789
        %869 = vmatpush1.msra.mxu0 %v788
        %870 = vmatprep.subr.mxu0 %v793
        %871 = vmatpush1.msra.mxu0 %v792
        %872 = vmatprep.subr.mxu0 %v797
        %873 = vmatpush1.msra.mxu0 %v796
        %874 = vmatprep.subr.mxu0 %v801
        %875 = vmatpush1.msra.mxu0 %v800
        %876 = vmatprep.subr.mxu0 %v805
        %877 = vmatpush1.msra.mxu0 %v804
        %878 = vmatprep.subr.mxu0 %v809
        %879 = vmatpush1.msra.mxu0 %v808
        %880 = vmatprep.subr.mxu0 %v813
        %881 = vmatpush1.msra.mxu0 %v812
        %882 = vmatprep.subr.mxu0 %v817
        %883 = vmatpush1.msra.mxu0 %v816
        %884 = vmatprep.mubr.f32.mxu0 %v689
        %885 = vmatmul.mubr.f32.gmra.mrb[0].mxu0 %v688
        %v886 = vpop.f32.mrb[0].mxu0
        %v887 = vadd.f32 0.0, %v886
        %v888 = vpop.f32.mrb[0].mxu0
        %v889 = vadd.f32 0.0, %v888
        %890 = vmatprep.mubr.f32.mxu0 %v691
        %891 = vmatmul.mubr.f32.gmra.mrb[0].mxu0 %v690
        %v892 = vpop.f32.mrb[0].mxu0
        %v893 = vadd.f32 0.0, %v892
        %v894 = vpop.f32.mrb[0].mxu0
        %v895 = vadd.f32 0.0, %v894
        %896 = vdwg.mxu0
        %897 = vmatprep.subr.mxu0 %v695
        %898 = vmatpush1.msra.mxu0 %v694
        %899 = vmatprep.subr.mxu0 %v699
        %900 = vmatpush1.msra.mxu0 %v698
        %901 = vmatprep.subr.mxu0 %v703
        %902 = vmatpush1.msra.mxu0 %v702
        %903 = vmatprep.subr.mxu0 %v707
        %904 = vmatpush1.msra.mxu0 %v706
        %905 = vmatprep.subr.mxu0 %v711
        %906 = vmatpush1.msra.mxu0 %v710
        %907 = vmatprep.subr.mxu0 %v715
        %908 = vmatpush1.msra.mxu0 %v714
        %909 = vmatprep.subr.mxu0 %v719
        %910 = vmatpush1.msra.mxu0 %v718
        %911 = vmatprep.subr.mxu0 %v723
        %912 = vmatpush1.msra.mxu0 %v722
        %913 = vmatprep.subr.mxu0 %v727
        %914 = vmatpush1.msra.mxu0 %v726
        %915 = vmatprep.subr.mxu0 %v731
        %916 = vmatpush1.msra.mxu0 %v730
        %917 = vmatprep.subr.mxu0 %v735
        %918 = vmatpush1.msra.mxu0 %v734
        %919 = vmatprep.subr.mxu0 %v739
        %920 = vmatpush1.msra.mxu0 %v738
        %921 = vmatprep.subr.mxu0 %v743
        %922 = vmatpush1.msra.mxu0 %v742
        %923 = vmatprep.subr.mxu0 %v747
        %924 = vmatpush1.msra.mxu0 %v746
        %925 = vmatprep.subr.mxu0 %v751
        %926 = vmatpush1.msra.mxu0 %v750
        %927 = vmatprep.subr.mxu0 %v755
        %928 = vmatpush1.msra.mxu0 %v754
        %929 = vmatprep.subr.mxu0 %v759
        %930 = vmatpush1.msra.mxu0 %v758
        %931 = vmatprep.subr.mxu0 %v763
        %932 = vmatpush1.msra.mxu0 %v762
        %933 = vmatprep.subr.mxu0 %v767
        %934 = vmatpush1.msra.mxu0 %v766
        %935 = vmatprep.subr.mxu0 %v771
        %936 = vmatpush1.msra.mxu0 %v770
        %937 = vmatprep.subr.mxu0 %v775
        %938 = vmatpush1.msra.mxu0 %v774
        %939 = vmatprep.subr.mxu0 %v779
        %940 = vmatpush1.msra.mxu0 %v778
        %941 = vmatprep.subr.mxu0 %v783
        %942 = vmatpush1.msra.mxu0 %v782
        %943 = vmatprep.subr.mxu0 %v787
        %944 = vmatpush1.msra.mxu0 %v786
        %945 = vmatprep.subr.mxu0 %v791
        %946 = vmatpush1.msra.mxu0 %v790
        %947 = vmatprep.subr.mxu0 %v795
        %948 = vmatpush1.msra.mxu0 %v794
        %949 = vmatprep.subr.mxu0 %v799
        %950 = vmatpush1.msra.mxu0 %v798
        %951 = vmatprep.subr.mxu0 %v803
        %952 = vmatpush1.msra.mxu0 %v802
        %953 = vmatprep.subr.mxu0 %v807
        %954 = vmatpush1.msra.mxu0 %v806
        %955 = vmatprep.subr.mxu0 %v811
        %956 = vmatpush1.msra.mxu0 %v810
        %957 = vmatprep.subr.mxu0 %v815
        %958 = vmatpush1.msra.mxu0 %v814
        %959 = vmatprep.subr.mxu0 %v819
        %960 = vmatpush1.msra.mxu0 %v818
        %961 = vmatprep.mubr.f32.mxu0 %v689
        %962 = vmatmul.mubr.f32.gmra.mrb[0].mxu0 %v688
        %v963 = vpop.f32.mrb[0].mxu0
        %v964 = vadd.f32 0.0, %v963
        %v965 = vpop.f32.mrb[0].mxu0
        %v966 = vadd.f32 0.0, %v965
        %967 = vmatprep.mubr.f32.mxu0 %v691
        %968 = vmatmul.mubr.f32.gmra.mrb[0].mxu0 %v690
        %v969 = vpop.f32.mrb[0].mxu0
        %v970 = vadd.f32 0.0, %v969
        %v971 = vpop.f32.mrb[0].mxu0
        %v972 = vadd.f32 0.0, %v971
        %973 = vdwg.mxu0
        %v974 = vld [vmem:[%s5] sm:$0xff]
        %v975 = vld [vmem:[%s5 + $0x8] sm:$0xff]
        %vm976 = vcmask 130048
        %v978 = vsel %vm976, %v887, 0
        %v981 = vsel %vm976, %v893, 0
        %983 = vmatprep.subr.mxu0 0.0
        %984 = vmatpush1.msra.mxu0 %v974
        %985 = vmatprep.subr.mxu0 0.0
        %986 = vmatpush1.msra.mxu0 %v975
        %987 = vmatprep.subr.mxu0 0.0
        %988 = vmatpush1.msra.mxu0 0.0
        %989 = vmatprep.subr.mxu0 0.0
        %990 = vmatpush1.msra.mxu0 0.0
        %991 = vmatprep.subr.mxu0 0.0
        %992 = vmatpush1.msra.mxu0 0.0
        %993 = vmatprep.subr.mxu0 0.0
        %994 = vmatpush1.msra.mxu0 0.0
        %995 = vmatprep.subr.mxu0 0.0
        %996 = vmatpush1.msra.mxu0 0.0
        %997 = vmatprep.subr.mxu0 0.0
        %998 = vmatpush1.msra.mxu0 0.0
        %999 = vmatprep.subr.mxu0 0.0
        %1000 = vmatpush1.msra.mxu0 0.0
        %1001 = vmatprep.subr.mxu0 0.0
        %1002 = vmatpush1.msra.mxu0 0.0
        %1003 = vmatprep.subr.mxu0 0.0
        %1004 = vmatpush1.msra.mxu0 0.0
        %1005 = vmatprep.subr.mxu0 0.0
        %1006 = vmatpush1.msra.mxu0 0.0
        %1007 = vmatprep.subr.mxu0 0.0
        %1008 = vmatpush1.msra.mxu0 0.0
        %1009 = vmatprep.subr.mxu0 0.0
        %1010 = vmatpush1.msra.mxu0 0.0
        %1011 = vmatprep.subr.mxu0 0.0
        %1012 = vmatpush1.msra.mxu0 0.0
        %1013 = vmatprep.subr.mxu0 0.0
        %1014 = vmatpush1.msra.mxu0 0.0
        %1015 = vmatprep.subr.mxu0 0.0
        %1016 = vmatpush1.msra.mxu0 0.0
        %1017 = vmatprep.subr.mxu0 0.0
        %1018 = vmatpush1.msra.mxu0 0.0
        %1019 = vmatprep.subr.mxu0 0.0
        %1020 = vmatpush1.msra.mxu0 0.0
        %1021 = vmatprep.subr.mxu0 0.0
        %1022 = vmatpush1.msra.mxu0 0.0
        %1023 = vmatprep.subr.mxu0 0.0
        %1024 = vmatpush1.msra.mxu0 0.0
        %1025 = vmatprep.subr.mxu0 0.0
        %1026 = vmatpush1.msra.mxu0 0.0
        %1027 = vmatprep.subr.mxu0 0.0
        %1028 = vmatpush1.msra.mxu0 0.0
        %1029 = vmatprep.subr.mxu0 0.0
        %1030 = vmatpush1.msra.mxu0 0.0
        %1031 = vmatprep.subr.mxu0 0.0
        %1032 = vmatpush1.msra.mxu0 0.0
        %1033 = vmatprep.subr.mxu0 0.0
        %1034 = vmatpush1.msra.mxu0 0.0
        %1035 = vmatprep.subr.mxu0 0.0
        %1036 = vmatpush1.msra.mxu0 0.0
        %1037 = vmatprep.subr.mxu0 0.0
        %1038 = vmatpush1.msra.mxu0 0.0
        %1039 = vmatprep.subr.mxu0 0.0
        %1040 = vmatpush1.msra.mxu0 0.0
        %1041 = vmatprep.subr.mxu0 0.0
        %1042 = vmatpush1.msra.mxu0 0.0
        %1043 = vmatprep.subr.mxu0 0.0
        %1044 = vmatpush1.msra.mxu0 0.0
        %1045 = vmatprep.subr.mxu0 0.0
        %1046 = vmatpush1.msra.mxu0 0.0
        %1047 = vmatprep.mubr.f32.mxu0 0.0
        %1048 = vmatmul.mubr.f32.gmra.mrb[0].mxu0 %v978
        %v1049 = vpop.f32.mrb[0].mxu0
        %v1050 = vadd.f32 0.0, %v1049
        %v1051 = vpop.f32.mrb[0].mxu0
        %1052 = vmatprep.mubr.f32.mxu0 0.0
        %1053 = vmatmul.mubr.f32.gmra.mrb[0].mxu0 %v981
        %v1054 = vpop.f32.mrb[0].mxu0
        %v1055 = vadd.f32 0.0, %v1054
        %v1056 = vpop.f32.mrb[0].mxu0
        %1057 = vdwg.mxu0
        %v1058 = vmul.f32 %v447, %v1050
        %v1059 = vmul.f32 %v453, %v1055
        %vm1060 = vcmask 261120
        %1061 = vst.msk [vmem:[%s347] sm:$0xff] %vm1060, %v1058
        %1062 = vst.msk [vmem:[%s347 + $0x40] sm:$0xff] %vm1060, %v1059
        %1063 = vrot.lane.b32.xlu0 %v887, 112
        %v1064 = vpop.permute.xlu0 %1063
        %1065 = vrot.lane.b32.xlu0 %v893, 112
        %v1066 = vpop.permute.xlu0 %1065
        %v1067 = vsel %vm976, %v1064, 0
        %v1069 = vsel %vm976, %v1066, 0
        %1071 = vmatprep.subr.mxu0 0.0
        %1072 = vmatpush1.msra.mxu0 %v974
        %1073 = vmatprep.subr.mxu0 0.0
        %1074 = vmatpush1.msra.mxu0 %v975
        %1075 = vmatprep.subr.mxu0 0.0
        %1076 = vmatpush1.msra.mxu0 0.0
        %1077 = vmatprep.subr.mxu0 0.0
        %1078 = vmatpush1.msra.mxu0 0.0
        %1079 = vmatprep.subr.mxu0 0.0
        %1080 = vmatpush1.msra.mxu0 0.0
        %1081 = vmatprep.subr.mxu0 0.0
        %1082 = vmatpush1.msra.mxu0 0.0
        %1083 = vmatprep.subr.mxu0 0.0
        %1084 = vmatpush1.msra.mxu0 0.0
        %1085 = vmatprep.subr.mxu0 0.0
        %1086 = vmatpush1.msra.mxu0 0.0
        %1087 = vmatprep.subr.mxu0 0.0
        %1088 = vmatpush1.msra.mxu0 0.0
        %1089 = vmatprep.subr.mxu0 0.0
        %1090 = vmatpush1.msra.mxu0 0.0
        %1091 = vmatprep.subr.mxu0 0.0
        %1092 = vmatpush1.msra.mxu0 0.0
        %1093 = vmatprep.subr.mxu0 0.0
        %1094 = vmatpush1.msra.mxu0 0.0
        %1095 = vmatprep.subr.mxu0 0.0
        %1096 = vmatpush1.msra.mxu0 0.0
        %1097 = vmatprep.subr.mxu0 0.0
        %1098 = vmatpush1.msra.mxu0 0.0
        %1099 = vmatprep.subr.mxu0 0.0
        %1100 = vmatpush1.msra.mxu0 0.0
        %1101 = vmatprep.subr.mxu0 0.0
        %1102 = vmatpush1.msra.mxu0 0.0
        %1103 = vmatprep.subr.mxu0 0.0
        %1104 = vmatpush1.msra.mxu0 0.0
        %1105 = vmatprep.subr.mxu0 0.0
        %1106 = vmatpush1.msra.mxu0 0.0
        %1107 = vmatprep.subr.mxu0 0.0
        %1108 = vmatpush1.msra.mxu0 0.0
        %1109 = vmatprep.subr.mxu0 0.0
        %1110 = vmatpush1.msra.mxu0 0.0
        %1111 = vmatprep.subr.mxu0 0.0
        %1112 = vmatpush1.msra.mxu0 0.0
        %1113 = vmatprep.subr.mxu0 0.0
        %1114 = vmatpush1.msra.mxu0 0.0
        %1115 = vmatprep.subr.mxu0 0.0
        %1116 = vmatpush1.msra.mxu0 0.0
        %1117 = vmatprep.subr.mxu0 0.0
        %1118 = vmatpush1.msra.mxu0 0.0
        %1119 = vmatprep.subr.mxu0 0.0
        %1120 = vmatpush1.msra.mxu0 0.0
        %1121 = vmatprep.subr.mxu0 0.0
        %1122 = vmatpush1.msra.mxu0 0.0
        %1123 = vmatprep.subr.mxu0 0.0
        %1124 = vmatpush1.msra.mxu0 0.0
        %1125 = vmatprep.subr.mxu0 0.0
        %1126 = vmatpush1.msra.mxu0 0.0
        %1127 = vmatprep.subr.mxu0 0.0
        %1128 = vmatpush1.msra.mxu0 0.0
        %1129 = vmatprep.subr.mxu0 0.0
        %1130 = vmatpush1.msra.mxu0 0.0
        %1131 = vmatprep.subr.mxu0 0.0
        %1132 = vmatpush1.msra.mxu0 0.0
        %1133 = vmatprep.subr.mxu0 0.0
        %1134 = vmatpush1.msra.mxu0 0.0
        %1135 = vmatprep.mubr.f32.mxu0 0.0
        %1136 = vmatmul.mubr.f32.gmra.mrb[0].mxu0 %v1067
        %v1137 = vpop.f32.mrb[0].mxu0
        %v1138 = vadd.f32 0.0, %v1137
        %v1139 = vpop.f32.mrb[0].mxu0
        %1140 = vmatprep.mubr.f32.mxu0 0.0
        %1141 = vmatmul.mubr.f32.gmra.mrb[0].mxu0 %v1069
        %v1142 = vpop.f32.mrb[0].mxu0
        %v1143 = vadd.f32 0.0, %v1142
        %v1144 = vpop.f32.mrb[0].mxu0
        %1145 = vdwg.mxu0
        %1148 = vrot.lane.b32.xlu0 %v1138, 32
        %v1149 = vpop.permute.xlu0 %1148
        %1150 = vrot.lane.b32.xlu0 %v1143, 32
        %v1151 = vpop.permute.xlu0 %1150
        %v1154 = vmul.f32 %v447, %v1149
        %v1155 = vmul.f32 %v453, %v1151
        %vm1156 = vcmask 523520
        %1157 = vst.msk [vmem:[%s347] sm:$0xff] %vm1156, %v1154
        %1158 = vst.msk [vmem:[%s347 + $0x40] sm:$0xff] %vm1156, %v1155
        %1159 = vrot.lane.b32.xlu0 %v887, 96
        %v1160 = vpop.permute.xlu0 %1159
        %1161 = vrot.lane.b32.xlu0 %v893, 96
        %v1162 = vpop.permute.xlu0 %1161
        %v1163 = vsel %vm976, %v1160, 0
        %v1165 = vsel %vm976, %v1162, 0
        %1167 = vmatprep.subr.mxu0 0.0
        %1168 = vmatpush1.msra.mxu0 %v974
        %1169 = vmatprep.subr.mxu0 0.0
        %1170 = vmatpush1.msra.mxu0 %v975
        %1171 = vmatprep.subr.mxu0 0.0
        %1172 = vmatpush1.msra.mxu0 0.0
        %1173 = vmatprep.subr.mxu0 0.0
        %1174 = vmatpush1.msra.mxu0 0.0
        %1175 = vmatprep.subr.mxu0 0.0
        %1176 = vmatpush1.msra.mxu0 0.0
        %1177 = vmatprep.subr.mxu0 0.0
        %1178 = vmatpush1.msra.mxu0 0.0
        %1179 = vmatprep.subr.mxu0 0.0
        %1180 = vmatpush1.msra.mxu0 0.0
        %1181 = vmatprep.subr.mxu0 0.0
        %1182 = vmatpush1.msra.mxu0 0.0
        %1183 = vmatprep.subr.mxu0 0.0
        %1184 = vmatpush1.msra.mxu0 0.0
        %1185 = vmatprep.subr.mxu0 0.0
        %1186 = vmatpush1.msra.mxu0 0.0
        %1187 = vmatprep.subr.mxu0 0.0
        %1188 = vmatpush1.msra.mxu0 0.0
        %1189 = vmatprep.subr.mxu0 0.0
        %1190 = vmatpush1.msra.mxu0 0.0
        %1191 = vmatprep.subr.mxu0 0.0
        %1192 = vmatpush1.msra.mxu0 0.0
        %1193 = vmatprep.subr.mxu0 0.0
        %1194 = vmatpush1.msra.mxu0 0.0
        %1195 = vmatprep.subr.mxu0 0.0
        %1196 = vmatpush1.msra.mxu0 0.0
        %1197 = vmatprep.subr.mxu0 0.0
        %1198 = vmatpush1.msra.mxu0 0.0
        %1199 = vmatprep.subr.mxu0 0.0
        %1200 = vmatpush1.msra.mxu0 0.0
        %1201 = vmatprep.subr.mxu0 0.0
        %1202 = vmatpush1.msra.mxu0 0.0
        %1203 = vmatprep.subr.mxu0 0.0
        %1204 = vmatpush1.msra.mxu0 0.0
        %1205 = vmatprep.subr.mxu0 0.0
        %1206 = vmatpush1.msra.mxu0 0.0
        %1207 = vmatprep.subr.mxu0 0.0
        %1208 = vmatpush1.msra.mxu0 0.0
        %1209 = vmatprep.subr.mxu0 0.0
        %1210 = vmatpush1.msra.mxu0 0.0
        %1211 = vmatprep.subr.mxu0 0.0
        %1212 = vmatpush1.msra.mxu0 0.0
        %1213 = vmatprep.subr.mxu0 0.0
        %1214 = vmatpush1.msra.mxu0 0.0
        %1215 = vmatprep.subr.mxu0 0.0
        %1216 = vmatpush1.msra.mxu0 0.0
        %1217 = vmatprep.subr.mxu0 0.0
        %1218 = vmatpush1.msra.mxu0 0.0
        %1219 = vmatprep.subr.mxu0 0.0
        %1220 = vmatpush1.msra.mxu0 0.0
        %1221 = vmatprep.subr.mxu0 0.0
        %1222 = vmatpush1.msra.mxu0 0.0
        %1223 = vmatprep.subr.mxu0 0.0
        %1224 = vmatpush1.msra.mxu0 0.0
        %1225 = vmatprep.subr.mxu0 0.0
        %1226 = vmatpush1.msra.mxu0 0.0
        %1227 = vmatprep.subr.mxu0 0.0
        %1228 = vmatpush1.msra.mxu0 0.0
        %1229 = vmatprep.subr.mxu0 0.0
        %1230 = vmatpush1.msra.mxu0 0.0
        %1231 = vmatprep.mubr.f32.mxu0 0.0
        %1232 = vmatmul.mubr.f32.gmra.mrb[0].mxu0 %v1163
        %v1233 = vpop.f32.mrb[0].mxu0
        %v1234 = vadd.f32 0.0, %v1233
        %v1235 = vpop.f32.mrb[0].mxu0
        %1236 = vmatprep.mubr.f32.mxu0 0.0
        %1237 = vmatmul.mubr.f32.gmra.mrb[0].mxu0 %v1165
        %v1238 = vpop.f32.mrb[0].mxu0
        %v1239 = vadd.f32 0.0, %v1238
        %v1240 = vpop.f32.mrb[0].mxu0
        %1241 = vdwg.mxu0
        %1244 = vrot.lane.b32.xlu0 %v1234, 64
        %v1245 = vpop.permute.xlu0 %1244
        %1246 = vrot.lane.b32.xlu0 %v1239, 64
        %v1247 = vpop.permute.xlu0 %1246
        %v1250 = vmul.f32 %v447, %v1245
        %v1251 = vmul.f32 %v453, %v1247
        %vm1252 = vcmask 785920
        %1253 = vst.msk [vmem:[%s347] sm:$0xff] %vm1252, %v1250
        %1254 = vst.msk [vmem:[%s347 + $0x40] sm:$0xff] %vm1252, %v1251
        %1255 = vrot.lane.b32.xlu0 %v887, 80
        %v1256 = vpop.permute.xlu0 %1255
        %1257 = vrot.lane.b32.xlu0 %v893, 80
        %v1258 = vpop.permute.xlu0 %1257
        %v1259 = vsel %vm976, %v1256, 0
        %v1261 = vsel %vm976, %v1258, 0
        %1263 = vmatprep.subr.mxu0 0.0
        %1264 = vmatpush1.msra.mxu0 %v974
        %1265 = vmatprep.subr.mxu0 0.0
        %1266 = vmatpush1.msra.mxu0 %v975
        %1267 = vmatprep.subr.mxu0 0.0
        %1268 = vmatpush1.msra.mxu0 0.0
        %1269 = vmatprep.subr.mxu0 0.0
        %1270 = vmatpush1.msra.mxu0 0.0
        %1271 = vmatprep.subr.mxu0 0.0
        %1272 = vmatpush1.msra.mxu0 0.0
        %1273 = vmatprep.subr.mxu0 0.0
        %1274 = vmatpush1.msra.mxu0 0.0
        %1275 = vmatprep.subr.mxu0 0.0
        %1276 = vmatpush1.msra.mxu0 0.0
        %1277 = vmatprep.subr.mxu0 0.0
        %1278 = vmatpush1.msra.mxu0 0.0
        %1279 = vmatprep.subr.mxu0 0.0
        %1280 = vmatpush1.msra.mxu0 0.0
        %1281 = vmatprep.subr.mxu0 0.0
        %1282 = vmatpush1.msra.mxu0 0.0
        %1283 = vmatprep.subr.mxu0 0.0
        %1284 = vmatpush1.msra.mxu0 0.0
        %1285 = vmatprep.subr.mxu0 0.0
        %1286 = vmatpush1.msra.mxu0 0.0
        %1287 = vmatprep.subr.mxu0 0.0
        %1288 = vmatpush1.msra.mxu0 0.0
        %1289 = vmatprep.subr.mxu0 0.0
        %1290 = vmatpush1.msra.mxu0 0.0
        %1291 = vmatprep.subr.mxu0 0.0
        %1292 = vmatpush1.msra.mxu0 0.0
        %1293 = vmatprep.subr.mxu0 0.0
        %1294 = vmatpush1.msra.mxu0 0.0
        %1295 = vmatprep.subr.mxu0 0.0
        %1296 = vmatpush1.msra.mxu0 0.0
        %1297 = vmatprep.subr.mxu0 0.0
        %1298 = vmatpush1.msra.mxu0 0.0
        %1299 = vmatprep.subr.mxu0 0.0
        %1300 = vmatpush1.msra.mxu0 0.0
        %1301 = vmatprep.subr.mxu0 0.0
        %1302 = vmatpush1.msra.mxu0 0.0
        %1303 = vmatprep.subr.mxu0 0.0
        %1304 = vmatpush1.msra.mxu0 0.0
        %1305 = vmatprep.subr.mxu0 0.0
        %1306 = vmatpush1.msra.mxu0 0.0
        %1307 = vmatprep.subr.mxu0 0.0
        %1308 = vmatpush1.msra.mxu0 0.0
        %1309 = vmatprep.subr.mxu0 0.0
        %1310 = vmatpush1.msra.mxu0 0.0
        %1311 = vmatprep.subr.mxu0 0.0
        %1312 = vmatpush1.msra.mxu0 0.0
        %1313 = vmatprep.subr.mxu0 0.0
        %1314 = vmatpush1.msra.mxu0 0.0
        %1315 = vmatprep.subr.mxu0 0.0
        %1316 = vmatpush1.msra.mxu0 0.0
        %1317 = vmatprep.subr.mxu0 0.0
        %1318 = vmatpush1.msra.mxu0 0.0
        %1319 = vmatprep.subr.mxu0 0.0
        %1320 = vmatpush1.msra.mxu0 0.0
        %1321 = vmatprep.subr.mxu0 0.0
        %1322 = vmatpush1.msra.mxu0 0.0
        %1323 = vmatprep.subr.mxu0 0.0
        %1324 = vmatpush1.msra.mxu0 0.0
        %1325 = vmatprep.subr.mxu0 0.0
        %1326 = vmatpush1.msra.mxu0 0.0
        %1327 = vmatprep.mubr.f32.mxu0 0.0
        %1328 = vmatmul.mubr.f32.gmra.mrb[0].mxu0 %v1259
        %v1329 = vpop.f32.mrb[0].mxu0
        %v1330 = vadd.f32 0.0, %v1329
        %v1331 = vpop.f32.mrb[0].mxu0
        %1332 = vmatprep.mubr.f32.mxu0 0.0
        %1333 = vmatmul.mubr.f32.gmra.mrb[0].mxu0 %v1261
        %v1334 = vpop.f32.mrb[0].mxu0
        %v1335 = vadd.f32 0.0, %v1334
        %v1336 = vpop.f32.mrb[0].mxu0
        %1337 = vdwg.mxu0
        %1340 = vrot.lane.b32.xlu0 %v1330, 96
        %v1341 = vpop.permute.xlu0 %1340
        %1342 = vrot.lane.b32.xlu0 %v1335, 96
        %v1343 = vpop.permute.xlu0 %1342
        %v1346 = vmul.f32 %v447, %v1341
        %v1347 = vmul.f32 %v453, %v1343
        %vm1348 = vcmask 1048320
        %1349 = vst.msk [vmem:[%s347] sm:$0xff] %vm1348, %v1346
        %1350 = vst.msk [vmem:[%s347 + $0x40] sm:$0xff] %vm1348, %v1347
        %1351 = vrot.lane.b32.xlu0 %v887, 64
        %v1352 = vpop.permute.xlu0 %1351
        %1353 = vrot.lane.b32.xlu0 %v893, 64
        %v1354 = vpop.permute.xlu0 %1353
        %v1355 = vsel %vm976, %v1352, 0
        %v1357 = vsel %vm976, %v1354, 0
        %1359 = vmatprep.subr.mxu0 0.0
        %1360 = vmatpush1.msra.mxu0 %v974
        %1361 = vmatprep.subr.mxu0 0.0
        %1362 = vmatpush1.msra.mxu0 %v975
        %1363 = vmatprep.subr.mxu0 0.0
        %1364 = vmatpush1.msra.mxu0 0.0
        %1365 = vmatprep.subr.mxu0 0.0
        %1366 = vmatpush1.msra.mxu0 0.0
        %1367 = vmatprep.subr.mxu0 0.0
        %1368 = vmatpush1.msra.mxu0 0.0
        %1369 = vmatprep.subr.mxu0 0.0
        %1370 = vmatpush1.msra.mxu0 0.0
        %1371 = vmatprep.subr.mxu0 0.0
        %1372 = vmatpush1.msra.mxu0 0.0
        %1373 = vmatprep.subr.mxu0 0.0
        %1374 = vmatpush1.msra.mxu0 0.0
        %1375 = vmatprep.subr.mxu0 0.0
        %1376 = vmatpush1.msra.mxu0 0.0
        %1377 = vmatprep.subr.mxu0 0.0
        %1378 = vmatpush1.msra.mxu0 0.0
        %1379 = vmatprep.subr.mxu0 0.0
        %1380 = vmatpush1.msra.mxu0 0.0
        %1381 = vmatprep.subr.mxu0 0.0
        %1382 = vmatpush1.msra.mxu0 0.0
        %1383 = vmatprep.subr.mxu0 0.0
        %1384 = vmatpush1.msra.mxu0 0.0
        %1385 = vmatprep.subr.mxu0 0.0
        %1386 = vmatpush1.msra.mxu0 0.0
        %1387 = vmatprep.subr.mxu0 0.0
        %1388 = vmatpush1.msra.mxu0 0.0
        %1389 = vmatprep.subr.mxu0 0.0
        %1390 = vmatpush1.msra.mxu0 0.0
        %1391 = vmatprep.subr.mxu0 0.0
        %1392 = vmatpush1.msra.mxu0 0.0
        %1393 = vmatprep.subr.mxu0 0.0
        %1394 = vmatpush1.msra.mxu0 0.0
        %1395 = vmatprep.subr.mxu0 0.0
        %1396 = vmatpush1.msra.mxu0 0.0
        %1397 = vmatprep.subr.mxu0 0.0
        %1398 = vmatpush1.msra.mxu0 0.0
        %1399 = vmatprep.subr.mxu0 0.0
        %1400 = vmatpush1.msra.mxu0 0.0
        %1401 = vmatprep.subr.mxu0 0.0
        %1402 = vmatpush1.msra.mxu0 0.0
        %1403 = vmatprep.subr.mxu0 0.0
        %1404 = vmatpush1.msra.mxu0 0.0
        %1405 = vmatprep.subr.mxu0 0.0
        %1406 = vmatpush1.msra.mxu0 0.0
        %1407 = vmatprep.subr.mxu0 0.0
        %1408 = vmatpush1.msra.mxu0 0.0
        %1409 = vmatprep.subr.mxu0 0.0
        %1410 = vmatpush1.msra.mxu0 0.0
        %1411 = vmatprep.subr.mxu0 0.0
        %1412 = vmatpush1.msra.mxu0 0.0
        %1413 = vmatprep.subr.mxu0 0.0
        %1414 = vmatpush1.msra.mxu0 0.0
        %1415 = vmatprep.subr.mxu0 0.0
        %1416 = vmatpush1.msra.mxu0 0.0
        %1417 = vmatprep.subr.mxu0 0.0
        %1418 = vmatpush1.msra.mxu0 0.0
        %1419 = vmatprep.subr.mxu0 0.0
        %1420 = vmatpush1.msra.mxu0 0.0
        %1421 = vmatprep.subr.mxu0 0.0
        %1422 = vmatpush1.msra.mxu0 0.0
        %1423 = vmatprep.mubr.f32.mxu0 0.0
        %1424 = vmatmul.mubr.f32.gmra.mrb[0].mxu0 %v1355
        %v1425 = vpop.f32.mrb[0].mxu0
        %v1426 = vadd.f32 0.0, %v1425
        %v1427 = vpop.f32.mrb[0].mxu0
        %1428 = vmatprep.mubr.f32.mxu0 0.0
        %1429 = vmatmul.mubr.f32.gmra.mrb[0].mxu0 %v1357
        %v1430 = vpop.f32.mrb[0].mxu0
        %v1431 = vadd.f32 0.0, %v1430
        %v1432 = vpop.f32.mrb[0].mxu0
        %1433 = vdwg.mxu0
        %v1434 = vmul.f32 %v449, %v1426
        %v1435 = vmul.f32 %v455, %v1431
        %1436 = vst.msk [vmem:[%s347 + $0x8] sm:$0xff] %vm1060, %v1434
        %1437 = vst.msk [vmem:[%s347 + $0x48] sm:$0xff] %vm1060, %v1435
        %1438 = vrot.lane.b32.xlu0 %v887, 48
        %v1439 = vpop.permute.xlu0 %1438
        %1440 = vrot.lane.b32.xlu0 %v893, 48
        %v1441 = vpop.permute.xlu0 %1440
        %v1442 = vsel %vm976, %v1439, 0
        %v1444 = vsel %vm976, %v1441, 0
        %1446 = vmatprep.subr.mxu0 0.0
        %1447 = vmatpush1.msra.mxu0 %v974
        %1448 = vmatprep.subr.mxu0 0.0
        %1449 = vmatpush1.msra.mxu0 %v975
        %1450 = vmatprep.subr.mxu0 0.0
        %1451 = vmatpush1.msra.mxu0 0.0
        %1452 = vmatprep.subr.mxu0 0.0
        %1453 = vmatpush1.msra.mxu0 0.0
        %1454 = vmatprep.subr.mxu0 0.0
        %1455 = vmatpush1.msra.mxu0 0.0
        %1456 = vmatprep.subr.mxu0 0.0
        %1457 = vmatpush1.msra.mxu0 0.0
        %1458 = vmatprep.subr.mxu0 0.0
        %1459 = vmatpush1.msra.mxu0 0.0
        %1460 = vmatprep.subr.mxu0 0.0
        %1461 = vmatpush1.msra.mxu0 0.0
        %1462 = vmatprep.subr.mxu0 0.0
        %1463 = vmatpush1.msra.mxu0 0.0
        %1464 = vmatprep.subr.mxu0 0.0
        %1465 = vmatpush1.msra.mxu0 0.0
        %1466 = vmatprep.subr.mxu0 0.0
        %1467 = vmatpush1.msra.mxu0 0.0
        %1468 = vmatprep.subr.mxu0 0.0
        %1469 = vmatpush1.msra.mxu0 0.0
        %1470 = vmatprep.subr.mxu0 0.0
        %1471 = vmatpush1.msra.mxu0 0.0
        %1472 = vmatprep.subr.mxu0 0.0
        %1473 = vmatpush1.msra.mxu0 0.0
        %1474 = vmatprep.subr.mxu0 0.0
        %1475 = vmatpush1.msra.mxu0 0.0
        %1476 = vmatprep.subr.mxu0 0.0
        %1477 = vmatpush1.msra.mxu0 0.0
        %1478 = vmatprep.subr.mxu0 0.0
        %1479 = vmatpush1.msra.mxu0 0.0
        %1480 = vmatprep.subr.mxu0 0.0
        %1481 = vmatpush1.msra.mxu0 0.0
        %1482 = vmatprep.subr.mxu0 0.0
        %1483 = vmatpush1.msra.mxu0 0.0
        %1484 = vmatprep.subr.mxu0 0.0
        %1485 = vmatpush1.msra.mxu0 0.0
        %1486 = vmatprep.subr.mxu0 0.0
        %1487 = vmatpush1.msra.mxu0 0.0
        %1488 = vmatprep.subr.mxu0 0.0
        %1489 = vmatpush1.msra.mxu0 0.0
        %1490 = vmatprep.subr.mxu0 0.0
        %1491 = vmatpush1.msra.mxu0 0.0
        %1492 = vmatprep.subr.mxu0 0.0
        %1493 = vmatpush1.msra.mxu0 0.0
        %1494 = vmatprep.subr.mxu0 0.0
        %1495 = vmatpush1.msra.mxu0 0.0
        %1496 = vmatprep.subr.mxu0 0.0
        %1497 = vmatpush1.msra.mxu0 0.0
        %1498 = vmatprep.subr.mxu0 0.0
        %1499 = vmatpush1.msra.mxu0 0.0
        %1500 = vmatprep.subr.mxu0 0.0
        %1501 = vmatpush1.msra.mxu0 0.0
        %1502 = vmatprep.subr.mxu0 0.0
        %1503 = vmatpush1.msra.mxu0 0.0
        %1504 = vmatprep.subr.mxu0 0.0
        %1505 = vmatpush1.msra.mxu0 0.0
        %1506 = vmatprep.subr.mxu0 0.0
        %1507 = vmatpush1.msra.mxu0 0.0
        %1508 = vmatprep.subr.mxu0 0.0
        %1509 = vmatpush1.msra.mxu0 0.0
        %1510 = vmatprep.mubr.f32.mxu0 0.0
        %1511 = vmatmul.mubr.f32.gmra.mrb[0].mxu0 %v1442
        %v1512 = vpop.f32.mrb[0].mxu0
        %v1513 = vadd.f32 0.0, %v1512
        %v1514 = vpop.f32.mrb[0].mxu0
        %1515 = vmatprep.mubr.f32.mxu0 0.0
        %1516 = vmatmul.mubr.f32.gmra.mrb[0].mxu0 %v1444
        %v1517 = vpop.f32.mrb[0].mxu0
        %v1518 = vadd.f32 0.0, %v1517
        %v1519 = vpop.f32.mrb[0].mxu0
        %1520 = vdwg.mxu0
        %1523 = vrot.lane.b32.xlu0 %v1513, 32
        %v1524 = vpop.permute.xlu0 %1523
        %1525 = vrot.lane.b32.xlu0 %v1518, 32
        %v1526 = vpop.permute.xlu0 %1525
        %v1529 = vmul.f32 %v449, %v1524
        %v1530 = vmul.f32 %v455, %v1526
        %1531 = vst.msk [vmem:[%s347 + $0x8] sm:$0xff] %vm1156, %v1529
        %1532 = vst.msk [vmem:[%s347 + $0x48] sm:$0xff] %vm1156, %v1530
        %1533 = vrot.lane.b32.xlu0 %v887, 32
        %v1534 = vpop.permute.xlu0 %1533
        %1535 = vrot.lane.b32.xlu0 %v893, 32
        %v1536 = vpop.permute.xlu0 %1535
        %v1537 = vsel %vm976, %v1534, 0
        %v1539 = vsel %vm976, %v1536, 0
        %1541 = vmatprep.subr.mxu0 0.0
        %1542 = vmatpush1.msra.mxu0 %v974
        %1543 = vmatprep.subr.mxu0 0.0
        %1544 = vmatpush1.msra.mxu0 %v975
        %1545 = vmatprep.subr.mxu0 0.0
        %1546 = vmatpush1.msra.mxu0 0.0
        %1547 = vmatprep.subr.mxu0 0.0
        %1548 = vmatpush1.msra.mxu0 0.0
        %1549 = vmatprep.subr.mxu0 0.0
        %1550 = vmatpush1.msra.mxu0 0.0
        %1551 = vmatprep.subr.mxu0 0.0
        %1552 = vmatpush1.msra.mxu0 0.0
        %1553 = vmatprep.subr.mxu0 0.0
        %1554 = vmatpush1.msra.mxu0 0.0
        %1555 = vmatprep.subr.mxu0 0.0
        %1556 = vmatpush1.msra.mxu0 0.0
        %1557 = vmatprep.subr.mxu0 0.0
        %1558 = vmatpush1.msra.mxu0 0.0
        %1559 = vmatprep.subr.mxu0 0.0
        %1560 = vmatpush1.msra.mxu0 0.0
        %1561 = vmatprep.subr.mxu0 0.0
        %1562 = vmatpush1.msra.mxu0 0.0
        %1563 = vmatprep.subr.mxu0 0.0
        %1564 = vmatpush1.msra.mxu0 0.0
        %1565 = vmatprep.subr.mxu0 0.0
        %1566 = vmatpush1.msra.mxu0 0.0
        %1567 = vmatprep.subr.mxu0 0.0
        %1568 = vmatpush1.msra.mxu0 0.0
        %1569 = vmatprep.subr.mxu0 0.0
        %1570 = vmatpush1.msra.mxu0 0.0
        %1571 = vmatprep.subr.mxu0 0.0
        %1572 = vmatpush1.msra.mxu0 0.0
        %1573 = vmatprep.subr.mxu0 0.0
        %1574 = vmatpush1.msra.mxu0 0.0
        %1575 = vmatprep.subr.mxu0 0.0
        %1576 = vmatpush1.msra.mxu0 0.0
        %1577 = vmatprep.subr.mxu0 0.0
        %1578 = vmatpush1.msra.mxu0 0.0
        %1579 = vmatprep.subr.mxu0 0.0
        %1580 = vmatpush1.msra.mxu0 0.0
        %1581 = vmatprep.subr.mxu0 0.0
        %1582 = vmatpush1.msra.mxu0 0.0
        %1583 = vmatprep.subr.mxu0 0.0
        %1584 = vmatpush1.msra.mxu0 0.0
        %1585 = vmatprep.subr.mxu0 0.0
        %1586 = vmatpush1.msra.mxu0 0.0
        %1587 = vmatprep.subr.mxu0 0.0
        %1588 = vmatpush1.msra.mxu0 0.0
        %1589 = vmatprep.subr.mxu0 0.0
        %1590 = vmatpush1.msra.mxu0 0.0
        %1591 = vmatprep.subr.mxu0 0.0
        %1592 = vmatpush1.msra.mxu0 0.0
        %1593 = vmatprep.subr.mxu0 0.0
        %1594 = vmatpush1.msra.mxu0 0.0
        %1595 = vmatprep.subr.mxu0 0.0
        %1596 = vmatpush1.msra.mxu0 0.0
        %1597 = vmatprep.subr.mxu0 0.0
        %1598 = vmatpush1.msra.mxu0 0.0
        %1599 = vmatprep.subr.mxu0 0.0
        %1600 = vmatpush1.msra.mxu0 0.0
        %1601 = vmatprep.subr.mxu0 0.0
        %1602 = vmatpush1.msra.mxu0 0.0
        %1603 = vmatprep.subr.mxu0 0.0
        %1604 = vmatpush1.msra.mxu0 0.0
        %1605 = vmatprep.mubr.f32.mxu0 0.0
        %1606 = vmatmul.mubr.f32.gmra.mrb[0].mxu0 %v1537
        %v1607 = vpop.f32.mrb[0].mxu0
        %v1608 = vadd.f32 0.0, %v1607
        %v1609 = vpop.f32.mrb[0].mxu0
        %1610 = vmatprep.mubr.f32.mxu0 0.0
        %1611 = vmatmul.mubr.f32.gmra.mrb[0].mxu0 %v1539
        %v1612 = vpop.f32.mrb[0].mxu0
        %v1613 = vadd.f32 0.0, %v1612
        %v1614 = vpop.f32.mrb[0].mxu0
        %1615 = vdwg.mxu0
        %1618 = vrot.lane.b32.xlu0 %v1608, 64
        %v1619 = vpop.permute.xlu0 %1618
        %1620 = vrot.lane.b32.xlu0 %v1613, 64
        %v1621 = vpop.permute.xlu0 %1620
        %v1624 = vmul.f32 %v449, %v1619
        %v1625 = vmul.f32 %v455, %v1621
        %1626 = vst.msk [vmem:[%s347 + $0x8] sm:$0xff] %vm1252, %v1624
        %1627 = vst.msk [vmem:[%s347 + $0x48] sm:$0xff] %vm1252, %v1625
        %1628 = vrot.lane.b32.xlu0 %v887, 16
        %v1629 = vpop.permute.xlu0 %1628
        %1630 = vrot.lane.b32.xlu0 %v893, 16
        %v1631 = vpop.permute.xlu0 %1630
        %v1632 = vsel %vm976, %v1629, 0
        %v1634 = vsel %vm976, %v1631, 0
        %1636 = vmatprep.subr.mxu0 0.0
        %1637 = vmatpush1.msra.mxu0 %v974
        %1638 = vmatprep.subr.mxu0 0.0
        %1639 = vmatpush1.msra.mxu0 %v975
        %1640 = vmatprep.subr.mxu0 0.0
        %1641 = vmatpush1.msra.mxu0 0.0
        %1642 = vmatprep.subr.mxu0 0.0
        %1643 = vmatpush1.msra.mxu0 0.0
        %1644 = vmatprep.subr.mxu0 0.0
        %1645 = vmatpush1.msra.mxu0 0.0
        %1646 = vmatprep.subr.mxu0 0.0
        %1647 = vmatpush1.msra.mxu0 0.0
        %1648 = vmatprep.subr.mxu0 0.0
        %1649 = vmatpush1.msra.mxu0 0.0
        %1650 = vmatprep.subr.mxu0 0.0
        %1651 = vmatpush1.msra.mxu0 0.0
        %1652 = vmatprep.subr.mxu0 0.0
        %1653 = vmatpush1.msra.mxu0 0.0
        %1654 = vmatprep.subr.mxu0 0.0
        %1655 = vmatpush1.msra.mxu0 0.0
        %1656 = vmatprep.subr.mxu0 0.0
        %1657 = vmatpush1.msra.mxu0 0.0
        %1658 = vmatprep.subr.mxu0 0.0
        %1659 = vmatpush1.msra.mxu0 0.0
        %1660 = vmatprep.subr.mxu0 0.0
        %1661 = vmatpush1.msra.mxu0 0.0
        %1662 = vmatprep.subr.mxu0 0.0
        %1663 = vmatpush1.msra.mxu0 0.0
        %1664 = vmatprep.subr.mxu0 0.0
        %1665 = vmatpush1.msra.mxu0 0.0
        %1666 = vmatprep.subr.mxu0 0.0
        %1667 = vmatpush1.msra.mxu0 0.0
        %1668 = vmatprep.subr.mxu0 0.0
        %1669 = vmatpush1.msra.mxu0 0.0
        %1670 = vmatprep.subr.mxu0 0.0
        %1671 = vmatpush1.msra.mxu0 0.0
        %1672 = vmatprep.subr.mxu0 0.0
        %1673 = vmatpush1.msra.mxu0 0.0
        %1674 = vmatprep.subr.mxu0 0.0
        %1675 = vmatpush1.msra.mxu0 0.0
        %1676 = vmatprep.subr.mxu0 0.0
        %1677 = vmatpush1.msra.mxu0 0.0
        %1678 = vmatprep.subr.mxu0 0.0
        %1679 = vmatpush1.msra.mxu0 0.0
        %1680 = vmatprep.subr.mxu0 0.0
        %1681 = vmatpush1.msra.mxu0 0.0
        %1682 = vmatprep.subr.mxu0 0.0
        %1683 = vmatpush1.msra.mxu0 0.0
        %1684 = vmatprep.subr.mxu0 0.0
        %1685 = vmatpush1.msra.mxu0 0.0
        %1686 = vmatprep.subr.mxu0 0.0
        %1687 = vmatpush1.msra.mxu0 0.0
        %1688 = vmatprep.subr.mxu0 0.0
        %1689 = vmatpush1.msra.mxu0 0.0
        %1690 = vmatprep.subr.mxu0 0.0
        %1691 = vmatpush1.msra.mxu0 0.0
        %1692 = vmatprep.subr.mxu0 0.0
        %1693 = vmatpush1.msra.mxu0 0.0
        %1694 = vmatprep.subr.mxu0 0.0
        %1695 = vmatpush1.msra.mxu0 0.0
        %1696 = vmatprep.subr.mxu0 0.0
        %1697 = vmatpush1.msra.mxu0 0.0
        %1698 = vmatprep.subr.mxu0 0.0
        %1699 = vmatpush1.msra.mxu0 0.0
        %1700 = vmatprep.mubr.f32.mxu0 0.0
        %1701 = vmatmul.mubr.f32.gmra.mrb[0].mxu0 %v1632
        %v1702 = vpop.f32.mrb[0].mxu0
        %v1703 = vadd.f32 0.0, %v1702
        %v1704 = vpop.f32.mrb[0].mxu0
        %1705 = vmatprep.mubr.f32.mxu0 0.0
        %1706 = vmatmul.mubr.f32.gmra.mrb[0].mxu0 %v1634
        %v1707 = vpop.f32.mrb[0].mxu0
        %v1708 = vadd.f32 0.0, %v1707
        %v1709 = vpop.f32.mrb[0].mxu0
        %1710 = vdwg.mxu0
        %1713 = vrot.lane.b32.xlu0 %v1703, 96
        %v1714 = vpop.permute.xlu0 %1713
        %1715 = vrot.lane.b32.xlu0 %v1708, 96
        %v1716 = vpop.permute.xlu0 %1715
        %v1719 = vmul.f32 %v449, %v1714
        %v1720 = vmul.f32 %v455, %v1716
        %1721 = vst.msk [vmem:[%s347 + $0x8] sm:$0xff] %vm1348, %v1719
        %1722 = vst.msk [vmem:[%s347 + $0x48] sm:$0xff] %vm1348, %v1720
        %v1724 = vsel %vm976, %v889, 0
        %v1727 = vsel %vm976, %v895, 0
        %1729 = vmatprep.subr.mxu0 0.0
        %1730 = vmatpush1.msra.mxu0 %v974
        %1731 = vmatprep.subr.mxu0 0.0
        %1732 = vmatpush1.msra.mxu0 %v975
        %1733 = vmatprep.subr.mxu0 0.0
        %1734 = vmatpush1.msra.mxu0 0.0
        %1735 = vmatprep.subr.mxu0 0.0
        %1736 = vmatpush1.msra.mxu0 0.0
        %1737 = vmatprep.subr.mxu0 0.0
        %1738 = vmatpush1.msra.mxu0 0.0
        %1739 = vmatprep.subr.mxu0 0.0
        %1740 = vmatpush1.msra.mxu0 0.0
        %1741 = vmatprep.subr.mxu0 0.0
        %1742 = vmatpush1.msra.mxu0 0.0
        %1743 = vmatprep.subr.mxu0 0.0
        %1744 = vmatpush1.msra.mxu0 0.0
        %1745 = vmatprep.subr.mxu0 0.0
        %1746 = vmatpush1.msra.mxu0 0.0
        %1747 = vmatprep.subr.mxu0 0.0
        %1748 = vmatpush1.msra.mxu0 0.0
        %1749 = vmatprep.subr.mxu0 0.0
        %1750 = vmatpush1.msra.mxu0 0.0
        %1751 = vmatprep.subr.mxu0 0.0
        %1752 = vmatpush1.msra.mxu0 0.0
        %1753 = vmatprep.subr.mxu0 0.0
        %1754 = vmatpush1.msra.mxu0 0.0
        %1755 = vmatprep.subr.mxu0 0.0
        %1756 = vmatpush1.msra.mxu0 0.0
        %1757 = vmatprep.subr.mxu0 0.0
        %1758 = vmatpush1.msra.mxu0 0.0
        %1759 = vmatprep.subr.mxu0 0.0
        %1760 = vmatpush1.msra.mxu0 0.0
        %1761 = vmatprep.subr.mxu0 0.0
        %1762 = vmatpush1.msra.mxu0 0.0
        %1763 = vmatprep.subr.mxu0 0.0
        %1764 = vmatpush1.msra.mxu0 0.0
        %1765 = vmatprep.subr.mxu0 0.0
        %1766 = vmatpush1.msra.mxu0 0.0
        %1767 = vmatprep.subr.mxu0 0.0
        %1768 = vmatpush1.msra.mxu0 0.0
        %1769 = vmatprep.subr.mxu0 0.0
        %1770 = vmatpush1.msra.mxu0 0.0
        %1771 = vmatprep.subr.mxu0 0.0
        %1772 = vmatpush1.msra.mxu0 0.0
        %1773 = vmatprep.subr.mxu0 0.0
        %1774 = vmatpush1.msra.mxu0 0.0
        %1775 = vmatprep.subr.mxu0 0.0
        %1776 = vmatpush1.msra.mxu0 0.0
        %1777 = vmatprep.subr.mxu0 0.0
        %1778 = vmatpush1.msra.mxu0 0.0
        %1779 = vmatprep.subr.mxu0 0.0
        %1780 = vmatpush1.msra.mxu0 0.0
        %1781 = vmatprep.subr.mxu0 0.0
        %1782 = vmatpush1.msra.mxu0 0.0
        %1783 = vmatprep.subr.mxu0 0.0
        %1784 = vmatpush1.msra.mxu0 0.0
        %1785 = vmatprep.subr.mxu0 0.0
        %1786 = vmatpush1.msra.mxu0 0.0
        %1787 = vmatprep.subr.mxu0 0.0
        %1788 = vmatpush1.msra.mxu0 0.0
        %1789 = vmatprep.subr.mxu0 0.0
        %1790 = vmatpush1.msra.mxu0 0.0
        %1791 = vmatprep.subr.mxu0 0.0
        %1792 = vmatpush1.msra.mxu0 0.0
        %1793 = vmatprep.mubr.f32.mxu0 0.0
        %1794 = vmatmul.mubr.f32.gmra.mrb[0].mxu0 %v1724
        %v1795 = vpop.f32.mrb[0].mxu0
        %v1796 = vadd.f32 0.0, %v1795
        %v1797 = vpop.f32.mrb[0].mxu0
        %1798 = vmatprep.mubr.f32.mxu0 0.0
        %1799 = vmatmul.mubr.f32.gmra.mrb[0].mxu0 %v1727
        %v1800 = vpop.f32.mrb[0].mxu0
        %v1801 = vadd.f32 0.0, %v1800
        %v1802 = vpop.f32.mrb[0].mxu0
        %1803 = vdwg.mxu0
        %v1804 = vmul.f32 %v524, %v1796
        %v1805 = vmul.f32 %v530, %v1801
        %1806 = vst.msk [vmem:[%s347 + $0x10] sm:$0xff] %vm1060, %v1804
        %1807 = vst.msk [vmem:[%s347 + $0x50] sm:$0xff] %vm1060, %v1805
        %1808 = vrot.lane.b32.xlu0 %v889, 112
        %v1809 = vpop.permute.xlu0 %1808
        %1810 = vrot.lane.b32.xlu0 %v895, 112
        %v1811 = vpop.permute.xlu0 %1810
        %v1812 = vsel %vm976, %v1809, 0
        %v1814 = vsel %vm976, %v1811, 0
        %1816 = vmatprep.subr.mxu0 0.0
        %1817 = vmatpush1.msra.mxu0 %v974
        %1818 = vmatprep.subr.mxu0 0.0
        %1819 = vmatpush1.msra.mxu0 %v975
        %1820 = vmatprep.subr.mxu0 0.0
        %1821 = vmatpush1.msra.mxu0 0.0
        %1822 = vmatprep.subr.mxu0 0.0
        %1823 = vmatpush1.msra.mxu0 0.0
        %1824 = vmatprep.subr.mxu0 0.0
        %1825 = vmatpush1.msra.mxu0 0.0
        %1826 = vmatprep.subr.mxu0 0.0
        %1827 = vmatpush1.msra.mxu0 0.0
        %1828 = vmatprep.subr.mxu0 0.0
        %1829 = vmatpush1.msra.mxu0 0.0
        %1830 = vmatprep.subr.mxu0 0.0
        %1831 = vmatpush1.msra.mxu0 0.0
        %1832 = vmatprep.subr.mxu0 0.0
        %1833 = vmatpush1.msra.mxu0 0.0
        %1834 = vmatprep.subr.mxu0 0.0
        %1835 = vmatpush1.msra.mxu0 0.0
        %1836 = vmatprep.subr.mxu0 0.0
        %1837 = vmatpush1.msra.mxu0 0.0
        %1838 = vmatprep.subr.mxu0 0.0
        %1839 = vmatpush1.msra.mxu0 0.0
        %1840 = vmatprep.subr.mxu0 0.0
        %1841 = vmatpush1.msra.mxu0 0.0
        %1842 = vmatprep.subr.mxu0 0.0
        %1843 = vmatpush1.msra.mxu0 0.0
        %1844 = vmatprep.subr.mxu0 0.0
        %1845 = vmatpush1.msra.mxu0 0.0
        %1846 = vmatprep.subr.mxu0 0.0
        %1847 = vmatpush1.msra.mxu0 0.0
        %1848 = vmatprep.subr.mxu0 0.0
        %1849 = vmatpush1.msra.mxu0 0.0
        %1850 = vmatprep.subr.mxu0 0.0
        %1851 = vmatpush1.msra.mxu0 0.0
        %1852 = vmatprep.subr.mxu0 0.0
        %1853 = vmatpush1.msra.mxu0 0.0
        %1854 = vmatprep.subr.mxu0 0.0
        %1855 = vmatpush1.msra.mxu0 0.0
        %1856 = vmatprep.subr.mxu0 0.0
        %1857 = vmatpush1.msra.mxu0 0.0
        %1858 = vmatprep.subr.mxu0 0.0
        %1859 = vmatpush1.msra.mxu0 0.0
        %1860 = vmatprep.subr.mxu0 0.0
        %1861 = vmatpush1.msra.mxu0 0.0
        %1862 = vmatprep.subr.mxu0 0.0
        %1863 = vmatpush1.msra.mxu0 0.0
        %1864 = vmatprep.subr.mxu0 0.0
        %1865 = vmatpush1.msra.mxu0 0.0
        %1866 = vmatprep.subr.mxu0 0.0
        %1867 = vmatpush1.msra.mxu0 0.0
        %1868 = vmatprep.subr.mxu0 0.0
        %1869 = vmatpush1.msra.mxu0 0.0
        %1870 = vmatprep.subr.mxu0 0.0
        %1871 = vmatpush1.msra.mxu0 0.0
        %1872 = vmatprep.subr.mxu0 0.0
        %1873 = vmatpush1.msra.mxu0 0.0
        %1874 = vmatprep.subr.mxu0 0.0
        %1875 = vmatpush1.msra.mxu0 0.0
        %1876 = vmatprep.subr.mxu0 0.0
        %1877 = vmatpush1.msra.mxu0 0.0
        %1878 = vmatprep.subr.mxu0 0.0
        %1879 = vmatpush1.msra.mxu0 0.0
        %1880 = vmatprep.mubr.f32.mxu0 0.0
        %1881 = vmatmul.mubr.f32.gmra.mrb[0].mxu0 %v1812
        %v1882 = vpop.f32.mrb[0].mxu0
        %v1883 = vadd.f32 0.0, %v1882
        %v1884 = vpop.f32.mrb[0].mxu0
        %1885 = vmatprep.mubr.f32.mxu0 0.0
        %1886 = vmatmul.mubr.f32.gmra.mrb[0].mxu0 %v1814
        %v1887 = vpop.f32.mrb[0].mxu0
        %v1888 = vadd.f32 0.0, %v1887
        %v1889 = vpop.f32.mrb[0].mxu0
        %1890 = vdwg.mxu0
        %1893 = vrot.lane.b32.xlu0 %v1883, 32
        %v1894 = vpop.permute.xlu0 %1893
        %1895 = vrot.lane.b32.xlu0 %v1888, 32
        %v1896 = vpop.permute.xlu0 %1895
        %v1899 = vmul.f32 %v524, %v1894
        %v1900 = vmul.f32 %v530, %v1896
        %1901 = vst.msk [vmem:[%s347 + $0x10] sm:$0xff] %vm1156, %v1899
        %1902 = vst.msk [vmem:[%s347 + $0x50] sm:$0xff] %vm1156, %v1900
        %1903 = vrot.lane.b32.xlu0 %v889, 96
        %v1904 = vpop.permute.xlu0 %1903
        %1905 = vrot.lane.b32.xlu0 %v895, 96
        %v1906 = vpop.permute.xlu0 %1905
        %v1907 = vsel %vm976, %v1904, 0
        %v1909 = vsel %vm976, %v1906, 0
        %1911 = vmatprep.subr.mxu0 0.0
        %1912 = vmatpush1.msra.mxu0 %v974
        %1913 = vmatprep.subr.mxu0 0.0
        %1914 = vmatpush1.msra.mxu0 %v975
        %1915 = vmatprep.subr.mxu0 0.0
        %1916 = vmatpush1.msra.mxu0 0.0
        %1917 = vmatprep.subr.mxu0 0.0
        %1918 = vmatpush1.msra.mxu0 0.0
        %1919 = vmatprep.subr.mxu0 0.0
        %1920 = vmatpush1.msra.mxu0 0.0
        %1921 = vmatprep.subr.mxu0 0.0
        %1922 = vmatpush1.msra.mxu0 0.0
        %1923 = vmatprep.subr.mxu0 0.0
        %1924 = vmatpush1.msra.mxu0 0.0
        %1925 = vmatprep.subr.mxu0 0.0
        %1926 = vmatpush1.msra.mxu0 0.0
        %1927 = vmatprep.subr.mxu0 0.0
        %1928 = vmatpush1.msra.mxu0 0.0
        %1929 = vmatprep.subr.mxu0 0.0
        %1930 = vmatpush1.msra.mxu0 0.0
        %1931 = vmatprep.subr.mxu0 0.0
        %1932 = vmatpush1.msra.mxu0 0.0
        %1933 = vmatprep.subr.mxu0 0.0
        %1934 = vmatpush1.msra.mxu0 0.0
        %1935 = vmatprep.subr.mxu0 0.0
        %1936 = vmatpush1.msra.mxu0 0.0
        %1937 = vmatprep.subr.mxu0 0.0
        %1938 = vmatpush1.msra.mxu0 0.0
        %1939 = vmatprep.subr.mxu0 0.0
        %1940 = vmatpush1.msra.mxu0 0.0
        %1941 = vmatprep.subr.mxu0 0.0
        %1942 = vmatpush1.msra.mxu0 0.0
        %1943 = vmatprep.subr.mxu0 0.0
        %1944 = vmatpush1.msra.mxu0 0.0
        %1945 = vmatprep.subr.mxu0 0.0
        %1946 = vmatpush1.msra.mxu0 0.0
        %1947 = vmatprep.subr.mxu0 0.0
        %1948 = vmatpush1.msra.mxu0 0.0
        %1949 = vmatprep.subr.mxu0 0.0
        %1950 = vmatpush1.msra.mxu0 0.0
        %1951 = vmatprep.subr.mxu0 0.0
        %1952 = vmatpush1.msra.mxu0 0.0
        %1953 = vmatprep.subr.mxu0 0.0
        %1954 = vmatpush1.msra.mxu0 0.0
        %1955 = vmatprep.subr.mxu0 0.0
        %1956 = vmatpush1.msra.mxu0 0.0
        %1957 = vmatprep.subr.mxu0 0.0
        %1958 = vmatpush1.msra.mxu0 0.0
        %1959 = vmatprep.subr.mxu0 0.0
        %1960 = vmatpush1.msra.mxu0 0.0
        %1961 = vmatprep.subr.mxu0 0.0
        %1962 = vmatpush1.msra.mxu0 0.0
        %1963 = vmatprep.subr.mxu0 0.0
        %1964 = vmatpush1.msra.mxu0 0.0
        %1965 = vmatprep.subr.mxu0 0.0
        %1966 = vmatpush1.msra.mxu0 0.0
        %1967 = vmatprep.subr.mxu0 0.0
        %1968 = vmatpush1.msra.mxu0 0.0
        %1969 = vmatprep.subr.mxu0 0.0
        %1970 = vmatpush1.msra.mxu0 0.0
        %1971 = vmatprep.subr.mxu0 0.0
        %1972 = vmatpush1.msra.mxu0 0.0
        %1973 = vmatprep.subr.mxu0 0.0
        %1974 = vmatpush1.msra.mxu0 0.0
        %1975 = vmatprep.mubr.f32.mxu0 0.0
        %1976 = vmatmul.mubr.f32.gmra.mrb[0].mxu0 %v1907
        %v1977 = vpop.f32.mrb[0].mxu0
        %v1978 = vadd.f32 0.0, %v1977
        %v1979 = vpop.f32.mrb[0].mxu0
        %1980 = vmatprep.mubr.f32.mxu0 0.0
        %1981 = vmatmul.mubr.f32.gmra.mrb[0].mxu0 %v1909
        %v1982 = vpop.f32.mrb[0].mxu0
        %v1983 = vadd.f32 0.0, %v1982
        %v1984 = vpop.f32.mrb[0].mxu0
        %1985 = vdwg.mxu0
        %1988 = vrot.lane.b32.xlu0 %v1978, 64
        %v1989 = vpop.permute.xlu0 %1988
        %1990 = vrot.lane.b32.xlu0 %v1983, 64
        %v1991 = vpop.permute.xlu0 %1990
        %v1994 = vmul.f32 %v524, %v1989
        %v1995 = vmul.f32 %v530, %v1991
        %1996 = vst.msk [vmem:[%s347 + $0x10] sm:$0xff] %vm1252, %v1994
        %1997 = vst.msk [vmem:[%s347 + $0x50] sm:$0xff] %vm1252, %v1995
        %1998 = vrot.lane.b32.xlu0 %v889, 80
        %v1999 = vpop.permute.xlu0 %1998
        %2000 = vrot.lane.b32.xlu0 %v895, 80
        %v2001 = vpop.permute.xlu0 %2000
        %v2002 = vsel %vm976, %v1999, 0
        %v2004 = vsel %vm976, %v2001, 0
        %2006 = vmatprep.subr.mxu0 0.0
        %2007 = vmatpush1.msra.mxu0 %v974
        %2008 = vmatprep.subr.mxu0 0.0
        %2009 = vmatpush1.msra.mxu0 %v975
        %2010 = vmatprep.subr.mxu0 0.0
        %2011 = vmatpush1.msra.mxu0 0.0
        %2012 = vmatprep.subr.mxu0 0.0
        %2013 = vmatpush1.msra.mxu0 0.0
        %2014 = vmatprep.subr.mxu0 0.0
        %2015 = vmatpush1.msra.mxu0 0.0
        %2016 = vmatprep.subr.mxu0 0.0
        %2017 = vmatpush1.msra.mxu0 0.0
        %2018 = vmatprep.subr.mxu0 0.0
        %2019 = vmatpush1.msra.mxu0 0.0
        %2020 = vmatprep.subr.mxu0 0.0
        %2021 = vmatpush1.msra.mxu0 0.0
        %2022 = vmatprep.subr.mxu0 0.0
        %2023 = vmatpush1.msra.mxu0 0.0
        %2024 = vmatprep.subr.mxu0 0.0
        %2025 = vmatpush1.msra.mxu0 0.0
        %2026 = vmatprep.subr.mxu0 0.0
        %2027 = vmatpush1.msra.mxu0 0.0
        %2028 = vmatprep.subr.mxu0 0.0
        %2029 = vmatpush1.msra.mxu0 0.0
        %2030 = vmatprep.subr.mxu0 0.0
        %2031 = vmatpush1.msra.mxu0 0.0
        %2032 = vmatprep.subr.mxu0 0.0
        %2033 = vmatpush1.msra.mxu0 0.0
        %2034 = vmatprep.subr.mxu0 0.0
        %2035 = vmatpush1.msra.mxu0 0.0
        %2036 = vmatprep.subr.mxu0 0.0
        %2037 = vmatpush1.msra.mxu0 0.0
        %2038 = vmatprep.subr.mxu0 0.0
        %2039 = vmatpush1.msra.mxu0 0.0
        %2040 = vmatprep.subr.mxu0 0.0
        %2041 = vmatpush1.msra.mxu0 0.0
        %2042 = vmatprep.subr.mxu0 0.0
        %2043 = vmatpush1.msra.mxu0 0.0
        %2044 = vmatprep.subr.mxu0 0.0
        %2045 = vmatpush1.msra.mxu0 0.0
        %2046 = vmatprep.subr.mxu0 0.0
        %2047 = vmatpush1.msra.mxu0 0.0
        %2048 = vmatprep.subr.mxu0 0.0
        %2049 = vmatpush1.msra.mxu0 0.0
        %2050 = vmatprep.subr.mxu0 0.0
        %2051 = vmatpush1.msra.mxu0 0.0
        %2052 = vmatprep.subr.mxu0 0.0
        %2053 = vmatpush1.msra.mxu0 0.0
        %2054 = vmatprep.subr.mxu0 0.0
        %2055 = vmatpush1.msra.mxu0 0.0
        %2056 = vmatprep.subr.mxu0 0.0
        %2057 = vmatpush1.msra.mxu0 0.0
        %2058 = vmatprep.subr.mxu0 0.0
        %2059 = vmatpush1.msra.mxu0 0.0
        %2060 = vmatprep.subr.mxu0 0.0
        %2061 = vmatpush1.msra.mxu0 0.0
        %2062 = vmatprep.subr.mxu0 0.0
        %2063 = vmatpush1.msra.mxu0 0.0
        %2064 = vmatprep.subr.mxu0 0.0
        %2065 = vmatpush1.msra.mxu0 0.0
        %2066 = vmatprep.subr.mxu0 0.0
        %2067 = vmatpush1.msra.mxu0 0.0
        %2068 = vmatprep.subr.mxu0 0.0
        %2069 = vmatpush1.msra.mxu0 0.0
        %2070 = vmatprep.mubr.f32.mxu0 0.0
        %2071 = vmatmul.mubr.f32.gmra.mrb[0].mxu0 %v2002
        %v2072 = vpop.f32.mrb[0].mxu0
        %v2073 = vadd.f32 0.0, %v2072
        %v2074 = vpop.f32.mrb[0].mxu0
        %2075 = vmatprep.mubr.f32.mxu0 0.0
        %2076 = vmatmul.mubr.f32.gmra.mrb[0].mxu0 %v2004
        %v2077 = vpop.f32.mrb[0].mxu0
        %v2078 = vadd.f32 0.0, %v2077
        %v2079 = vpop.f32.mrb[0].mxu0
        %2080 = vdwg.mxu0
        %2083 = vrot.lane.b32.xlu0 %v2073, 96
        %v2084 = vpop.permute.xlu0 %2083
        %2085 = vrot.lane.b32.xlu0 %v2078, 96
        %v2086 = vpop.permute.xlu0 %2085
        %v2089 = vmul.f32 %v524, %v2084
        %v2090 = vmul.f32 %v530, %v2086
        %2091 = vst.msk [vmem:[%s347 + $0x10] sm:$0xff] %vm1348, %v2089
        %2092 = vst.msk [vmem:[%s347 + $0x50] sm:$0xff] %vm1348, %v2090
        %2093 = vrot.lane.b32.xlu0 %v889, 64
        %v2094 = vpop.permute.xlu0 %2093
        %2095 = vrot.lane.b32.xlu0 %v895, 64
        %v2096 = vpop.permute.xlu0 %2095
        %v2097 = vsel %vm976, %v2094, 0
        %v2099 = vsel %vm976, %v2096, 0
        %2101 = vmatprep.subr.mxu0 0.0
        %2102 = vmatpush1.msra.mxu0 %v974
        %2103 = vmatprep.subr.mxu0 0.0
        %2104 = vmatpush1.msra.mxu0 %v975
        %2105 = vmatprep.subr.mxu0 0.0
        %2106 = vmatpush1.msra.mxu0 0.0
        %2107 = vmatprep.subr.mxu0 0.0
        %2108 = vmatpush1.msra.mxu0 0.0
        %2109 = vmatprep.subr.mxu0 0.0
        %2110 = vmatpush1.msra.mxu0 0.0
        %2111 = vmatprep.subr.mxu0 0.0
        %2112 = vmatpush1.msra.mxu0 0.0
        %2113 = vmatprep.subr.mxu0 0.0
        %2114 = vmatpush1.msra.mxu0 0.0
        %2115 = vmatprep.subr.mxu0 0.0
        %2116 = vmatpush1.msra.mxu0 0.0
        %2117 = vmatprep.subr.mxu0 0.0
        %2118 = vmatpush1.msra.mxu0 0.0
        %2119 = vmatprep.subr.mxu0 0.0
        %2120 = vmatpush1.msra.mxu0 0.0
        %2121 = vmatprep.subr.mxu0 0.0
        %2122 = vmatpush1.msra.mxu0 0.0
        %2123 = vmatprep.subr.mxu0 0.0
        %2124 = vmatpush1.msra.mxu0 0.0
        %2125 = vmatprep.subr.mxu0 0.0
        %2126 = vmatpush1.msra.mxu0 0.0
        %2127 = vmatprep.subr.mxu0 0.0
        %2128 = vmatpush1.msra.mxu0 0.0
        %2129 = vmatprep.subr.mxu0 0.0
        %2130 = vmatpush1.msra.mxu0 0.0
        %2131 = vmatprep.subr.mxu0 0.0
        %2132 = vmatpush1.msra.mxu0 0.0
        %2133 = vmatprep.subr.mxu0 0.0
        %2134 = vmatpush1.msra.mxu0 0.0
        %2135 = vmatprep.subr.mxu0 0.0
        %2136 = vmatpush1.msra.mxu0 0.0
        %2137 = vmatprep.subr.mxu0 0.0
        %2138 = vmatpush1.msra.mxu0 0.0
        %2139 = vmatprep.subr.mxu0 0.0
        %2140 = vmatpush1.msra.mxu0 0.0
        %2141 = vmatprep.subr.mxu0 0.0
        %2142 = vmatpush1.msra.mxu0 0.0
        %2143 = vmatprep.subr.mxu0 0.0
        %2144 = vmatpush1.msra.mxu0 0.0
        %2145 = vmatprep.subr.mxu0 0.0
        %2146 = vmatpush1.msra.mxu0 0.0
        %2147 = vmatprep.subr.mxu0 0.0
        %2148 = vmatpush1.msra.mxu0 0.0
        %2149 = vmatprep.subr.mxu0 0.0
        %2150 = vmatpush1.msra.mxu0 0.0
        %2151 = vmatprep.subr.mxu0 0.0
        %2152 = vmatpush1.msra.mxu0 0.0
        %2153 = vmatprep.subr.mxu0 0.0
        %2154 = vmatpush1.msra.mxu0 0.0
        %2155 = vmatprep.subr.mxu0 0.0
        %2156 = vmatpush1.msra.mxu0 0.0
        %2157 = vmatprep.subr.mxu0 0.0
        %2158 = vmatpush1.msra.mxu0 0.0
        %2159 = vmatprep.subr.mxu0 0.0
        %2160 = vmatpush1.msra.mxu0 0.0
        %2161 = vmatprep.subr.mxu0 0.0
        %2162 = vmatpush1.msra.mxu0 0.0
        %2163 = vmatprep.subr.mxu0 0.0
        %2164 = vmatpush1.msra.mxu0 0.0
        %2165 = vmatprep.mubr.f32.mxu0 0.0
        %2166 = vmatmul.mubr.f32.gmra.mrb[0].mxu0 %v2097
        %v2167 = vpop.f32.mrb[0].mxu0
        %v2168 = vadd.f32 0.0, %v2167
        %v2169 = vpop.f32.mrb[0].mxu0
        %2170 = vmatprep.mubr.f32.mxu0 0.0
        %2171 = vmatmul.mubr.f32.gmra.mrb[0].mxu0 %v2099
        %v2172 = vpop.f32.mrb[0].mxu0
        %v2173 = vadd.f32 0.0, %v2172
        %v2174 = vpop.f32.mrb[0].mxu0
        %2175 = vdwg.mxu0
        %v2176 = vmul.f32 %v526, %v2168
        %v2177 = vmul.f32 %v532, %v2173
        %2178 = vst.msk [vmem:[%s347 + $0x18] sm:$0xff] %vm1060, %v2176
        %2179 = vst.msk [vmem:[%s347 + $0x58] sm:$0xff] %vm1060, %v2177
        %2180 = vrot.lane.b32.xlu0 %v889, 48
        %v2181 = vpop.permute.xlu0 %2180
        %2182 = vrot.lane.b32.xlu0 %v895, 48
        %v2183 = vpop.permute.xlu0 %2182
        %v2184 = vsel %vm976, %v2181, 0
        %v2186 = vsel %vm976, %v2183, 0
        %2188 = vmatprep.subr.mxu0 0.0
        %2189 = vmatpush1.msra.mxu0 %v974
        %2190 = vmatprep.subr.mxu0 0.0
        %2191 = vmatpush1.msra.mxu0 %v975
        %2192 = vmatprep.subr.mxu0 0.0
        %2193 = vmatpush1.msra.mxu0 0.0
        %2194 = vmatprep.subr.mxu0 0.0
        %2195 = vmatpush1.msra.mxu0 0.0
        %2196 = vmatprep.subr.mxu0 0.0
        %2197 = vmatpush1.msra.mxu0 0.0
        %2198 = vmatprep.subr.mxu0 0.0
        %2199 = vmatpush1.msra.mxu0 0.0
        %2200 = vmatprep.subr.mxu0 0.0
        %2201 = vmatpush1.msra.mxu0 0.0
        %2202 = vmatprep.subr.mxu0 0.0
        %2203 = vmatpush1.msra.mxu0 0.0
        %2204 = vmatprep.subr.mxu0 0.0
        %2205 = vmatpush1.msra.mxu0 0.0
        %2206 = vmatprep.subr.mxu0 0.0
        %2207 = vmatpush1.msra.mxu0 0.0
        %2208 = vmatprep.subr.mxu0 0.0
        %2209 = vmatpush1.msra.mxu0 0.0
        %2210 = vmatprep.subr.mxu0 0.0
        %2211 = vmatpush1.msra.mxu0 0.0
        %2212 = vmatprep.subr.mxu0 0.0
        %2213 = vmatpush1.msra.mxu0 0.0
        %2214 = vmatprep.subr.mxu0 0.0
        %2215 = vmatpush1.msra.mxu0 0.0
        %2216 = vmatprep.subr.mxu0 0.0
        %2217 = vmatpush1.msra.mxu0 0.0
        %2218 = vmatprep.subr.mxu0 0.0
        %2219 = vmatpush1.msra.mxu0 0.0
        %2220 = vmatprep.subr.mxu0 0.0
        %2221 = vmatpush1.msra.mxu0 0.0
        %2222 = vmatprep.subr.mxu0 0.0
        %2223 = vmatpush1.msra.mxu0 0.0
        %2224 = vmatprep.subr.mxu0 0.0
        %2225 = vmatpush1.msra.mxu0 0.0
        %2226 = vmatprep.subr.mxu0 0.0
        %2227 = vmatpush1.msra.mxu0 0.0
        %2228 = vmatprep.subr.mxu0 0.0
        %2229 = vmatpush1.msra.mxu0 0.0
        %2230 = vmatprep.subr.mxu0 0.0
        %2231 = vmatpush1.msra.mxu0 0.0
        %2232 = vmatprep.subr.mxu0 0.0
        %2233 = vmatpush1.msra.mxu0 0.0
        %2234 = vmatprep.subr.mxu0 0.0
        %2235 = vmatpush1.msra.mxu0 0.0
        %2236 = vmatprep.subr.mxu0 0.0
        %2237 = vmatpush1.msra.mxu0 0.0
        %2238 = vmatprep.subr.mxu0 0.0
        %2239 = vmatpush1.msra.mxu0 0.0
        %2240 = vmatprep.subr.mxu0 0.0
        %2241 = vmatpush1.msra.mxu0 0.0
        %2242 = vmatprep.subr.mxu0 0.0
        %2243 = vmatpush1.msra.mxu0 0.0
        %2244 = vmatprep.subr.mxu0 0.0
        %2245 = vmatpush1.msra.mxu0 0.0
        %2246 = vmatprep.subr.mxu0 0.0
        %2247 = vmatpush1.msra.mxu0 0.0
        %2248 = vmatprep.subr.mxu0 0.0
        %2249 = vmatpush1.msra.mxu0 0.0
        %2250 = vmatprep.subr.mxu0 0.0
        %2251 = vmatpush1.msra.mxu0 0.0
        %2252 = vmatprep.mubr.f32.mxu0 0.0
        %2253 = vmatmul.mubr.f32.gmra.mrb[0].mxu0 %v2184
        %v2254 = vpop.f32.mrb[0].mxu0
        %v2255 = vadd.f32 0.0, %v2254
        %v2256 = vpop.f32.mrb[0].mxu0
        %2257 = vmatprep.mubr.f32.mxu0 0.0
        %2258 = vmatmul.mubr.f32.gmra.mrb[0].mxu0 %v2186
        %v2259 = vpop.f32.mrb[0].mxu0
        %v2260 = vadd.f32 0.0, %v2259
        %v2261 = vpop.f32.mrb[0].mxu0
        %2262 = vdwg.mxu0
        %2265 = vrot.lane.b32.xlu0 %v2255, 32
        %v2266 = vpop.permute.xlu0 %2265
        %2267 = vrot.lane.b32.xlu0 %v2260, 32
        %v2268 = vpop.permute.xlu0 %2267
        %v2271 = vmul.f32 %v526, %v2266
        %v2272 = vmul.f32 %v532, %v2268
        %2273 = vst.msk [vmem:[%s347 + $0x18] sm:$0xff] %vm1156, %v2271
        %2274 = vst.msk [vmem:[%s347 + $0x58] sm:$0xff] %vm1156, %v2272
        %2275 = vrot.lane.b32.xlu0 %v889, 32
        %v2276 = vpop.permute.xlu0 %2275
        %2277 = vrot.lane.b32.xlu0 %v895, 32
        %v2278 = vpop.permute.xlu0 %2277
        %v2279 = vsel %vm976, %v2276, 0
        %v2281 = vsel %vm976, %v2278, 0
        %2283 = vmatprep.subr.mxu0 0.0
        %2284 = vmatpush1.msra.mxu0 %v974
        %2285 = vmatprep.subr.mxu0 0.0
        %2286 = vmatpush1.msra.mxu0 %v975
        %2287 = vmatprep.subr.mxu0 0.0
        %2288 = vmatpush1.msra.mxu0 0.0
        %2289 = vmatprep.subr.mxu0 0.0
        %2290 = vmatpush1.msra.mxu0 0.0
        %2291 = vmatprep.subr.mxu0 0.0
        %2292 = vmatpush1.msra.mxu0 0.0
        %2293 = vmatprep.subr.mxu0 0.0
        %2294 = vmatpush1.msra.mxu0 0.0
        %2295 = vmatprep.subr.mxu0 0.0
        %2296 = vmatpush1.msra.mxu0 0.0
        %2297 = vmatprep.subr.mxu0 0.0
        %2298 = vmatpush1.msra.mxu0 0.0
        %2299 = vmatprep.subr.mxu0 0.0
        %2300 = vmatpush1.msra.mxu0 0.0
        %2301 = vmatprep.subr.mxu0 0.0
        %2302 = vmatpush1.msra.mxu0 0.0
        %2303 = vmatprep.subr.mxu0 0.0
        %2304 = vmatpush1.msra.mxu0 0.0
        %2305 = vmatprep.subr.mxu0 0.0
        %2306 = vmatpush1.msra.mxu0 0.0
        %2307 = vmatprep.subr.mxu0 0.0
        %2308 = vmatpush1.msra.mxu0 0.0
        %2309 = vmatprep.subr.mxu0 0.0
        %2310 = vmatpush1.msra.mxu0 0.0
        %2311 = vmatprep.subr.mxu0 0.0
        %2312 = vmatpush1.msra.mxu0 0.0
        %2313 = vmatprep.subr.mxu0 0.0
        %2314 = vmatpush1.msra.mxu0 0.0
        %2315 = vmatprep.subr.mxu0 0.0
        %2316 = vmatpush1.msra.mxu0 0.0
        %2317 = vmatprep.subr.mxu0 0.0
        %2318 = vmatpush1.msra.mxu0 0.0
        %2319 = vmatprep.subr.mxu0 0.0
        %2320 = vmatpush1.msra.mxu0 0.0
        %2321 = vmatprep.subr.mxu0 0.0
        %2322 = vmatpush1.msra.mxu0 0.0
        %2323 = vmatprep.subr.mxu0 0.0
        %2324 = vmatpush1.msra.mxu0 0.0
        %2325 = vmatprep.subr.mxu0 0.0
        %2326 = vmatpush1.msra.mxu0 0.0
        %2327 = vmatprep.subr.mxu0 0.0
        %2328 = vmatpush1.msra.mxu0 0.0
        %2329 = vmatprep.subr.mxu0 0.0
        %2330 = vmatpush1.msra.mxu0 0.0
        %2331 = vmatprep.subr.mxu0 0.0
        %2332 = vmatpush1.msra.mxu0 0.0
        %2333 = vmatprep.subr.mxu0 0.0
        %2334 = vmatpush1.msra.mxu0 0.0
        %2335 = vmatprep.subr.mxu0 0.0
        %2336 = vmatpush1.msra.mxu0 0.0
        %2337 = vmatprep.subr.mxu0 0.0
        %2338 = vmatpush1.msra.mxu0 0.0
        %2339 = vmatprep.subr.mxu0 0.0
        %2340 = vmatpush1.msra.mxu0 0.0
        %2341 = vmatprep.subr.mxu0 0.0
        %2342 = vmatpush1.msra.mxu0 0.0
        %2343 = vmatprep.subr.mxu0 0.0
        %2344 = vmatpush1.msra.mxu0 0.0
        %2345 = vmatprep.subr.mxu0 0.0
        %2346 = vmatpush1.msra.mxu0 0.0
        %2347 = vmatprep.mubr.f32.mxu0 0.0
        %2348 = vmatmul.mubr.f32.gmra.mrb[0].mxu0 %v2279
        %v2349 = vpop.f32.mrb[0].mxu0
        %v2350 = vadd.f32 0.0, %v2349
        %v2351 = vpop.f32.mrb[0].mxu0
        %2352 = vmatprep.mubr.f32.mxu0 0.0
        %2353 = vmatmul.mubr.f32.gmra.mrb[0].mxu0 %v2281
        %v2354 = vpop.f32.mrb[0].mxu0
        %v2355 = vadd.f32 0.0, %v2354
        %v2356 = vpop.f32.mrb[0].mxu0
        %2357 = vdwg.mxu0
        %2360 = vrot.lane.b32.xlu0 %v2350, 64
        %v2361 = vpop.permute.xlu0 %2360
        %2362 = vrot.lane.b32.xlu0 %v2355, 64
        %v2363 = vpop.permute.xlu0 %2362
        %v2366 = vmul.f32 %v526, %v2361
        %v2367 = vmul.f32 %v532, %v2363
        %2368 = vst.msk [vmem:[%s347 + $0x18] sm:$0xff] %vm1252, %v2366
        %2369 = vst.msk [vmem:[%s347 + $0x58] sm:$0xff] %vm1252, %v2367
        %2370 = vrot.lane.b32.xlu0 %v889, 16
        %v2371 = vpop.permute.xlu0 %2370
        %2372 = vrot.lane.b32.xlu0 %v895, 16
        %v2373 = vpop.permute.xlu0 %2372
        %v2374 = vsel %vm976, %v2371, 0
        %v2376 = vsel %vm976, %v2373, 0
        %2378 = vmatprep.subr.mxu0 0.0
        %2379 = vmatpush1.msra.mxu0 %v974
        %2380 = vmatprep.subr.mxu0 0.0
        %2381 = vmatpush1.msra.mxu0 %v975
        %2382 = vmatprep.subr.mxu0 0.0
        %2383 = vmatpush1.msra.mxu0 0.0
        %2384 = vmatprep.subr.mxu0 0.0
        %2385 = vmatpush1.msra.mxu0 0.0
        %2386 = vmatprep.subr.mxu0 0.0
        %2387 = vmatpush1.msra.mxu0 0.0
        %2388 = vmatprep.subr.mxu0 0.0
        %2389 = vmatpush1.msra.mxu0 0.0
        %2390 = vmatprep.subr.mxu0 0.0
        %2391 = vmatpush1.msra.mxu0 0.0
        %2392 = vmatprep.subr.mxu0 0.0
        %2393 = vmatpush1.msra.mxu0 0.0
        %2394 = vmatprep.subr.mxu0 0.0
        %2395 = vmatpush1.msra.mxu0 0.0
        %2396 = vmatprep.subr.mxu0 0.0
        %2397 = vmatpush1.msra.mxu0 0.0
        %2398 = vmatprep.subr.mxu0 0.0
        %2399 = vmatpush1.msra.mxu0 0.0
        %2400 = vmatprep.subr.mxu0 0.0
        %2401 = vmatpush1.msra.mxu0 0.0
        %2402 = vmatprep.subr.mxu0 0.0
        %2403 = vmatpush1.msra.mxu0 0.0
        %2404 = vmatprep.subr.mxu0 0.0
        %2405 = vmatpush1.msra.mxu0 0.0
        %2406 = vmatprep.subr.mxu0 0.0
        %2407 = vmatpush1.msra.mxu0 0.0
        %2408 = vmatprep.subr.mxu0 0.0
        %2409 = vmatpush1.msra.mxu0 0.0
        %2410 = vmatprep.subr.mxu0 0.0
        %2411 = vmatpush1.msra.mxu0 0.0
        %2412 = vmatprep.subr.mxu0 0.0
        %2413 = vmatpush1.msra.mxu0 0.0
        %2414 = vmatprep.subr.mxu0 0.0
        %2415 = vmatpush1.msra.mxu0 0.0
        %2416 = vmatprep.subr.mxu0 0.0
        %2417 = vmatpush1.msra.mxu0 0.0
        %2418 = vmatprep.subr.mxu0 0.0
        %2419 = vmatpush1.msra.mxu0 0.0
        %2420 = vmatprep.subr.mxu0 0.0
        %2421 = vmatpush1.msra.mxu0 0.0
        %2422 = vmatprep.subr.mxu0 0.0
        %2423 = vmatpush1.msra.mxu0 0.0
        %2424 = vmatprep.subr.mxu0 0.0
        %2425 = vmatpush1.msra.mxu0 0.0
        %2426 = vmatprep.subr.mxu0 0.0
        %2427 = vmatpush1.msra.mxu0 0.0
        %2428 = vmatprep.subr.mxu0 0.0
        %2429 = vmatpush1.msra.mxu0 0.0
        %2430 = vmatprep.subr.mxu0 0.0
        %2431 = vmatpush1.msra.mxu0 0.0
        %2432 = vmatprep.subr.mxu0 0.0
        %2433 = vmatpush1.msra.mxu0 0.0
        %2434 = vmatprep.subr.mxu0 0.0
        %2435 = vmatpush1.msra.mxu0 0.0
        %2436 = vmatprep.subr.mxu0 0.0
        %2437 = vmatpush1.msra.mxu0 0.0
        %2438 = vmatprep.subr.mxu0 0.0
        %2439 = vmatpush1.msra.mxu0 0.0
        %2440 = vmatprep.subr.mxu0 0.0
        %2441 = vmatpush1.msra.mxu0 0.0
        %2442 = vmatprep.mubr.f32.mxu0 0.0
        %2443 = vmatmul.mubr.f32.gmra.mrb[0].mxu0 %v2374
        %v2444 = vpop.f32.mrb[0].mxu0
        %v2445 = vadd.f32 0.0, %v2444
        %v2446 = vpop.f32.mrb[0].mxu0
        %2447 = vmatprep.mubr.f32.mxu0 0.0
        %2448 = vmatmul.mubr.f32.gmra.mrb[0].mxu0 %v2376
        %v2449 = vpop.f32.mrb[0].mxu0
        %v2450 = vadd.f32 0.0, %v2449
        %v2451 = vpop.f32.mrb[0].mxu0
        %2452 = vdwg.mxu0
        %2455 = vrot.lane.b32.xlu0 %v2445, 96
        %v2456 = vpop.permute.xlu0 %2455
        %2457 = vrot.lane.b32.xlu0 %v2450, 96
        %v2458 = vpop.permute.xlu0 %2457
        %v2461 = vmul.f32 %v526, %v2456
        %v2462 = vmul.f32 %v532, %v2458
        %2463 = vst.msk [vmem:[%s347 + $0x18] sm:$0xff] %vm1348, %v2461
        %2464 = vst.msk [vmem:[%s347 + $0x58] sm:$0xff] %vm1348, %v2462
        %v2466 = vsel %vm976, %v964, 0
        %v2469 = vsel %vm976, %v970, 0
        %2471 = vmatprep.subr.mxu0 0.0
        %2472 = vmatpush1.msra.mxu0 %v974
        %2473 = vmatprep.subr.mxu0 0.0
        %2474 = vmatpush1.msra.mxu0 %v975
        %2475 = vmatprep.subr.mxu0 0.0
        %2476 = vmatpush1.msra.mxu0 0.0
        %2477 = vmatprep.subr.mxu0 0.0
        %2478 = vmatpush1.msra.mxu0 0.0
        %2479 = vmatprep.subr.mxu0 0.0
        %2480 = vmatpush1.msra.mxu0 0.0
        %2481 = vmatprep.subr.mxu0 0.0
        %2482 = vmatpush1.msra.mxu0 0.0
        %2483 = vmatprep.subr.mxu0 0.0
        %2484 = vmatpush1.msra.mxu0 0.0
        %2485 = vmatprep.subr.mxu0 0.0
        %2486 = vmatpush1.msra.mxu0 0.0
        %2487 = vmatprep.subr.mxu0 0.0
        %2488 = vmatpush1.msra.mxu0 0.0
        %2489 = vmatprep.subr.mxu0 0.0
        %2490 = vmatpush1.msra.mxu0 0.0
        %2491 = vmatprep.subr.mxu0 0.0
        %2492 = vmatpush1.msra.mxu0 0.0
        %2493 = vmatprep.subr.mxu0 0.0
        %2494 = vmatpush1.msra.mxu0 0.0
        %2495 = vmatprep.subr.mxu0 0.0
        %2496 = vmatpush1.msra.mxu0 0.0
        %2497 = vmatprep.subr.mxu0 0.0
        %2498 = vmatpush1.msra.mxu0 0.0
        %2499 = vmatprep.subr.mxu0 0.0
        %2500 = vmatpush1.msra.mxu0 0.0
        %2501 = vmatprep.subr.mxu0 0.0
        %2502 = vmatpush1.msra.mxu0 0.0
        %2503 = vmatprep.subr.mxu0 0.0
        %2504 = vmatpush1.msra.mxu0 0.0
        %2505 = vmatprep.subr.mxu0 0.0
        %2506 = vmatpush1.msra.mxu0 0.0
        %2507 = vmatprep.subr.mxu0 0.0
        %2508 = vmatpush1.msra.mxu0 0.0
        %2509 = vmatprep.subr.mxu0 0.0
        %2510 = vmatpush1.msra.mxu0 0.0
        %2511 = vmatprep.subr.mxu0 0.0
        %2512 = vmatpush1.msra.mxu0 0.0
        %2513 = vmatprep.subr.mxu0 0.0
        %2514 = vmatpush1.msra.mxu0 0.0
        %2515 = vmatprep.subr.mxu0 0.0
        %2516 = vmatpush1.msra.mxu0 0.0
        %2517 = vmatprep.subr.mxu0 0.0
        %2518 = vmatpush1.msra.mxu0 0.0
        %2519 = vmatprep.subr.mxu0 0.0
        %2520 = vmatpush1.msra.mxu0 0.0
        %2521 = vmatprep.subr.mxu0 0.0
        %2522 = vmatpush1.msra.mxu0 0.0
        %2523 = vmatprep.subr.mxu0 0.0
        %2524 = vmatpush1.msra.mxu0 0.0
        %2525 = vmatprep.subr.mxu0 0.0
        %2526 = vmatpush1.msra.mxu0 0.0
        %2527 = vmatprep.subr.mxu0 0.0
        %2528 = vmatpush1.msra.mxu0 0.0
        %2529 = vmatprep.subr.mxu0 0.0
        %2530 = vmatpush1.msra.mxu0 0.0
        %2531 = vmatprep.subr.mxu0 0.0
        %2532 = vmatpush1.msra.mxu0 0.0
        %2533 = vmatprep.subr.mxu0 0.0
        %2534 = vmatpush1.msra.mxu0 0.0
        %2535 = vmatprep.mubr.f32.mxu0 0.0
        %2536 = vmatmul.mubr.f32.gmra.mrb[0].mxu0 %v2466
        %v2537 = vpop.f32.mrb[0].mxu0
        %v2538 = vadd.f32 0.0, %v2537
        %v2539 = vpop.f32.mrb[0].mxu0
        %2540 = vmatprep.mubr.f32.mxu0 0.0
        %2541 = vmatmul.mubr.f32.gmra.mrb[0].mxu0 %v2469
        %v2542 = vpop.f32.mrb[0].mxu0
        %v2543 = vadd.f32 0.0, %v2542
        %v2544 = vpop.f32.mrb[0].mxu0
        %2545 = vdwg.mxu0
        %v2546 = vmul.f32 %v601, %v2538
        %v2547 = vmul.f32 %v607, %v2543
        %2548 = vst.msk [vmem:[%s347 + $0x20] sm:$0xff] %vm1060, %v2546
        %2549 = vst.msk [vmem:[%s347 + $0x60] sm:$0xff] %vm1060, %v2547
        %2550 = vrot.lane.b32.xlu0 %v964, 112
        %v2551 = vpop.permute.xlu0 %2550
        %2552 = vrot.lane.b32.xlu0 %v970, 112
        %v2553 = vpop.permute.xlu0 %2552
        %v2554 = vsel %vm976, %v2551, 0
        %v2556 = vsel %vm976, %v2553, 0
        %2558 = vmatprep.subr.mxu0 0.0
        %2559 = vmatpush1.msra.mxu0 %v974
        %2560 = vmatprep.subr.mxu0 0.0
        %2561 = vmatpush1.msra.mxu0 %v975
        %2562 = vmatprep.subr.mxu0 0.0
        %2563 = vmatpush1.msra.mxu0 0.0
        %2564 = vmatprep.subr.mxu0 0.0
        %2565 = vmatpush1.msra.mxu0 0.0
        %2566 = vmatprep.subr.mxu0 0.0
        %2567 = vmatpush1.msra.mxu0 0.0
        %2568 = vmatprep.subr.mxu0 0.0
        %2569 = vmatpush1.msra.mxu0 0.0
        %2570 = vmatprep.subr.mxu0 0.0
        %2571 = vmatpush1.msra.mxu0 0.0
        %2572 = vmatprep.subr.mxu0 0.0
        %2573 = vmatpush1.msra.mxu0 0.0
        %2574 = vmatprep.subr.mxu0 0.0
        %2575 = vmatpush1.msra.mxu0 0.0
        %2576 = vmatprep.subr.mxu0 0.0
        %2577 = vmatpush1.msra.mxu0 0.0
        %2578 = vmatprep.subr.mxu0 0.0
        %2579 = vmatpush1.msra.mxu0 0.0
        %2580 = vmatprep.subr.mxu0 0.0
        %2581 = vmatpush1.msra.mxu0 0.0
        %2582 = vmatprep.subr.mxu0 0.0
        %2583 = vmatpush1.msra.mxu0 0.0
        %2584 = vmatprep.subr.mxu0 0.0
        %2585 = vmatpush1.msra.mxu0 0.0
        %2586 = vmatprep.subr.mxu0 0.0
        %2587 = vmatpush1.msra.mxu0 0.0
        %2588 = vmatprep.subr.mxu0 0.0
        %2589 = vmatpush1.msra.mxu0 0.0
        %2590 = vmatprep.subr.mxu0 0.0
        %2591 = vmatpush1.msra.mxu0 0.0
        %2592 = vmatprep.subr.mxu0 0.0
        %2593 = vmatpush1.msra.mxu0 0.0
        %2594 = vmatprep.subr.mxu0 0.0
        %2595 = vmatpush1.msra.mxu0 0.0
        %2596 = vmatprep.subr.mxu0 0.0
        %2597 = vmatpush1.msra.mxu0 0.0
        %2598 = vmatprep.subr.mxu0 0.0
        %2599 = vmatpush1.msra.mxu0 0.0
        %2600 = vmatprep.subr.mxu0 0.0
        %2601 = vmatpush1.msra.mxu0 0.0
        %2602 = vmatprep.subr.mxu0 0.0
        %2603 = vmatpush1.msra.mxu0 0.0
        %2604 = vmatprep.subr.mxu0 0.0
        %2605 = vmatpush1.msra.mxu0 0.0
        %2606 = vmatprep.subr.mxu0 0.0
        %2607 = vmatpush1.msra.mxu0 0.0
        %2608 = vmatprep.subr.mxu0 0.0
        %2609 = vmatpush1.msra.mxu0 0.0
        %2610 = vmatprep.subr.mxu0 0.0
        %2611 = vmatpush1.msra.mxu0 0.0
        %2612 = vmatprep.subr.mxu0 0.0
        %2613 = vmatpush1.msra.mxu0 0.0
        %2614 = vmatprep.subr.mxu0 0.0
        %2615 = vmatpush1.msra.mxu0 0.0
        %2616 = vmatprep.subr.mxu0 0.0
        %2617 = vmatpush1.msra.mxu0 0.0
        %2618 = vmatprep.subr.mxu0 0.0
        %2619 = vmatpush1.msra.mxu0 0.0
        %2620 = vmatprep.subr.mxu0 0.0
        %2621 = vmatpush1.msra.mxu0 0.0
        %2622 = vmatprep.mubr.f32.mxu0 0.0
        %2623 = vmatmul.mubr.f32.gmra.mrb[0].mxu0 %v2554
        %v2624 = vpop.f32.mrb[0].mxu0
        %v2625 = vadd.f32 0.0, %v2624
        %v2626 = vpop.f32.mrb[0].mxu0
        %2627 = vmatprep.mubr.f32.mxu0 0.0
        %2628 = vmatmul.mubr.f32.gmra.mrb[0].mxu0 %v2556
        %v2629 = vpop.f32.mrb[0].mxu0
        %v2630 = vadd.f32 0.0, %v2629
        %v2631 = vpop.f32.mrb[0].mxu0
        %2632 = vdwg.mxu0
        %2635 = vrot.lane.b32.xlu0 %v2625, 32
        %v2636 = vpop.permute.xlu0 %2635
        %2637 = vrot.lane.b32.xlu0 %v2630, 32
        %v2638 = vpop.permute.xlu0 %2637
        %v2641 = vmul.f32 %v601, %v2636
        %v2642 = vmul.f32 %v607, %v2638
        %2643 = vst.msk [vmem:[%s347 + $0x20] sm:$0xff] %vm1156, %v2641
        %2644 = vst.msk [vmem:[%s347 + $0x60] sm:$0xff] %vm1156, %v2642
        %2645 = vrot.lane.b32.xlu0 %v964, 96
        %v2646 = vpop.permute.xlu0 %2645
        %2647 = vrot.lane.b32.xlu0 %v970, 96
        %v2648 = vpop.permute.xlu0 %2647
        %v2649 = vsel %vm976, %v2646, 0
        %v2651 = vsel %vm976, %v2648, 0
        %2653 = vmatprep.subr.mxu0 0.0
        %2654 = vmatpush1.msra.mxu0 %v974
        %2655 = vmatprep.subr.mxu0 0.0
        %2656 = vmatpush1.msra.mxu0 %v975
        %2657 = vmatprep.subr.mxu0 0.0
        %2658 = vmatpush1.msra.mxu0 0.0
        %2659 = vmatprep.subr.mxu0 0.0
        %2660 = vmatpush1.msra.mxu0 0.0
        %2661 = vmatprep.subr.mxu0 0.0
        %2662 = vmatpush1.msra.mxu0 0.0
        %2663 = vmatprep.subr.mxu0 0.0
        %2664 = vmatpush1.msra.mxu0 0.0
        %2665 = vmatprep.subr.mxu0 0.0
        %2666 = vmatpush1.msra.mxu0 0.0
        %2667 = vmatprep.subr.mxu0 0.0
        %2668 = vmatpush1.msra.mxu0 0.0
        %2669 = vmatprep.subr.mxu0 0.0
        %2670 = vmatpush1.msra.mxu0 0.0
        %2671 = vmatprep.subr.mxu0 0.0
        %2672 = vmatpush1.msra.mxu0 0.0
        %2673 = vmatprep.subr.mxu0 0.0
        %2674 = vmatpush1.msra.mxu0 0.0
        %2675 = vmatprep.subr.mxu0 0.0
        %2676 = vmatpush1.msra.mxu0 0.0
        %2677 = vmatprep.subr.mxu0 0.0
        %2678 = vmatpush1.msra.mxu0 0.0
        %2679 = vmatprep.subr.mxu0 0.0
        %2680 = vmatpush1.msra.mxu0 0.0
        %2681 = vmatprep.subr.mxu0 0.0
        %2682 = vmatpush1.msra.mxu0 0.0
        %2683 = vmatprep.subr.mxu0 0.0
        %2684 = vmatpush1.msra.mxu0 0.0
        %2685 = vmatprep.subr.mxu0 0.0
        %2686 = vmatpush1.msra.mxu0 0.0
        %2687 = vmatprep.subr.mxu0 0.0
        %2688 = vmatpush1.msra.mxu0 0.0
        %2689 = vmatprep.subr.mxu0 0.0
        %2690 = vmatpush1.msra.mxu0 0.0
        %2691 = vmatprep.subr.mxu0 0.0
        %2692 = vmatpush1.msra.mxu0 0.0
        %2693 = vmatprep.subr.mxu0 0.0
        %2694 = vmatpush1.msra.mxu0 0.0
        %2695 = vmatprep.subr.mxu0 0.0
        %2696 = vmatpush1.msra.mxu0 0.0
        %2697 = vmatprep.subr.mxu0 0.0
        %2698 = vmatpush1.msra.mxu0 0.0
        %2699 = vmatprep.subr.mxu0 0.0
        %2700 = vmatpush1.msra.mxu0 0.0
        %2701 = vmatprep.subr.mxu0 0.0
        %2702 = vmatpush1.msra.mxu0 0.0
        %2703 = vmatprep.subr.mxu0 0.0
        %2704 = vmatpush1.msra.mxu0 0.0
        %2705 = vmatprep.subr.mxu0 0.0
        %2706 = vmatpush1.msra.mxu0 0.0
        %2707 = vmatprep.subr.mxu0 0.0
        %2708 = vmatpush1.msra.mxu0 0.0
        %2709 = vmatprep.subr.mxu0 0.0
        %2710 = vmatpush1.msra.mxu0 0.0
        %2711 = vmatprep.subr.mxu0 0.0
        %2712 = vmatpush1.msra.mxu0 0.0
        %2713 = vmatprep.subr.mxu0 0.0
        %2714 = vmatpush1.msra.mxu0 0.0
        %2715 = vmatprep.subr.mxu0 0.0
        %2716 = vmatpush1.msra.mxu0 0.0
        %2717 = vmatprep.mubr.f32.mxu0 0.0
        %2718 = vmatmul.mubr.f32.gmra.mrb[0].mxu0 %v2649
        %v2719 = vpop.f32.mrb[0].mxu0
        %v2720 = vadd.f32 0.0, %v2719
        %v2721 = vpop.f32.mrb[0].mxu0
        %2722 = vmatprep.mubr.f32.mxu0 0.0
        %2723 = vmatmul.mubr.f32.gmra.mrb[0].mxu0 %v2651
        %v2724 = vpop.f32.mrb[0].mxu0
        %v2725 = vadd.f32 0.0, %v2724
        %v2726 = vpop.f32.mrb[0].mxu0
        %2727 = vdwg.mxu0
        %2730 = vrot.lane.b32.xlu0 %v2720, 64
        %v2731 = vpop.permute.xlu0 %2730
        %2732 = vrot.lane.b32.xlu0 %v2725, 64
        %v2733 = vpop.permute.xlu0 %2732
        %v2736 = vmul.f32 %v601, %v2731
        %v2737 = vmul.f32 %v607, %v2733
        %2738 = vst.msk [vmem:[%s347 + $0x20] sm:$0xff] %vm1252, %v2736
        %2739 = vst.msk [vmem:[%s347 + $0x60] sm:$0xff] %vm1252, %v2737
        %2740 = vrot.lane.b32.xlu0 %v964, 80
        %v2741 = vpop.permute.xlu0 %2740
        %2742 = vrot.lane.b32.xlu0 %v970, 80
        %v2743 = vpop.permute.xlu0 %2742
        %v2744 = vsel %vm976, %v2741, 0
        %v2746 = vsel %vm976, %v2743, 0
        %2748 = vmatprep.subr.mxu0 0.0
        %2749 = vmatpush1.msra.mxu0 %v974
        %2750 = vmatprep.subr.mxu0 0.0
        %2751 = vmatpush1.msra.mxu0 %v975
        %2752 = vmatprep.subr.mxu0 0.0
        %2753 = vmatpush1.msra.mxu0 0.0
        %2754 = vmatprep.subr.mxu0 0.0
        %2755 = vmatpush1.msra.mxu0 0.0
        %2756 = vmatprep.subr.mxu0 0.0
        %2757 = vmatpush1.msra.mxu0 0.0
        %2758 = vmatprep.subr.mxu0 0.0
        %2759 = vmatpush1.msra.mxu0 0.0
        %2760 = vmatprep.subr.mxu0 0.0
        %2761 = vmatpush1.msra.mxu0 0.0
        %2762 = vmatprep.subr.mxu0 0.0
        %2763 = vmatpush1.msra.mxu0 0.0
        %2764 = vmatprep.subr.mxu0 0.0
        %2765 = vmatpush1.msra.mxu0 0.0
        %2766 = vmatprep.subr.mxu0 0.0
        %2767 = vmatpush1.msra.mxu0 0.0
        %2768 = vmatprep.subr.mxu0 0.0
        %2769 = vmatpush1.msra.mxu0 0.0
        %2770 = vmatprep.subr.mxu0 0.0
        %2771 = vmatpush1.msra.mxu0 0.0
        %2772 = vmatprep.subr.mxu0 0.0
        %2773 = vmatpush1.msra.mxu0 0.0
        %2774 = vmatprep.subr.mxu0 0.0
        %2775 = vmatpush1.msra.mxu0 0.0
        %2776 = vmatprep.subr.mxu0 0.0
        %2777 = vmatpush1.msra.mxu0 0.0
        %2778 = vmatprep.subr.mxu0 0.0
        %2779 = vmatpush1.msra.mxu0 0.0
        %2780 = vmatprep.subr.mxu0 0.0
        %2781 = vmatpush1.msra.mxu0 0.0
        %2782 = vmatprep.subr.mxu0 0.0
        %2783 = vmatpush1.msra.mxu0 0.0
        %2784 = vmatprep.subr.mxu0 0.0
        %2785 = vmatpush1.msra.mxu0 0.0
        %2786 = vmatprep.subr.mxu0 0.0
        %2787 = vmatpush1.msra.mxu0 0.0
        %2788 = vmatprep.subr.mxu0 0.0
        %2789 = vmatpush1.msra.mxu0 0.0
        %2790 = vmatprep.subr.mxu0 0.0
        %2791 = vmatpush1.msra.mxu0 0.0
        %2792 = vmatprep.subr.mxu0 0.0
        %2793 = vmatpush1.msra.mxu0 0.0
        %2794 = vmatprep.subr.mxu0 0.0
        %2795 = vmatpush1.msra.mxu0 0.0
        %2796 = vmatprep.subr.mxu0 0.0
        %2797 = vmatpush1.msra.mxu0 0.0
        %2798 = vmatprep.subr.mxu0 0.0
        %2799 = vmatpush1.msra.mxu0 0.0
        %2800 = vmatprep.subr.mxu0 0.0
        %2801 = vmatpush1.msra.mxu0 0.0
        %2802 = vmatprep.subr.mxu0 0.0
        %2803 = vmatpush1.msra.mxu0 0.0
        %2804 = vmatprep.subr.mxu0 0.0
        %2805 = vmatpush1.msra.mxu0 0.0
        %2806 = vmatprep.subr.mxu0 0.0
        %2807 = vmatpush1.msra.mxu0 0.0
        %2808 = vmatprep.subr.mxu0 0.0
        %2809 = vmatpush1.msra.mxu0 0.0
        %2810 = vmatprep.subr.mxu0 0.0
        %2811 = vmatpush1.msra.mxu0 0.0
        %2812 = vmatprep.mubr.f32.mxu0 0.0
        %2813 = vmatmul.mubr.f32.gmra.mrb[0].mxu0 %v2744
        %v2814 = vpop.f32.mrb[0].mxu0
        %v2815 = vadd.f32 0.0, %v2814
        %v2816 = vpop.f32.mrb[0].mxu0
        %2817 = vmatprep.mubr.f32.mxu0 0.0
        %2818 = vmatmul.mubr.f32.gmra.mrb[0].mxu0 %v2746
        %v2819 = vpop.f32.mrb[0].mxu0
        %v2820 = vadd.f32 0.0, %v2819
        %v2821 = vpop.f32.mrb[0].mxu0
        %2822 = vdwg.mxu0
        %2825 = vrot.lane.b32.xlu0 %v2815, 96
        %v2826 = vpop.permute.xlu0 %2825
        %2827 = vrot.lane.b32.xlu0 %v2820, 96
        %v2828 = vpop.permute.xlu0 %2827
        %v2831 = vmul.f32 %v601, %v2826
        %v2832 = vmul.f32 %v607, %v2828
        %2833 = vst.msk [vmem:[%s347 + $0x20] sm:$0xff] %vm1348, %v2831
        %2834 = vst.msk [vmem:[%s347 + $0x60] sm:$0xff] %vm1348, %v2832
        %2835 = vrot.lane.b32.xlu0 %v964, 64
        %v2836 = vpop.permute.xlu0 %2835
        %2837 = vrot.lane.b32.xlu0 %v970, 64
        %v2838 = vpop.permute.xlu0 %2837
        %v2839 = vsel %vm976, %v2836, 0
        %v2841 = vsel %vm976, %v2838, 0
        %2843 = vmatprep.subr.mxu0 0.0
        %2844 = vmatpush1.msra.mxu0 %v974
        %2845 = vmatprep.subr.mxu0 0.0
        %2846 = vmatpush1.msra.mxu0 %v975
        %2847 = vmatprep.subr.mxu0 0.0
        %2848 = vmatpush1.msra.mxu0 0.0
        %2849 = vmatprep.subr.mxu0 0.0
        %2850 = vmatpush1.msra.mxu0 0.0
        %2851 = vmatprep.subr.mxu0 0.0
        %2852 = vmatpush1.msra.mxu0 0.0
        %2853 = vmatprep.subr.mxu0 0.0
        %2854 = vmatpush1.msra.mxu0 0.0
        %2855 = vmatprep.subr.mxu0 0.0
        %2856 = vmatpush1.msra.mxu0 0.0
        %2857 = vmatprep.subr.mxu0 0.0
        %2858 = vmatpush1.msra.mxu0 0.0
        %2859 = vmatprep.subr.mxu0 0.0
        %2860 = vmatpush1.msra.mxu0 0.0
        %2861 = vmatprep.subr.mxu0 0.0
        %2862 = vmatpush1.msra.mxu0 0.0
        %2863 = vmatprep.subr.mxu0 0.0
        %2864 = vmatpush1.msra.mxu0 0.0
        %2865 = vmatprep.subr.mxu0 0.0
        %2866 = vmatpush1.msra.mxu0 0.0
        %2867 = vmatprep.subr.mxu0 0.0
        %2868 = vmatpush1.msra.mxu0 0.0
        %2869 = vmatprep.subr.mxu0 0.0
        %2870 = vmatpush1.msra.mxu0 0.0
        %2871 = vmatprep.subr.mxu0 0.0
        %2872 = vmatpush1.msra.mxu0 0.0
        %2873 = vmatprep.subr.mxu0 0.0
        %2874 = vmatpush1.msra.mxu0 0.0
        %2875 = vmatprep.subr.mxu0 0.0
        %2876 = vmatpush1.msra.mxu0 0.0
        %2877 = vmatprep.subr.mxu0 0.0
        %2878 = vmatpush1.msra.mxu0 0.0
        %2879 = vmatprep.subr.mxu0 0.0
        %2880 = vmatpush1.msra.mxu0 0.0
        %2881 = vmatprep.subr.mxu0 0.0
        %2882 = vmatpush1.msra.mxu0 0.0
        %2883 = vmatprep.subr.mxu0 0.0
        %2884 = vmatpush1.msra.mxu0 0.0
        %2885 = vmatprep.subr.mxu0 0.0
        %2886 = vmatpush1.msra.mxu0 0.0
        %2887 = vmatprep.subr.mxu0 0.0
        %2888 = vmatpush1.msra.mxu0 0.0
        %2889 = vmatprep.subr.mxu0 0.0
        %2890 = vmatpush1.msra.mxu0 0.0
        %2891 = vmatprep.subr.mxu0 0.0
        %2892 = vmatpush1.msra.mxu0 0.0
        %2893 = vmatprep.subr.mxu0 0.0
        %2894 = vmatpush1.msra.mxu0 0.0
        %2895 = vmatprep.subr.mxu0 0.0
        %2896 = vmatpush1.msra.mxu0 0.0
        %2897 = vmatprep.subr.mxu0 0.0
        %2898 = vmatpush1.msra.mxu0 0.0
        %2899 = vmatprep.subr.mxu0 0.0
        %2900 = vmatpush1.msra.mxu0 0.0
        %2901 = vmatprep.subr.mxu0 0.0
        %2902 = vmatpush1.msra.mxu0 0.0
        %2903 = vmatprep.subr.mxu0 0.0
        %2904 = vmatpush1.msra.mxu0 0.0
        %2905 = vmatprep.subr.mxu0 0.0
        %2906 = vmatpush1.msra.mxu0 0.0
        %2907 = vmatprep.mubr.f32.mxu0 0.0
        %2908 = vmatmul.mubr.f32.gmra.mrb[0].mxu0 %v2839
        %v2909 = vpop.f32.mrb[0].mxu0
        %v2910 = vadd.f32 0.0, %v2909
        %v2911 = vpop.f32.mrb[0].mxu0
        %2912 = vmatprep.mubr.f32.mxu0 0.0
        %2913 = vmatmul.mubr.f32.gmra.mrb[0].mxu0 %v2841
        %v2914 = vpop.f32.mrb[0].mxu0
        %v2915 = vadd.f32 0.0, %v2914
        %v2916 = vpop.f32.mrb[0].mxu0
        %2917 = vdwg.mxu0
        %v2918 = vmul.f32 %v603, %v2910
        %v2919 = vmul.f32 %v609, %v2915
        %2920 = vst.msk [vmem:[%s347 + $0x28] sm:$0xff] %vm1060, %v2918
        %2921 = vst.msk [vmem:[%s347 + $0x68] sm:$0xff] %vm1060, %v2919
        %2922 = vrot.lane.b32.xlu0 %v964, 48
        %v2923 = vpop.permute.xlu0 %2922
        %2924 = vrot.lane.b32.xlu0 %v970, 48
        %v2925 = vpop.permute.xlu0 %2924
        %v2926 = vsel %vm976, %v2923, 0
        %v2928 = vsel %vm976, %v2925, 0
        %2930 = vmatprep.subr.mxu0 0.0
        %2931 = vmatpush1.msra.mxu0 %v974
        %2932 = vmatprep.subr.mxu0 0.0
        %2933 = vmatpush1.msra.mxu0 %v975
        %2934 = vmatprep.subr.mxu0 0.0
        %2935 = vmatpush1.msra.mxu0 0.0
        %2936 = vmatprep.subr.mxu0 0.0
        %2937 = vmatpush1.msra.mxu0 0.0
        %2938 = vmatprep.subr.mxu0 0.0
        %2939 = vmatpush1.msra.mxu0 0.0
        %2940 = vmatprep.subr.mxu0 0.0
        %2941 = vmatpush1.msra.mxu0 0.0
        %2942 = vmatprep.subr.mxu0 0.0
        %2943 = vmatpush1.msra.mxu0 0.0
        %2944 = vmatprep.subr.mxu0 0.0
        %2945 = vmatpush1.msra.mxu0 0.0
        %2946 = vmatprep.subr.mxu0 0.0
        %2947 = vmatpush1.msra.mxu0 0.0
        %2948 = vmatprep.subr.mxu0 0.0
        %2949 = vmatpush1.msra.mxu0 0.0
        %2950 = vmatprep.subr.mxu0 0.0
        %2951 = vmatpush1.msra.mxu0 0.0
        %2952 = vmatprep.subr.mxu0 0.0
        %2953 = vmatpush1.msra.mxu0 0.0
        %2954 = vmatprep.subr.mxu0 0.0
        %2955 = vmatpush1.msra.mxu0 0.0
        %2956 = vmatprep.subr.mxu0 0.0
        %2957 = vmatpush1.msra.mxu0 0.0
        %2958 = vmatprep.subr.mxu0 0.0
        %2959 = vmatpush1.msra.mxu0 0.0
        %2960 = vmatprep.subr.mxu0 0.0
        %2961 = vmatpush1.msra.mxu0 0.0
        %2962 = vmatprep.subr.mxu0 0.0
        %2963 = vmatpush1.msra.mxu0 0.0
        %2964 = vmatprep.subr.mxu0 0.0
        %2965 = vmatpush1.msra.mxu0 0.0
        %2966 = vmatprep.subr.mxu0 0.0
        %2967 = vmatpush1.msra.mxu0 0.0
        %2968 = vmatprep.subr.mxu0 0.0
        %2969 = vmatpush1.msra.mxu0 0.0
        %2970 = vmatprep.subr.mxu0 0.0
        %2971 = vmatpush1.msra.mxu0 0.0
        %2972 = vmatprep.subr.mxu0 0.0
        %2973 = vmatpush1.msra.mxu0 0.0
        %2974 = vmatprep.subr.mxu0 0.0
        %2975 = vmatpush1.msra.mxu0 0.0
        %2976 = vmatprep.subr.mxu0 0.0
        %2977 = vmatpush1.msra.mxu0 0.0
        %2978 = vmatprep.subr.mxu0 0.0
        %2979 = vmatpush1.msra.mxu0 0.0
        %2980 = vmatprep.subr.mxu0 0.0
        %2981 = vmatpush1.msra.mxu0 0.0
        %2982 = vmatprep.subr.mxu0 0.0
        %2983 = vmatpush1.msra.mxu0 0.0
        %2984 = vmatprep.subr.mxu0 0.0
        %2985 = vmatpush1.msra.mxu0 0.0
        %2986 = vmatprep.subr.mxu0 0.0
        %2987 = vmatpush1.msra.mxu0 0.0
        %2988 = vmatprep.subr.mxu0 0.0
        %2989 = vmatpush1.msra.mxu0 0.0
        %2990 = vmatprep.subr.mxu0 0.0
        %2991 = vmatpush1.msra.mxu0 0.0
        %2992 = vmatprep.subr.mxu0 0.0
        %2993 = vmatpush1.msra.mxu0 0.0
        %2994 = vmatprep.mubr.f32.mxu0 0.0
        %2995 = vmatmul.mubr.f32.gmra.mrb[0].mxu0 %v2926
        %v2996 = vpop.f32.mrb[0].mxu0
        %v2997 = vadd.f32 0.0, %v2996
        %v2998 = vpop.f32.mrb[0].mxu0
        %2999 = vmatprep.mubr.f32.mxu0 0.0
        %3000 = vmatmul.mubr.f32.gmra.mrb[0].mxu0 %v2928
        %v3001 = vpop.f32.mrb[0].mxu0
        %v3002 = vadd.f32 0.0, %v3001
        %v3003 = vpop.f32.mrb[0].mxu0
        %3004 = vdwg.mxu0
        %3007 = vrot.lane.b32.xlu0 %v2997, 32
        %v3008 = vpop.permute.xlu0 %3007
        %3009 = vrot.lane.b32.xlu0 %v3002, 32
        %v3010 = vpop.permute.xlu0 %3009
        %v3013 = vmul.f32 %v603, %v3008
        %v3014 = vmul.f32 %v609, %v3010
        %3015 = vst.msk [vmem:[%s347 + $0x28] sm:$0xff] %vm1156, %v3013
        %3016 = vst.msk [vmem:[%s347 + $0x68] sm:$0xff] %vm1156, %v3014
        %3017 = vrot.lane.b32.xlu0 %v964, 32
        %v3018 = vpop.permute.xlu0 %3017
        %3019 = vrot.lane.b32.xlu0 %v970, 32
        %v3020 = vpop.permute.xlu0 %3019
        %v3021 = vsel %vm976, %v3018, 0
        %v3023 = vsel %vm976, %v3020, 0
        %3025 = vmatprep.subr.mxu0 0.0
        %3026 = vmatpush1.msra.mxu0 %v974
        %3027 = vmatprep.subr.mxu0 0.0
        %3028 = vmatpush1.msra.mxu0 %v975
        %3029 = vmatprep.subr.mxu0 0.0
        %3030 = vmatpush1.msra.mxu0 0.0
        %3031 = vmatprep.subr.mxu0 0.0
        %3032 = vmatpush1.msra.mxu0 0.0
        %3033 = vmatprep.subr.mxu0 0.0
        %3034 = vmatpush1.msra.mxu0 0.0
        %3035 = vmatprep.subr.mxu0 0.0
        %3036 = vmatpush1.msra.mxu0 0.0
        %3037 = vmatprep.subr.mxu0 0.0
        %3038 = vmatpush1.msra.mxu0 0.0
        %3039 = vmatprep.subr.mxu0 0.0
        %3040 = vmatpush1.msra.mxu0 0.0
        %3041 = vmatprep.subr.mxu0 0.0
        %3042 = vmatpush1.msra.mxu0 0.0
        %3043 = vmatprep.subr.mxu0 0.0
        %3044 = vmatpush1.msra.mxu0 0.0
        %3045 = vmatprep.subr.mxu0 0.0
        %3046 = vmatpush1.msra.mxu0 0.0
        %3047 = vmatprep.subr.mxu0 0.0
        %3048 = vmatpush1.msra.mxu0 0.0
        %3049 = vmatprep.subr.mxu0 0.0
        %3050 = vmatpush1.msra.mxu0 0.0
        %3051 = vmatprep.subr.mxu0 0.0
        %3052 = vmatpush1.msra.mxu0 0.0
        %3053 = vmatprep.subr.mxu0 0.0
        %3054 = vmatpush1.msra.mxu0 0.0
        %3055 = vmatprep.subr.mxu0 0.0
        %3056 = vmatpush1.msra.mxu0 0.0
        %3057 = vmatprep.subr.mxu0 0.0
        %3058 = vmatpush1.msra.mxu0 0.0
        %3059 = vmatprep.subr.mxu0 0.0
        %3060 = vmatpush1.msra.mxu0 0.0
        %3061 = vmatprep.subr.mxu0 0.0
        %3062 = vmatpush1.msra.mxu0 0.0
        %3063 = vmatprep.subr.mxu0 0.0
        %3064 = vmatpush1.msra.mxu0 0.0
        %3065 = vmatprep.subr.mxu0 0.0
        %3066 = vmatpush1.msra.mxu0 0.0
        %3067 = vmatprep.subr.mxu0 0.0
        %3068 = vmatpush1.msra.mxu0 0.0
        %3069 = vmatprep.subr.mxu0 0.0
        %3070 = vmatpush1.msra.mxu0 0.0
        %3071 = vmatprep.subr.mxu0 0.0
        %3072 = vmatpush1.msra.mxu0 0.0
        %3073 = vmatprep.subr.mxu0 0.0
        %3074 = vmatpush1.msra.mxu0 0.0
        %3075 = vmatprep.subr.mxu0 0.0
        %3076 = vmatpush1.msra.mxu0 0.0
        %3077 = vmatprep.subr.mxu0 0.0
        %3078 = vmatpush1.msra.mxu0 0.0
        %3079 = vmatprep.subr.mxu0 0.0
        %3080 = vmatpush1.msra.mxu0 0.0
        %3081 = vmatprep.subr.mxu0 0.0
        %3082 = vmatpush1.msra.mxu0 0.0
        %3083 = vmatprep.subr.mxu0 0.0
        %3084 = vmatpush1.msra.mxu0 0.0
        %3085 = vmatprep.subr.mxu0 0.0
        %3086 = vmatpush1.msra.mxu0 0.0
        %3087 = vmatprep.subr.mxu0 0.0
        %3088 = vmatpush1.msra.mxu0 0.0
        %3089 = vmatprep.mubr.f32.mxu0 0.0
        %3090 = vmatmul.mubr.f32.gmra.mrb[0].mxu0 %v3021
        %v3091 = vpop.f32.mrb[0].mxu0
        %v3092 = vadd.f32 0.0, %v3091
        %v3093 = vpop.f32.mrb[0].mxu0
        %3094 = vmatprep.mubr.f32.mxu0 0.0
        %3095 = vmatmul.mubr.f32.gmra.mrb[0].mxu0 %v3023
        %v3096 = vpop.f32.mrb[0].mxu0
        %v3097 = vadd.f32 0.0, %v3096
        %v3098 = vpop.f32.mrb[0].mxu0
        %3099 = vdwg.mxu0
        %3102 = vrot.lane.b32.xlu0 %v3092, 64
        %v3103 = vpop.permute.xlu0 %3102
        %3104 = vrot.lane.b32.xlu0 %v3097, 64
        %v3105 = vpop.permute.xlu0 %3104
        %v3108 = vmul.f32 %v603, %v3103
        %v3109 = vmul.f32 %v609, %v3105
        %3110 = vst.msk [vmem:[%s347 + $0x28] sm:$0xff] %vm1252, %v3108
        %3111 = vst.msk [vmem:[%s347 + $0x68] sm:$0xff] %vm1252, %v3109
        %3112 = vrot.lane.b32.xlu0 %v964, 16
        %v3113 = vpop.permute.xlu0 %3112
        %3114 = vrot.lane.b32.xlu0 %v970, 16
        %v3115 = vpop.permute.xlu0 %3114
        %v3116 = vsel %vm976, %v3113, 0
        %v3118 = vsel %vm976, %v3115, 0
        %3120 = vmatprep.subr.mxu0 0.0
        %3121 = vmatpush1.msra.mxu0 %v974
        %3122 = vmatprep.subr.mxu0 0.0
        %3123 = vmatpush1.msra.mxu0 %v975
        %3124 = vmatprep.subr.mxu0 0.0
        %3125 = vmatpush1.msra.mxu0 0.0
        %3126 = vmatprep.subr.mxu0 0.0
        %3127 = vmatpush1.msra.mxu0 0.0
        %3128 = vmatprep.subr.mxu0 0.0
        %3129 = vmatpush1.msra.mxu0 0.0
        %3130 = vmatprep.subr.mxu0 0.0
        %3131 = vmatpush1.msra.mxu0 0.0
        %3132 = vmatprep.subr.mxu0 0.0
        %3133 = vmatpush1.msra.mxu0 0.0
        %3134 = vmatprep.subr.mxu0 0.0
        %3135 = vmatpush1.msra.mxu0 0.0
        %3136 = vmatprep.subr.mxu0 0.0
        %3137 = vmatpush1.msra.mxu0 0.0
        %3138 = vmatprep.subr.mxu0 0.0
        %3139 = vmatpush1.msra.mxu0 0.0
        %3140 = vmatprep.subr.mxu0 0.0
        %3141 = vmatpush1.msra.mxu0 0.0
        %3142 = vmatprep.subr.mxu0 0.0
        %3143 = vmatpush1.msra.mxu0 0.0
        %3144 = vmatprep.subr.mxu0 0.0
        %3145 = vmatpush1.msra.mxu0 0.0
        %3146 = vmatprep.subr.mxu0 0.0
        %3147 = vmatpush1.msra.mxu0 0.0
        %3148 = vmatprep.subr.mxu0 0.0
        %3149 = vmatpush1.msra.mxu0 0.0
        %3150 = vmatprep.subr.mxu0 0.0
        %3151 = vmatpush1.msra.mxu0 0.0
        %3152 = vmatprep.subr.mxu0 0.0
        %3153 = vmatpush1.msra.mxu0 0.0
        %3154 = vmatprep.subr.mxu0 0.0
        %3155 = vmatpush1.msra.mxu0 0.0
        %3156 = vmatprep.subr.mxu0 0.0
        %3157 = vmatpush1.msra.mxu0 0.0
        %3158 = vmatprep.subr.mxu0 0.0
        %3159 = vmatpush1.msra.mxu0 0.0
        %3160 = vmatprep.subr.mxu0 0.0
        %3161 = vmatpush1.msra.mxu0 0.0
        %3162 = vmatprep.subr.mxu0 0.0
        %3163 = vmatpush1.msra.mxu0 0.0
        %3164 = vmatprep.subr.mxu0 0.0
        %3165 = vmatpush1.msra.mxu0 0.0
        %3166 = vmatprep.subr.mxu0 0.0
        %3167 = vmatpush1.msra.mxu0 0.0
        %3168 = vmatprep.subr.mxu0 0.0
        %3169 = vmatpush1.msra.mxu0 0.0
        %3170 = vmatprep.subr.mxu0 0.0
        %3171 = vmatpush1.msra.mxu0 0.0
        %3172 = vmatprep.subr.mxu0 0.0
        %3173 = vmatpush1.msra.mxu0 0.0
        %3174 = vmatprep.subr.mxu0 0.0
        %3175 = vmatpush1.msra.mxu0 0.0
        %3176 = vmatprep.subr.mxu0 0.0
        %3177 = vmatpush1.msra.mxu0 0.0
        %3178 = vmatprep.subr.mxu0 0.0
        %3179 = vmatpush1.msra.mxu0 0.0
        %3180 = vmatprep.subr.mxu0 0.0
        %3181 = vmatpush1.msra.mxu0 0.0
        %3182 = vmatprep.subr.mxu0 0.0
        %3183 = vmatpush1.msra.mxu0 0.0
        %3184 = vmatprep.mubr.f32.mxu0 0.0
        %3185 = vmatmul.mubr.f32.gmra.mrb[0].mxu0 %v3116
        %v3186 = vpop.f32.mrb[0].mxu0
        %v3187 = vadd.f32 0.0, %v3186
        %v3188 = vpop.f32.mrb[0].mxu0
        %3189 = vmatprep.mubr.f32.mxu0 0.0
        %3190 = vmatmul.mubr.f32.gmra.mrb[0].mxu0 %v3118
        %v3191 = vpop.f32.mrb[0].mxu0
        %v3192 = vadd.f32 0.0, %v3191
        %v3193 = vpop.f32.mrb[0].mxu0
        %3194 = vdwg.mxu0
        %3197 = vrot.lane.b32.xlu0 %v3187, 96
        %v3198 = vpop.permute.xlu0 %3197
        %3199 = vrot.lane.b32.xlu0 %v3192, 96
        %v3200 = vpop.permute.xlu0 %3199
        %v3203 = vmul.f32 %v603, %v3198
        %v3204 = vmul.f32 %v609, %v3200
        %3205 = vst.msk [vmem:[%s347 + $0x28] sm:$0xff] %vm1348, %v3203
        %3206 = vst.msk [vmem:[%s347 + $0x68] sm:$0xff] %vm1348, %v3204
        %v3208 = vsel %vm976, %v966, 0
        %v3211 = vsel %vm976, %v972, 0
        %3213 = vmatprep.subr.mxu0 0.0
        %3214 = vmatpush1.msra.mxu0 %v974
        %3215 = vmatprep.subr.mxu0 0.0
        %3216 = vmatpush1.msra.mxu0 %v975
        %3217 = vmatprep.subr.mxu0 0.0
        %3218 = vmatpush1.msra.mxu0 0.0
        %3219 = vmatprep.subr.mxu0 0.0
        %3220 = vmatpush1.msra.mxu0 0.0
        %3221 = vmatprep.subr.mxu0 0.0
        %3222 = vmatpush1.msra.mxu0 0.0
        %3223 = vmatprep.subr.mxu0 0.0
        %3224 = vmatpush1.msra.mxu0 0.0
        %3225 = vmatprep.subr.mxu0 0.0
        %3226 = vmatpush1.msra.mxu0 0.0
        %3227 = vmatprep.subr.mxu0 0.0
        %3228 = vmatpush1.msra.mxu0 0.0
        %3229 = vmatprep.subr.mxu0 0.0
        %3230 = vmatpush1.msra.mxu0 0.0
        %3231 = vmatprep.subr.mxu0 0.0
        %3232 = vmatpush1.msra.mxu0 0.0
        %3233 = vmatprep.subr.mxu0 0.0
        %3234 = vmatpush1.msra.mxu0 0.0
        %3235 = vmatprep.subr.mxu0 0.0
        %3236 = vmatpush1.msra.mxu0 0.0
        %3237 = vmatprep.subr.mxu0 0.0
        %3238 = vmatpush1.msra.mxu0 0.0
        %3239 = vmatprep.subr.mxu0 0.0
        %3240 = vmatpush1.msra.mxu0 0.0
        %3241 = vmatprep.subr.mxu0 0.0
        %3242 = vmatpush1.msra.mxu0 0.0
        %3243 = vmatprep.subr.mxu0 0.0
        %3244 = vmatpush1.msra.mxu0 0.0
        %3245 = vmatprep.subr.mxu0 0.0
        %3246 = vmatpush1.msra.mxu0 0.0
        %3247 = vmatprep.subr.mxu0 0.0
        %3248 = vmatpush1.msra.mxu0 0.0
        %3249 = vmatprep.subr.mxu0 0.0
        %3250 = vmatpush1.msra.mxu0 0.0
        %3251 = vmatprep.subr.mxu0 0.0
        %3252 = vmatpush1.msra.mxu0 0.0
        %3253 = vmatprep.subr.mxu0 0.0
        %3254 = vmatpush1.msra.mxu0 0.0
        %3255 = vmatprep.subr.mxu0 0.0
        %3256 = vmatpush1.msra.mxu0 0.0
        %3257 = vmatprep.subr.mxu0 0.0
        %3258 = vmatpush1.msra.mxu0 0.0
        %3259 = vmatprep.subr.mxu0 0.0
        %3260 = vmatpush1.msra.mxu0 0.0
        %3261 = vmatprep.subr.mxu0 0.0
        %3262 = vmatpush1.msra.mxu0 0.0
        %3263 = vmatprep.subr.mxu0 0.0
        %3264 = vmatpush1.msra.mxu0 0.0
        %3265 = vmatprep.subr.mxu0 0.0
        %3266 = vmatpush1.msra.mxu0 0.0
        %3267 = vmatprep.subr.mxu0 0.0
        %3268 = vmatpush1.msra.mxu0 0.0
        %3269 = vmatprep.subr.mxu0 0.0
        %3270 = vmatpush1.msra.mxu0 0.0
        %3271 = vmatprep.subr.mxu0 0.0
        %3272 = vmatpush1.msra.mxu0 0.0
        %3273 = vmatprep.subr.mxu0 0.0
        %3274 = vmatpush1.msra.mxu0 0.0
        %3275 = vmatprep.subr.mxu0 0.0
        %3276 = vmatpush1.msra.mxu0 0.0
        %3277 = vmatprep.mubr.f32.mxu0 0.0
        %3278 = vmatmul.mubr.f32.gmra.mrb[0].mxu0 %v3208
        %v3279 = vpop.f32.mrb[0].mxu0
        %v3280 = vadd.f32 0.0, %v3279
        %v3281 = vpop.f32.mrb[0].mxu0
        %3282 = vmatprep.mubr.f32.mxu0 0.0
        %3283 = vmatmul.mubr.f32.gmra.mrb[0].mxu0 %v3211
        %v3284 = vpop.f32.mrb[0].mxu0
        %v3285 = vadd.f32 0.0, %v3284
        %v3286 = vpop.f32.mrb[0].mxu0
        %3287 = vdwg.mxu0
        %v3288 = vmul.f32 %v678, %v3280
        %v3289 = vmul.f32 %v684, %v3285
        %3290 = vst.msk [vmem:[%s347 + $0x30] sm:$0xff] %vm1060, %v3288
        %3291 = vst.msk [vmem:[%s347 + $0x70] sm:$0xff] %vm1060, %v3289
        %3292 = vrot.lane.b32.xlu0 %v966, 112
        %v3293 = vpop.permute.xlu0 %3292
        %3294 = vrot.lane.b32.xlu0 %v972, 112
        %v3295 = vpop.permute.xlu0 %3294
        %v3296 = vsel %vm976, %v3293, 0
        %v3298 = vsel %vm976, %v3295, 0
        %3300 = vmatprep.subr.mxu0 0.0
        %3301 = vmatpush1.msra.mxu0 %v974
        %3302 = vmatprep.subr.mxu0 0.0
        %3303 = vmatpush1.msra.mxu0 %v975
        %3304 = vmatprep.subr.mxu0 0.0
        %3305 = vmatpush1.msra.mxu0 0.0
        %3306 = vmatprep.subr.mxu0 0.0
        %3307 = vmatpush1.msra.mxu0 0.0
        %3308 = vmatprep.subr.mxu0 0.0
        %3309 = vmatpush1.msra.mxu0 0.0
        %3310 = vmatprep.subr.mxu0 0.0
        %3311 = vmatpush1.msra.mxu0 0.0
        %3312 = vmatprep.subr.mxu0 0.0
        %3313 = vmatpush1.msra.mxu0 0.0
        %3314 = vmatprep.subr.mxu0 0.0
        %3315 = vmatpush1.msra.mxu0 0.0
        %3316 = vmatprep.subr.mxu0 0.0
        %3317 = vmatpush1.msra.mxu0 0.0
        %3318 = vmatprep.subr.mxu0 0.0
        %3319 = vmatpush1.msra.mxu0 0.0
        %3320 = vmatprep.subr.mxu0 0.0
        %3321 = vmatpush1.msra.mxu0 0.0
        %3322 = vmatprep.subr.mxu0 0.0
        %3323 = vmatpush1.msra.mxu0 0.0
        %3324 = vmatprep.subr.mxu0 0.0
        %3325 = vmatpush1.msra.mxu0 0.0
        %3326 = vmatprep.subr.mxu0 0.0
        %3327 = vmatpush1.msra.mxu0 0.0
        %3328 = vmatprep.subr.mxu0 0.0
        %3329 = vmatpush1.msra.mxu0 0.0
        %3330 = vmatprep.subr.mxu0 0.0
        %3331 = vmatpush1.msra.mxu0 0.0
        %3332 = vmatprep.subr.mxu0 0.0
        %3333 = vmatpush1.msra.mxu0 0.0
        %3334 = vmatprep.subr.mxu0 0.0
        %3335 = vmatpush1.msra.mxu0 0.0
        %3336 = vmatprep.subr.mxu0 0.0
        %3337 = vmatpush1.msra.mxu0 0.0
        %3338 = vmatprep.subr.mxu0 0.0
        %3339 = vmatpush1.msra.mxu0 0.0
        %3340 = vmatprep.subr.mxu0 0.0
        %3341 = vmatpush1.msra.mxu0 0.0
        %3342 = vmatprep.subr.mxu0 0.0
        %3343 = vmatpush1.msra.mxu0 0.0
        %3344 = vmatprep.subr.mxu0 0.0
        %3345 = vmatpush1.msra.mxu0 0.0
        %3346 = vmatprep.subr.mxu0 0.0
        %3347 = vmatpush1.msra.mxu0 0.0
        %3348 = vmatprep.subr.mxu0 0.0
        %3349 = vmatpush1.msra.mxu0 0.0
        %3350 = vmatprep.subr.mxu0 0.0
        %3351 = vmatpush1.msra.mxu0 0.0
        %3352 = vmatprep.subr.mxu0 0.0
        %3353 = vmatpush1.msra.mxu0 0.0
        %3354 = vmatprep.subr.mxu0 0.0
        %3355 = vmatpush1.msra.mxu0 0.0
        %3356 = vmatprep.subr.mxu0 0.0
        %3357 = vmatpush1.msra.mxu0 0.0
        %3358 = vmatprep.subr.mxu0 0.0
        %3359 = vmatpush1.msra.mxu0 0.0
        %3360 = vmatprep.subr.mxu0 0.0
        %3361 = vmatpush1.msra.mxu0 0.0
        %3362 = vmatprep.subr.mxu0 0.0
        %3363 = vmatpush1.msra.mxu0 0.0
        %3364 = vmatprep.mubr.f32.mxu0 0.0
        %3365 = vmatmul.mubr.f32.gmra.mrb[0].mxu0 %v3296
        %v3366 = vpop.f32.mrb[0].mxu0
        %v3367 = vadd.f32 0.0, %v3366
        %v3368 = vpop.f32.mrb[0].mxu0
        %3369 = vmatprep.mubr.f32.mxu0 0.0
        %3370 = vmatmul.mubr.f32.gmra.mrb[0].mxu0 %v3298
        %v3371 = vpop.f32.mrb[0].mxu0
        %v3372 = vadd.f32 0.0, %v3371
        %v3373 = vpop.f32.mrb[0].mxu0
        %3374 = vdwg.mxu0
        %3377 = vrot.lane.b32.xlu0 %v3367, 32
        %v3378 = vpop.permute.xlu0 %3377
        %3379 = vrot.lane.b32.xlu0 %v3372, 32
        %v3380 = vpop.permute.xlu0 %3379
        %v3383 = vmul.f32 %v678, %v3378
        %v3384 = vmul.f32 %v684, %v3380
        %3385 = vst.msk [vmem:[%s347 + $0x30] sm:$0xff] %vm1156, %v3383
        %3386 = vst.msk [vmem:[%s347 + $0x70] sm:$0xff] %vm1156, %v3384
        %3387 = vrot.lane.b32.xlu0 %v966, 96
        %v3388 = vpop.permute.xlu0 %3387
        %3389 = vrot.lane.b32.xlu0 %v972, 96
        %v3390 = vpop.permute.xlu0 %3389
        %v3391 = vsel %vm976, %v3388, 0
        %v3393 = vsel %vm976, %v3390, 0
        %3395 = vmatprep.subr.mxu0 0.0
        %3396 = vmatpush1.msra.mxu0 %v974
        %3397 = vmatprep.subr.mxu0 0.0
        %3398 = vmatpush1.msra.mxu0 %v975
        %3399 = vmatprep.subr.mxu0 0.0
        %3400 = vmatpush1.msra.mxu0 0.0
        %3401 = vmatprep.subr.mxu0 0.0
        %3402 = vmatpush1.msra.mxu0 0.0
        %3403 = vmatprep.subr.mxu0 0.0
        %3404 = vmatpush1.msra.mxu0 0.0
        %3405 = vmatprep.subr.mxu0 0.0
        %3406 = vmatpush1.msra.mxu0 0.0
        %3407 = vmatprep.subr.mxu0 0.0
        %3408 = vmatpush1.msra.mxu0 0.0
        %3409 = vmatprep.subr.mxu0 0.0
        %3410 = vmatpush1.msra.mxu0 0.0
        %3411 = vmatprep.subr.mxu0 0.0
        %3412 = vmatpush1.msra.mxu0 0.0
        %3413 = vmatprep.subr.mxu0 0.0
        %3414 = vmatpush1.msra.mxu0 0.0
        %3415 = vmatprep.subr.mxu0 0.0
        %3416 = vmatpush1.msra.mxu0 0.0
        %3417 = vmatprep.subr.mxu0 0.0
        %3418 = vmatpush1.msra.mxu0 0.0
        %3419 = vmatprep.subr.mxu0 0.0
        %3420 = vmatpush1.msra.mxu0 0.0
        %3421 = vmatprep.subr.mxu0 0.0
        %3422 = vmatpush1.msra.mxu0 0.0
        %3423 = vmatprep.subr.mxu0 0.0
        %3424 = vmatpush1.msra.mxu0 0.0
        %3425 = vmatprep.subr.mxu0 0.0
        %3426 = vmatpush1.msra.mxu0 0.0
        %3427 = vmatprep.subr.mxu0 0.0
        %3428 = vmatpush1.msra.mxu0 0.0
        %3429 = vmatprep.subr.mxu0 0.0
        %3430 = vmatpush1.msra.mxu0 0.0
        %3431 = vmatprep.subr.mxu0 0.0
        %3432 = vmatpush1.msra.mxu0 0.0
        %3433 = vmatprep.subr.mxu0 0.0
        %3434 = vmatpush1.msra.mxu0 0.0
        %3435 = vmatprep.subr.mxu0 0.0
        %3436 = vmatpush1.msra.mxu0 0.0
        %3437 = vmatprep.subr.mxu0 0.0
        %3438 = vmatpush1.msra.mxu0 0.0
        %3439 = vmatprep.subr.mxu0 0.0
        %3440 = vmatpush1.msra.mxu0 0.0
        %3441 = vmatprep.subr.mxu0 0.0
        %3442 = vmatpush1.msra.mxu0 0.0
        %3443 = vmatprep.subr.mxu0 0.0
        %3444 = vmatpush1.msra.mxu0 0.0
        %3445 = vmatprep.subr.mxu0 0.0
        %3446 = vmatpush1.msra.mxu0 0.0
        %3447 = vmatprep.subr.mxu0 0.0
        %3448 = vmatpush1.msra.mxu0 0.0
        %3449 = vmatprep.subr.mxu0 0.0
        %3450 = vmatpush1.msra.mxu0 0.0
        %3451 = vmatprep.subr.mxu0 0.0
        %3452 = vmatpush1.msra.mxu0 0.0
        %3453 = vmatprep.subr.mxu0 0.0
        %3454 = vmatpush1.msra.mxu0 0.0
        %3455 = vmatprep.subr.mxu0 0.0
        %3456 = vmatpush1.msra.mxu0 0.0
        %3457 = vmatprep.subr.mxu0 0.0
        %3458 = vmatpush1.msra.mxu0 0.0
        %3459 = vmatprep.mubr.f32.mxu0 0.0
        %3460 = vmatmul.mubr.f32.gmra.mrb[0].mxu0 %v3391
        %v3461 = vpop.f32.mrb[0].mxu0
        %v3462 = vadd.f32 0.0, %v3461
        %v3463 = vpop.f32.mrb[0].mxu0
        %3464 = vmatprep.mubr.f32.mxu0 0.0
        %3465 = vmatmul.mubr.f32.gmra.mrb[0].mxu0 %v3393
        %v3466 = vpop.f32.mrb[0].mxu0
        %v3467 = vadd.f32 0.0, %v3466
        %v3468 = vpop.f32.mrb[0].mxu0
        %3469 = vdwg.mxu0
        %3472 = vrot.lane.b32.xlu0 %v3462, 64
        %v3473 = vpop.permute.xlu0 %3472
        %3474 = vrot.lane.b32.xlu0 %v3467, 64
        %v3475 = vpop.permute.xlu0 %3474
        %v3478 = vmul.f32 %v678, %v3473
        %v3479 = vmul.f32 %v684, %v3475
        %3480 = vst.msk [vmem:[%s347 + $0x30] sm:$0xff] %vm1252, %v3478
        %3481 = vst.msk [vmem:[%s347 + $0x70] sm:$0xff] %vm1252, %v3479
        %3482 = vrot.lane.b32.xlu0 %v966, 80
        %v3483 = vpop.permute.xlu0 %3482
        %3484 = vrot.lane.b32.xlu0 %v972, 80
        %v3485 = vpop.permute.xlu0 %3484
        %v3486 = vsel %vm976, %v3483, 0
        %v3488 = vsel %vm976, %v3485, 0
        %3490 = vmatprep.subr.mxu0 0.0
        %3491 = vmatpush1.msra.mxu0 %v974
        %3492 = vmatprep.subr.mxu0 0.0
        %3493 = vmatpush1.msra.mxu0 %v975
        %3494 = vmatprep.subr.mxu0 0.0
        %3495 = vmatpush1.msra.mxu0 0.0
        %3496 = vmatprep.subr.mxu0 0.0
        %3497 = vmatpush1.msra.mxu0 0.0
        %3498 = vmatprep.subr.mxu0 0.0
        %3499 = vmatpush1.msra.mxu0 0.0
        %3500 = vmatprep.subr.mxu0 0.0
        %3501 = vmatpush1.msra.mxu0 0.0
        %3502 = vmatprep.subr.mxu0 0.0
        %3503 = vmatpush1.msra.mxu0 0.0
        %3504 = vmatprep.subr.mxu0 0.0
        %3505 = vmatpush1.msra.mxu0 0.0
        %3506 = vmatprep.subr.mxu0 0.0
        %3507 = vmatpush1.msra.mxu0 0.0
        %3508 = vmatprep.subr.mxu0 0.0
        %3509 = vmatpush1.msra.mxu0 0.0
        %3510 = vmatprep.subr.mxu0 0.0
        %3511 = vmatpush1.msra.mxu0 0.0
        %3512 = vmatprep.subr.mxu0 0.0
        %3513 = vmatpush1.msra.mxu0 0.0
        %3514 = vmatprep.subr.mxu0 0.0
        %3515 = vmatpush1.msra.mxu0 0.0
        %3516 = vmatprep.subr.mxu0 0.0
        %3517 = vmatpush1.msra.mxu0 0.0
        %3518 = vmatprep.subr.mxu0 0.0
        %3519 = vmatpush1.msra.mxu0 0.0
        %3520 = vmatprep.subr.mxu0 0.0
        %3521 = vmatpush1.msra.mxu0 0.0
        %3522 = vmatprep.subr.mxu0 0.0
        %3523 = vmatpush1.msra.mxu0 0.0
        %3524 = vmatprep.subr.mxu0 0.0
        %3525 = vmatpush1.msra.mxu0 0.0
        %3526 = vmatprep.subr.mxu0 0.0
        %3527 = vmatpush1.msra.mxu0 0.0
        %3528 = vmatprep.subr.mxu0 0.0
        %3529 = vmatpush1.msra.mxu0 0.0
        %3530 = vmatprep.subr.mxu0 0.0
        %3531 = vmatpush1.msra.mxu0 0.0
        %3532 = vmatprep.subr.mxu0 0.0
        %3533 = vmatpush1.msra.mxu0 0.0
        %3534 = vmatprep.subr.mxu0 0.0
        %3535 = vmatpush1.msra.mxu0 0.0
        %3536 = vmatprep.subr.mxu0 0.0
        %3537 = vmatpush1.msra.mxu0 0.0
        %3538 = vmatprep.subr.mxu0 0.0
        %3539 = vmatpush1.msra.mxu0 0.0
        %3540 = vmatprep.subr.mxu0 0.0
        %3541 = vmatpush1.msra.mxu0 0.0
        %3542 = vmatprep.subr.mxu0 0.0
        %3543 = vmatpush1.msra.mxu0 0.0
        %3544 = vmatprep.subr.mxu0 0.0
        %3545 = vmatpush1.msra.mxu0 0.0
        %3546 = vmatprep.subr.mxu0 0.0
        %3547 = vmatpush1.msra.mxu0 0.0
        %3548 = vmatprep.subr.mxu0 0.0
        %3549 = vmatpush1.msra.mxu0 0.0
        %3550 = vmatprep.subr.mxu0 0.0
        %3551 = vmatpush1.msra.mxu0 0.0
        %3552 = vmatprep.subr.mxu0 0.0
        %3553 = vmatpush1.msra.mxu0 0.0
        %3554 = vmatprep.mubr.f32.mxu0 0.0
        %3555 = vmatmul.mubr.f32.gmra.mrb[0].mxu0 %v3486
        %v3556 = vpop.f32.mrb[0].mxu0
        %v3557 = vadd.f32 0.0, %v3556
        %v3558 = vpop.f32.mrb[0].mxu0
        %3559 = vmatprep.mubr.f32.mxu0 0.0
        %3560 = vmatmul.mubr.f32.gmra.mrb[0].mxu0 %v3488
        %v3561 = vpop.f32.mrb[0].mxu0
        %v3562 = vadd.f32 0.0, %v3561
        %v3563 = vpop.f32.mrb[0].mxu0
        %3564 = vdwg.mxu0
        %3567 = vrot.lane.b32.xlu0 %v3557, 96
        %v3568 = vpop.permute.xlu0 %3567
        %3569 = vrot.lane.b32.xlu0 %v3562, 96
        %v3570 = vpop.permute.xlu0 %3569
        %v3573 = vmul.f32 %v678, %v3568
        %v3574 = vmul.f32 %v684, %v3570
        %3575 = vst.msk [vmem:[%s347 + $0x30] sm:$0xff] %vm1348, %v3573
        %3576 = vst.msk [vmem:[%s347 + $0x70] sm:$0xff] %vm1348, %v3574
        %3577 = vrot.lane.b32.xlu0 %v966, 64
        %v3578 = vpop.permute.xlu0 %3577
        %3579 = vrot.lane.b32.xlu0 %v972, 64
        %v3580 = vpop.permute.xlu0 %3579
        %v3581 = vsel %vm976, %v3578, 0
        %v3583 = vsel %vm976, %v3580, 0
        %3585 = vmatprep.subr.mxu0 0.0
        %3586 = vmatpush1.msra.mxu0 %v974
        %3587 = vmatprep.subr.mxu0 0.0
        %3588 = vmatpush1.msra.mxu0 %v975
        %3589 = vmatprep.subr.mxu0 0.0
        %3590 = vmatpush1.msra.mxu0 0.0
        %3591 = vmatprep.subr.mxu0 0.0
        %3592 = vmatpush1.msra.mxu0 0.0
        %3593 = vmatprep.subr.mxu0 0.0
        %3594 = vmatpush1.msra.mxu0 0.0
        %3595 = vmatprep.subr.mxu0 0.0
        %3596 = vmatpush1.msra.mxu0 0.0
        %3597 = vmatprep.subr.mxu0 0.0
        %3598 = vmatpush1.msra.mxu0 0.0
        %3599 = vmatprep.subr.mxu0 0.0
        %3600 = vmatpush1.msra.mxu0 0.0
        %3601 = vmatprep.subr.mxu0 0.0
        %3602 = vmatpush1.msra.mxu0 0.0
        %3603 = vmatprep.subr.mxu0 0.0
        %3604 = vmatpush1.msra.mxu0 0.0
        %3605 = vmatprep.subr.mxu0 0.0
        %3606 = vmatpush1.msra.mxu0 0.0
        %3607 = vmatprep.subr.mxu0 0.0
        %3608 = vmatpush1.msra.mxu0 0.0
        %3609 = vmatprep.subr.mxu0 0.0
        %3610 = vmatpush1.msra.mxu0 0.0
        %3611 = vmatprep.subr.mxu0 0.0
        %3612 = vmatpush1.msra.mxu0 0.0
        %3613 = vmatprep.subr.mxu0 0.0
        %3614 = vmatpush1.msra.mxu0 0.0
        %3615 = vmatprep.subr.mxu0 0.0
        %3616 = vmatpush1.msra.mxu0 0.0
        %3617 = vmatprep.subr.mxu0 0.0
        %3618 = vmatpush1.msra.mxu0 0.0
        %3619 = vmatprep.subr.mxu0 0.0
        %3620 = vmatpush1.msra.mxu0 0.0
        %3621 = vmatprep.subr.mxu0 0.0
        %3622 = vmatpush1.msra.mxu0 0.0
        %3623 = vmatprep.subr.mxu0 0.0
        %3624 = vmatpush1.msra.mxu0 0.0
        %3625 = vmatprep.subr.mxu0 0.0
        %3626 = vmatpush1.msra.mxu0 0.0
        %3627 = vmatprep.subr.mxu0 0.0
        %3628 = vmatpush1.msra.mxu0 0.0
        %3629 = vmatprep.subr.mxu0 0.0
        %3630 = vmatpush1.msra.mxu0 0.0
        %3631 = vmatprep.subr.mxu0 0.0
        %3632 = vmatpush1.msra.mxu0 0.0
        %3633 = vmatprep.subr.mxu0 0.0
        %3634 = vmatpush1.msra.mxu0 0.0
        %3635 = vmatprep.subr.mxu0 0.0
        %3636 = vmatpush1.msra.mxu0 0.0
        %3637 = vmatprep.subr.mxu0 0.0
        %3638 = vmatpush1.msra.mxu0 0.0
        %3639 = vmatprep.subr.mxu0 0.0
        %3640 = vmatpush1.msra.mxu0 0.0
        %3641 = vmatprep.subr.mxu0 0.0
        %3642 = vmatpush1.msra.mxu0 0.0
        %3643 = vmatprep.subr.mxu0 0.0
        %3644 = vmatpush1.msra.mxu0 0.0
        %3645 = vmatprep.subr.mxu0 0.0
        %3646 = vmatpush1.msra.mxu0 0.0
        %3647 = vmatprep.subr.mxu0 0.0
        %3648 = vmatpush1.msra.mxu0 0.0
        %3649 = vmatprep.mubr.f32.mxu0 0.0
        %3650 = vmatmul.mubr.f32.gmra.mrb[0].mxu0 %v3581
        %v3651 = vpop.f32.mrb[0].mxu0
        %v3652 = vadd.f32 0.0, %v3651
        %v3653 = vpop.f32.mrb[0].mxu0
        %3654 = vmatprep.mubr.f32.mxu0 0.0
        %3655 = vmatmul.mubr.f32.gmra.mrb[0].mxu0 %v3583
        %v3656 = vpop.f32.mrb[0].mxu0
        %v3657 = vadd.f32 0.0, %v3656
        %v3658 = vpop.f32.mrb[0].mxu0
        %3659 = vdwg.mxu0
        %v3660 = vmul.f32 %v680, %v3652
        %v3661 = vmul.f32 %v686, %v3657
        %3662 = vst.msk [vmem:[%s347 + $0x38] sm:$0xff] %vm1060, %v3660
        %3663 = vst.msk [vmem:[%s347 + $0x78] sm:$0xff] %vm1060, %v3661
        %3664 = vrot.lane.b32.xlu0 %v966, 48
        %v3665 = vpop.permute.xlu0 %3664
        %3666 = vrot.lane.b32.xlu0 %v972, 48
        %v3667 = vpop.permute.xlu0 %3666
        %v3668 = vsel %vm976, %v3665, 0
        %v3670 = vsel %vm976, %v3667, 0
        %3672 = vmatprep.subr.mxu0 0.0
        %3673 = vmatpush1.msra.mxu0 %v974
        %3674 = vmatprep.subr.mxu0 0.0
        %3675 = vmatpush1.msra.mxu0 %v975
        %3676 = vmatprep.subr.mxu0 0.0
        %3677 = vmatpush1.msra.mxu0 0.0
        %3678 = vmatprep.subr.mxu0 0.0
        %3679 = vmatpush1.msra.mxu0 0.0
        %3680 = vmatprep.subr.mxu0 0.0
        %3681 = vmatpush1.msra.mxu0 0.0
        %3682 = vmatprep.subr.mxu0 0.0
        %3683 = vmatpush1.msra.mxu0 0.0
        %3684 = vmatprep.subr.mxu0 0.0
        %3685 = vmatpush1.msra.mxu0 0.0
        %3686 = vmatprep.subr.mxu0 0.0
        %3687 = vmatpush1.msra.mxu0 0.0
        %3688 = vmatprep.subr.mxu0 0.0
        %3689 = vmatpush1.msra.mxu0 0.0
        %3690 = vmatprep.subr.mxu0 0.0
        %3691 = vmatpush1.msra.mxu0 0.0
        %3692 = vmatprep.subr.mxu0 0.0
        %3693 = vmatpush1.msra.mxu0 0.0
        %3694 = vmatprep.subr.mxu0 0.0
        %3695 = vmatpush1.msra.mxu0 0.0
        %3696 = vmatprep.subr.mxu0 0.0
        %3697 = vmatpush1.msra.mxu0 0.0
        %3698 = vmatprep.subr.mxu0 0.0
        %3699 = vmatpush1.msra.mxu0 0.0
        %3700 = vmatprep.subr.mxu0 0.0
        %3701 = vmatpush1.msra.mxu0 0.0
        %3702 = vmatprep.subr.mxu0 0.0
        %3703 = vmatpush1.msra.mxu0 0.0
        %3704 = vmatprep.subr.mxu0 0.0
        %3705 = vmatpush1.msra.mxu0 0.0
        %3706 = vmatprep.subr.mxu0 0.0
        %3707 = vmatpush1.msra.mxu0 0.0
        %3708 = vmatprep.subr.mxu0 0.0
        %3709 = vmatpush1.msra.mxu0 0.0
        %3710 = vmatprep.subr.mxu0 0.0
        %3711 = vmatpush1.msra.mxu0 0.0
        %3712 = vmatprep.subr.mxu0 0.0
        %3713 = vmatpush1.msra.mxu0 0.0
        %3714 = vmatprep.subr.mxu0 0.0
        %3715 = vmatpush1.msra.mxu0 0.0
        %3716 = vmatprep.subr.mxu0 0.0
        %3717 = vmatpush1.msra.mxu0 0.0
        %3718 = vmatprep.subr.mxu0 0.0
        %3719 = vmatpush1.msra.mxu0 0.0
        %3720 = vmatprep.subr.mxu0 0.0
        %3721 = vmatpush1.msra.mxu0 0.0
        %3722 = vmatprep.subr.mxu0 0.0
        %3723 = vmatpush1.msra.mxu0 0.0
        %3724 = vmatprep.subr.mxu0 0.0
        %3725 = vmatpush1.msra.mxu0 0.0
        %3726 = vmatprep.subr.mxu0 0.0
        %3727 = vmatpush1.msra.mxu0 0.0
        %3728 = vmatprep.subr.mxu0 0.0
        %3729 = vmatpush1.msra.mxu0 0.0
        %3730 = vmatprep.subr.mxu0 0.0
        %3731 = vmatpush1.msra.mxu0 0.0
        %3732 = vmatprep.subr.mxu0 0.0
        %3733 = vmatpush1.msra.mxu0 0.0
        %3734 = vmatprep.subr.mxu0 0.0
        %3735 = vmatpush1.msra.mxu0 0.0
        %3736 = vmatprep.mubr.f32.mxu0 0.0
        %3737 = vmatmul.mubr.f32.gmra.mrb[0].mxu0 %v3668
        %v3738 = vpop.f32.mrb[0].mxu0
        %v3739 = vadd.f32 0.0, %v3738
        %v3740 = vpop.f32.mrb[0].mxu0
        %3741 = vmatprep.mubr.f32.mxu0 0.0
        %3742 = vmatmul.mubr.f32.gmra.mrb[0].mxu0 %v3670
        %v3743 = vpop.f32.mrb[0].mxu0
        %v3744 = vadd.f32 0.0, %v3743
        %v3745 = vpop.f32.mrb[0].mxu0
        %3746 = vdwg.mxu0
        %3749 = vrot.lane.b32.xlu0 %v3739, 32
        %v3750 = vpop.permute.xlu0 %3749
        %3751 = vrot.lane.b32.xlu0 %v3744, 32
        %v3752 = vpop.permute.xlu0 %3751
        %v3755 = vmul.f32 %v680, %v3750
        %v3756 = vmul.f32 %v686, %v3752
        %3757 = vst.msk [vmem:[%s347 + $0x38] sm:$0xff] %vm1156, %v3755
        %3758 = vst.msk [vmem:[%s347 + $0x78] sm:$0xff] %vm1156, %v3756
        %3759 = vrot.lane.b32.xlu0 %v966, 32
        %v3760 = vpop.permute.xlu0 %3759
        %3761 = vrot.lane.b32.xlu0 %v972, 32
        %v3762 = vpop.permute.xlu0 %3761
        %v3763 = vsel %vm976, %v3760, 0
        %v3765 = vsel %vm976, %v3762, 0
        %3767 = vmatprep.subr.mxu0 0.0
        %3768 = vmatpush1.msra.mxu0 %v974
        %3769 = vmatprep.subr.mxu0 0.0
        %3770 = vmatpush1.msra.mxu0 %v975
        %3771 = vmatprep.subr.mxu0 0.0
        %3772 = vmatpush1.msra.mxu0 0.0
        %3773 = vmatprep.subr.mxu0 0.0
        %3774 = vmatpush1.msra.mxu0 0.0
        %3775 = vmatprep.subr.mxu0 0.0
        %3776 = vmatpush1.msra.mxu0 0.0
        %3777 = vmatprep.subr.mxu0 0.0
        %3778 = vmatpush1.msra.mxu0 0.0
        %3779 = vmatprep.subr.mxu0 0.0
        %3780 = vmatpush1.msra.mxu0 0.0
        %3781 = vmatprep.subr.mxu0 0.0
        %3782 = vmatpush1.msra.mxu0 0.0
        %3783 = vmatprep.subr.mxu0 0.0
        %3784 = vmatpush1.msra.mxu0 0.0
        %3785 = vmatprep.subr.mxu0 0.0
        %3786 = vmatpush1.msra.mxu0 0.0
        %3787 = vmatprep.subr.mxu0 0.0
        %3788 = vmatpush1.msra.mxu0 0.0
        %3789 = vmatprep.subr.mxu0 0.0
        %3790 = vmatpush1.msra.mxu0 0.0
        %3791 = vmatprep.subr.mxu0 0.0
        %3792 = vmatpush1.msra.mxu0 0.0
        %3793 = vmatprep.subr.mxu0 0.0
        %3794 = vmatpush1.msra.mxu0 0.0
        %3795 = vmatprep.subr.mxu0 0.0
        %3796 = vmatpush1.msra.mxu0 0.0
        %3797 = vmatprep.subr.mxu0 0.0
        %3798 = vmatpush1.msra.mxu0 0.0
        %3799 = vmatprep.subr.mxu0 0.0
        %3800 = vmatpush1.msra.mxu0 0.0
        %3801 = vmatprep.subr.mxu0 0.0
        %3802 = vmatpush1.msra.mxu0 0.0
        %3803 = vmatprep.subr.mxu0 0.0
        %3804 = vmatpush1.msra.mxu0 0.0
        %3805 = vmatprep.subr.mxu0 0.0
        %3806 = vmatpush1.msra.mxu0 0.0
        %3807 = vmatprep.subr.mxu0 0.0
        %3808 = vmatpush1.msra.mxu0 0.0
        %3809 = vmatprep.subr.mxu0 0.0
        %3810 = vmatpush1.msra.mxu0 0.0
        %3811 = vmatprep.subr.mxu0 0.0
        %3812 = vmatpush1.msra.mxu0 0.0
        %3813 = vmatprep.subr.mxu0 0.0
        %3814 = vmatpush1.msra.mxu0 0.0
        %3815 = vmatprep.subr.mxu0 0.0
        %3816 = vmatpush1.msra.mxu0 0.0
        %3817 = vmatprep.subr.mxu0 0.0
        %3818 = vmatpush1.msra.mxu0 0.0
        %3819 = vmatprep.subr.mxu0 0.0
        %3820 = vmatpush1.msra.mxu0 0.0
        %3821 = vmatprep.subr.mxu0 0.0
        %3822 = vmatpush1.msra.mxu0 0.0
        %3823 = vmatprep.subr.mxu0 0.0
        %3824 = vmatpush1.msra.mxu0 0.0
        %3825 = vmatprep.subr.mxu0 0.0
        %3826 = vmatpush1.msra.mxu0 0.0
        %3827 = vmatprep.subr.mxu0 0.0
        %3828 = vmatpush1.msra.mxu0 0.0
        %3829 = vmatprep.subr.mxu0 0.0
        %3830 = vmatpush1.msra.mxu0 0.0
        %3831 = vmatprep.mubr.f32.mxu0 0.0
        %3832 = vmatmul.mubr.f32.gmra.mrb[0].mxu0 %v3763
        %v3833 = vpop.f32.mrb[0].mxu0
        %v3834 = vadd.f32 0.0, %v3833
        %v3835 = vpop.f32.mrb[0].mxu0
        %3836 = vmatprep.mubr.f32.mxu0 0.0
        %3837 = vmatmul.mubr.f32.gmra.mrb[0].mxu0 %v3765
        %v3838 = vpop.f32.mrb[0].mxu0
        %v3839 = vadd.f32 0.0, %v3838
        %v3840 = vpop.f32.mrb[0].mxu0
        %3841 = vdwg.mxu0
        %3844 = vrot.lane.b32.xlu0 %v3834, 64
        %v3845 = vpop.permute.xlu0 %3844
        %3846 = vrot.lane.b32.xlu0 %v3839, 64
        %v3847 = vpop.permute.xlu0 %3846
        %v3850 = vmul.f32 %v680, %v3845
        %v3851 = vmul.f32 %v686, %v3847
        %3852 = vst.msk [vmem:[%s347 + $0x38] sm:$0xff] %vm1252, %v3850
        %3853 = vst.msk [vmem:[%s347 + $0x78] sm:$0xff] %vm1252, %v3851
        %3854 = vrot.lane.b32.xlu0 %v966, 16
        %v3855 = vpop.permute.xlu0 %3854
        %3856 = vrot.lane.b32.xlu0 %v972, 16
        %v3857 = vpop.permute.xlu0 %3856
        %v3858 = vsel %vm976, %v3855, 0
        %v3860 = vsel %vm976, %v3857, 0
        %3862 = vmatprep.subr.mxu0 0.0
        %3863 = vmatpush1.msra.mxu0 %v974
        %3864 = vmatprep.subr.mxu0 0.0
        %3865 = vmatpush1.msra.mxu0 %v975
        %3866 = vmatprep.subr.mxu0 0.0
        %3867 = vmatpush1.msra.mxu0 0.0
        %3868 = vmatprep.subr.mxu0 0.0
        %3869 = vmatpush1.msra.mxu0 0.0
        %3870 = vmatprep.subr.mxu0 0.0
        %3871 = vmatpush1.msra.mxu0 0.0
        %3872 = vmatprep.subr.mxu0 0.0
        %3873 = vmatpush1.msra.mxu0 0.0
        %3874 = vmatprep.subr.mxu0 0.0
        %3875 = vmatpush1.msra.mxu0 0.0
        %3876 = vmatprep.subr.mxu0 0.0
        %3877 = vmatpush1.msra.mxu0 0.0
        %3878 = vmatprep.subr.mxu0 0.0
        %3879 = vmatpush1.msra.mxu0 0.0
        %3880 = vmatprep.subr.mxu0 0.0
        %3881 = vmatpush1.msra.mxu0 0.0
        %3882 = vmatprep.subr.mxu0 0.0
        %3883 = vmatpush1.msra.mxu0 0.0
        %3884 = vmatprep.subr.mxu0 0.0
        %3885 = vmatpush1.msra.mxu0 0.0
        %3886 = vmatprep.subr.mxu0 0.0
        %3887 = vmatpush1.msra.mxu0 0.0
        %3888 = vmatprep.subr.mxu0 0.0
        %3889 = vmatpush1.msra.mxu0 0.0
        %3890 = vmatprep.subr.mxu0 0.0
        %3891 = vmatpush1.msra.mxu0 0.0
        %3892 = vmatprep.subr.mxu0 0.0
        %3893 = vmatpush1.msra.mxu0 0.0
        %3894 = vmatprep.subr.mxu0 0.0
        %3895 = vmatpush1.msra.mxu0 0.0
        %3896 = vmatprep.subr.mxu0 0.0
        %3897 = vmatpush1.msra.mxu0 0.0
        %3898 = vmatprep.subr.mxu0 0.0
        %3899 = vmatpush1.msra.mxu0 0.0
        %3900 = vmatprep.subr.mxu0 0.0
        %3901 = vmatpush1.msra.mxu0 0.0
        %3902 = vmatprep.subr.mxu0 0.0
        %3903 = vmatpush1.msra.mxu0 0.0
        %3904 = vmatprep.subr.mxu0 0.0
        %3905 = vmatpush1.msra.mxu0 0.0
        %3906 = vmatprep.subr.mxu0 0.0
        %3907 = vmatpush1.msra.mxu0 0.0
        %3908 = vmatprep.subr.mxu0 0.0
        %3909 = vmatpush1.msra.mxu0 0.0
        %3910 = vmatprep.subr.mxu0 0.0
        %3911 = vmatpush1.msra.mxu0 0.0
        %3912 = vmatprep.subr.mxu0 0.0
        %3913 = vmatpush1.msra.mxu0 0.0
        %3914 = vmatprep.subr.mxu0 0.0
        %3915 = vmatpush1.msra.mxu0 0.0
        %3916 = vmatprep.subr.mxu0 0.0
        %3917 = vmatpush1.msra.mxu0 0.0
        %3918 = vmatprep.subr.mxu0 0.0
        %3919 = vmatpush1.msra.mxu0 0.0
        %3920 = vmatprep.subr.mxu0 0.0
        %3921 = vmatpush1.msra.mxu0 0.0
        %3922 = vmatprep.subr.mxu0 0.0
        %3923 = vmatpush1.msra.mxu0 0.0
        %3924 = vmatprep.subr.mxu0 0.0
        %3925 = vmatpush1.msra.mxu0 0.0
        %3926 = vmatprep.mubr.f32.mxu0 0.0
        %3927 = vmatmul.mubr.f32.gmra.mrb[0].mxu0 %v3858
        %v3928 = vpop.f32.mrb[0].mxu0
        %v3929 = vadd.f32 0.0, %v3928
        %v3930 = vpop.f32.mrb[0].mxu0
        %3931 = vmatprep.mubr.f32.mxu0 0.0
        %3932 = vmatmul.mubr.f32.gmra.mrb[0].mxu0 %v3860
        %v3933 = vpop.f32.mrb[0].mxu0
        %v3934 = vadd.f32 0.0, %v3933
        %v3935 = vpop.f32.mrb[0].mxu0
        %3936 = vdwg.mxu0
        %3939 = vrot.lane.b32.xlu0 %v3929, 96
        %v3940 = vpop.permute.xlu0 %3939
        %3941 = vrot.lane.b32.xlu0 %v3934, 96
        %v3942 = vpop.permute.xlu0 %3941
        %v3945 = vmul.f32 %v680, %v3940
        %v3946 = vmul.f32 %v686, %v3942
        %3947 = vst.msk [vmem:[%s347 + $0x38] sm:$0xff] %vm1348, %v3945
        %3948 = vst.msk [vmem:[%s347 + $0x78] sm:$0xff] %vm1348, %v3946
        %s3949 = sand.u32 %s191, 1
        %s3950 = scalar_lea.sflag [#allocation4], %s3949
        %s3951 = sand.u32 %s191, 1
        %s3952 = smul.addr %s3951, 128
        %s3953 = scalar_lea.vmem [#allocation8], %s3952
        // Predicated region
        $region57: #{tpu_custom_call.1} parent=43 // pred_check
          %p3954 = pneg %p201
        $region58: #{tpu_custom_call.1} parent=43 // pred_check_branch
          %3956 = sbr.rel (%p3954) target = $region60
        $region59: #{tpu_custom_call.1} parent=43 // pred_region
          %s3957 = smul.u32 8, %s30
          %s3959 = ssub.s32 2048, 2048
          %3960 = vsyncadd %s3950, %s3959
          %s3961 = smul.addr %s31, 16
          %s3962 = sadd.s32 %s3957, %s3961
          %s3963 = smul.addr %s3962, 128
          %s3964 = scalar_lea.hbm %s6, %s3963
          %s3965 = sshll.u32 %s3953, 4
          %s3966 = int_to_ptr.vmem [resolvable:$true] %s3965
          %3971 = dma.vmem_to_hbm [thread:$0]  %s3966, 2048, %s3964, %s3950, 1024, 1024, 64
        $region60: #{tpu_custom_call.1} parent=43 // pred_fallthru
          _
      $region44: #{tpu_custom_call.1} parent=5 // pred_fallthru
        _
      %p3972 = scmp.le.s32.totalorder 2, %s21
      // Predicated region
      $region61: #{tpu_custom_call.1} parent=5 // pred_check
        %p3973 = pneg %p3972
      $region62: #{tpu_custom_call.1} parent=5 // pred_check_branch
        %3975 = sbr.rel (%p3973) target = $region64
      $region63: #{tpu_custom_call.1} parent=5 // pred_region
        %s3976 = ssub.s32 %s21, 2
        // Predicated region
        $region65: #{tpu_custom_call.1} parent=63 // pred_check
          %p3977 = pneg %p207
        $region66: #{tpu_custom_call.1} parent=63 // pred_check_branch
          %3979 = sbr.rel (%p3977) target = $region68
        $region67: #{tpu_custom_call.1} parent=63 // pred_region
          %s3980 = sand.u32 %s192, 1
          %s3981 = scalar_lea.sflag [#allocation4], %s3980
          %s3982 = sand.u32 %s192, 1
          %s3983 = smul.addr %s3982, 128
          %s3984 = scalar_lea.vmem [#allocation8], %s3983
          %3985 = dma.done %s3981, 2048
        $region68: #{tpu_custom_call.1} parent=63 // pred_fallthru
          _
      $region64: #{tpu_custom_call.1} parent=5 // pred_fallthru
        _
    $region6: #{tpu_custom_call.1} parent=1 // loop_footer
      %s25 = sadd.s32 1, %s21
    $region7: #{tpu_custom_call.1} parent=1 // loop_footer_branch
      %20 = sbr.rel target = $region3
    $region8: #{tpu_custom_call.1} parent=1 // loop_exit
      _
    %3986 = vsyncpa [#allocation3], 1
    %s3987 = scalar_lea.sflag [#allocation3], 1
    %3988 = vsyncpa %s3987, 1
    %3989 = vsyncpa [#allocation6], 1
    %s3990 = scalar_lea.sflag [#allocation6], 1
    %3991 = vsyncpa %s3990, 1
    %3992 = vsyncpa [#allocation4], 1
    %s3993 = scalar_lea.sflag [#allocation4], 1
    %3994 = vsyncpa %s3993, 1

</llo_original>
